<compile_context>
chip_gen: v7x
topology: tpu7x:2x2x1
jax: 0.10.0
libtpu: 0.0.40
codegen_flags: <defaults>
</compile_context>

<pallas_src>
import math

import jax
import jax.numpy as jnp
from jax.experimental import pallas as pl
from jax.experimental.pallas import tpu as pltpu


# ---------------------------------------------------------------------------
# Fused multi-head attention kernel body (single invocation, no grid)
# ---------------------------------------------------------------------------

def _mha_body(q_ref, k_ref, v_ref, bias_ref, wq_ref, wk_ref, wv_ref,
              bq_ref, bk_ref, bv_ref, wo_ref, bo_ref, o_ref, acc_ref,
              *, n_head, batch):
    """q_ref: (B*S, D); k_ref/v_ref: (B*T, D); bias_ref: (S, T) additive mask
    bias or None; w{q,k,v}_ref: (H, D, Dh); b{q,k,v}_ref: (H, 1, Dh);
    wo_ref: (H, Dh, D); bo_ref: (1, D); o_ref / acc_ref: (B*S, D)."""
    B = batch
    NS, D = q_ref.shape
    NT = k_ref.shape[0]
    S = NS // B
    T = NT // B
    H = n_head
    Dh = D // H

    xq = q_ref[...]                      # (B*S, D) lane-dense slab
    xk = k_ref[...]
    xv = v_ref[...]

    # Output-projection bias hoisted out of the head loop; accumulate in f32.
    acc_ref[...] = jnp.zeros((NS, D), jnp.float32) + bo_ref[...].astype(jnp.float32)

    # Additive mask bias precomputed in the wrapper (loaded once, reused per head).
    bias = bias_ref[...].astype(jnp.float32) if bias_ref is not None else None  # (S, T)

    # Static head loop (small H). Weights are pre-split per head on a leading
    # dim, so there is NO lane-dim slicing of activations or weights here; each
    # head's context folds directly through its slice of the output projection.
    for h in range(H):
        qh = (jnp.dot(xq, wq_ref[h], preferred_element_type=jnp.float32)
              + bq_ref[h].astype(jnp.float32)).reshape(B, S, Dh)   # scale pre-folded
        kh = (jnp.dot(xk, wk_ref[h], preferred_element_type=jnp.float32)
              + bk_ref[h].astype(jnp.float32)).reshape(B, T, Dh)
        vh = (jnp.dot(xv, wv_ref[h], preferred_element_type=jnp.float32)
              + bv_ref[h].astype(jnp.float32)).reshape(B, T, Dh)

        s = jnp.einsum('bsk,btk->bst', qh, kh,
                       preferred_element_type=jnp.float32)          # (B, S, T)
        if bias is not None:
            s = s + bias                                            # broadcast over B

        m = jnp.max(s, axis=-1, keepdims=True)
        p = jnp.exp(s - m)
        l = jnp.sum(p, axis=-1, keepdims=True)
        p = p / l                        # exact normalisation (reference parity)

        ctx = jnp.einsum('bst,btk->bsk', p, vh,
                         preferred_element_type=jnp.float32)         # (B, S, Dh)

        acc_ref[...] += jnp.dot(ctx.reshape(NS, Dh), wo_ref[h],
                                preferred_element_type=jnp.float32)  # (B*S, D)

    o_ref[...] = acc_ref[...].astype(o_ref.dtype)


def _make_kernel(n_head, batch, with_bias):
    def kernel(*refs):
        if with_bias:
            (q_ref, k_ref, v_ref, bias_ref, wq_ref, wk_ref, wv_ref,
             bq_ref, bk_ref, bv_ref, wo_ref, bo_ref, o_ref, acc_ref) = refs
        else:
            (q_ref, k_ref, v_ref, wq_ref, wk_ref, wv_ref,
             bq_ref, bk_ref, bv_ref, wo_ref, bo_ref, o_ref, acc_ref) = refs
            bias_ref = None
        _mha_body(q_ref, k_ref, v_ref, bias_ref, wq_ref, wk_ref, wv_ref,
                  bq_ref, bk_ref, bv_ref, wo_ref, bo_ref, o_ref, acc_ref,
                  n_head=n_head, batch=batch)
    return kernel


# ---------------------------------------------------------------------------
# Wrapper
# ---------------------------------------------------------------------------

def multihead_attention(query, key, value, kparams, n_head, attn_mask=None):
    """query: (B, S, D); key/value: (B, T, D); attn_mask: (S, T), nonzero = attend.
    `kparams` is the kernel-layout param dict from prepare_kernel_params()."""
    B, S, D = query.shape
    T = key.shape[1]
    assert value.shape[1] == T and D % n_head == 0

    # Present lane-dense 2-D slabs to the kernel (wrapper reshape is free).
    q2 = query.reshape(B * S, D)
    k2 = key.reshape(B * T, D)
    v2 = value.reshape(B * T, D)

    args = [q2, k2, v2]
    if attn_mask is not None:
        # Hoisted mask handling: compare/select once, additive bias thereafter.
        # (-1e30 instead of -inf so fully-masked rows stay finite.)
        args.append(jnp.where(attn_mask != 0, 0.0, -1e30).astype(jnp.float32))
    args += [kparams["wq"], kparams["wk"], kparams["wv"],
             kparams["bq"], kparams["bk"], kparams["bv"],
             kparams["wo"], kparams["bo"]]

    out2 = pl.pallas_call(
        _make_kernel(n_head=n_head, batch=B, with_bias=attn_mask is not None),
        out_shape=jax.ShapeDtypeStruct((B * S, D), query.dtype),
        scratch_shapes=[pltpu.VMEM((B * S, D), jnp.float32)],
    )(*args)
    return out2.reshape(B, S, D)


# ---------------------------------------------------------------------------
# Parameters: standard nn.Linear-style init + one-time kernel re-layout
# ---------------------------------------------------------------------------

def init_mha_params(key, embed_dim):
    """Standard params, stored for `x @ W` (W is (in, out))."""
    ks = jax.random.split(key, 8)
    bound = 1.0 / math.sqrt(embed_dim)

    def u(k, shape):
        return jax.random.uniform(k, shape, jnp.float32, -bound, bound)

    return {
        "wq": u(ks[0], (embed_dim, embed_dim)), "bq": u(ks[4], (embed_dim,)),
        "wk": u(ks[1], (embed_dim, embed_dim)), "bk": u(ks[5], (embed_dim,)),
        "wv": u(ks[2], (embed_dim, embed_dim)), "bv": u(ks[6], (embed_dim,)),
        "wo": u(ks[3], (embed_dim, embed_dim)), "bo": u(ks[7], (embed_dim,)),
    }


def prepare_kernel_params(params, n_head):
    """One-time re-layout: fold 1/sqrt(Dh) into the Q projection and pre-split
    every projection per head on a LEADING dim so the kernel never slices the
    lane dimension."""
    D = params["wq"].shape[0]
    Dh = D // n_head
    scale = 1.0 / math.sqrt(Dh)

    def w_heads(w):   # (D, D) -> (H, D, Dh)
        return jnp.transpose(w.reshape(D, n_head, Dh), (1, 0, 2))

    def b_heads(b):   # (D,) -> (H, 1, Dh)
        return b.reshape(n_head, 1, Dh)

    return {
        "wq": w_heads(params["wq"] * scale), "bq": b_heads(params["bq"] * scale),
        "wk": w_heads(params["wk"]),         "bk": b_heads(params["bk"]),
        "wv": w_heads(params["wv"]),         "bv": b_heads(params["bv"]),
        "wo": params["wo"].reshape(n_head, Dh, D),   # head h -> rows h*Dh:(h+1)*Dh
        "bo": params["bo"].reshape(1, D),
    }


# ---------------------------------------------------------------------------
# Pure-JAX reference (same math as the PyTorch module, eval mode)
# ---------------------------------------------------------------------------

def mha_reference(query, key, value, params, n_head, attn_mask=None):
    B, S, D = query.shape
    T = key.shape[1]
    Dh = D // n_head
    qp = query @ params["wq"] + params["bq"]
    kp = key   @ params["wk"] + params["bk"]
    vp = value @ params["wv"] + params["bv"]
    qh = qp.reshape(B, S, n_head, Dh).transpose(0, 2, 1, 3)
    kh = kp.reshape(B, T, n_head, Dh).transpose(0, 2, 1, 3)
    vh = vp.reshape(B, T, n_head, Dh).transpose(0, 2, 1, 3)
    s = jnp.einsum("bhsd,bhtd->bhst", qh, kh) / math.sqrt(Dh)
    if attn_mask is not None:
        s = jnp.where(attn_mask[None, None] != 0, s, -1e30)
    p = jax.nn.softmax(s, axis=-1)
    o = jnp.einsum("bhst,bhtd->bhsd", p, vh)
    o = o.transpose(0, 2, 1, 3).reshape(B, S, D)
    return o @ params["wo"] + params["bo"]


# ---------------------------------------------------------------------------

if __name__ == "__main__":
    B, S, T, D, H = 2, 8, 8, 32, 4

    key = jax.random.PRNGKey(0)
    kq, kk, kv, kp = jax.random.split(key, 4)
    q = jax.random.normal(kq, (B, S, D), jnp.float32)
    k = jax.random.normal(kk, (B, T, D), jnp.float32)
    v = jax.random.normal(kv, (B, T, D), jnp.float32)

    params = init_mha_params(kp, D)
    kparams = prepare_kernel_params(params, H)   # one-time re-layout / scale fold

    # causal-style mask: 1 = attend, 0 = masked (module: masked_fill(mask==0, -inf))
    i = jnp.arange(S)[:, None]
    j = jnp.arange(T)[None, :]
    attn_mask = (j <= i).astype(jnp.float32)

    out_masked = jax.block_until_ready(
        multihead_attention(q, k, v, kparams, H, attn_mask))
    out_nomask = jax.block_until_ready(
        multihead_attention(q, k, v, kparams, H, None))

    assert out_masked.shape == (B, S, D)
    assert out_nomask.shape == (B, S, D)
    assert bool(jnp.all(jnp.isfinite(out_masked)))
    assert bool(jnp.all(jnp.isfinite(out_nomask)))

    # correctness vs pure-JAX f32 reference (exact softmax -> tight tolerance)
    ref_masked = mha_reference(q, k, v, params, H, attn_mask)
    ref_nomask = mha_reference(q, k, v, params, H, None)
    assert bool(jnp.allclose(out_masked, ref_masked, rtol=1e-4, atol=1e-4))
    assert bool(jnp.allclose(out_nomask, ref_nomask, rtol=1e-4, atol=1e-4))

    print("KERNEL_OK")
</pallas_src>

<mosaic_0001>
module attributes {stable_mosaic.version = 11 : i64} {
  func.func @kernel(%arg0: memref<16x32xf32, #tpu.memory_space<vmem>>, %arg1: memref<16x32xf32, #tpu.memory_space<vmem>>, %arg2: memref<16x32xf32, #tpu.memory_space<vmem>>, %arg3: memref<8x8xf32, #tpu.memory_space<vmem>>, %arg4: memref<4x32x8xf32, #tpu.memory_space<vmem>>, %arg5: memref<4x32x8xf32, #tpu.memory_space<vmem>>, %arg6: memref<4x32x8xf32, #tpu.memory_space<vmem>>, %arg7: memref<4x1x8xf32, #tpu.memory_space<vmem>>, %arg8: memref<4x1x8xf32, #tpu.memory_space<vmem>>, %arg9: memref<4x1x8xf32, #tpu.memory_space<vmem>>, %arg10: memref<4x8x32xf32, #tpu.memory_space<vmem>>, %arg11: memref<1x32xf32, #tpu.memory_space<vmem>>, %arg12: memref<16x32xf32, #tpu.memory_space<vmem>>, %arg13: memref<16x32xf32, #tpu.memory_space<vmem>>) attributes {dimension_semantics = [], scalar_prefetch = 0 : i64, scratch_operands = 1 : i64, tpu.core_type = #tpu.core_type<tc>} {
    %c0 = arith.constant 0 : index
    %c0_0 = arith.constant 0 : index
    %0 = vector.load %arg0[%c0, %c0_0] : memref<16x32xf32, #tpu.memory_space<vmem>>, vector<16x32xf32>
    %c0_1 = arith.constant 0 : index
    %c0_2 = arith.constant 0 : index
    %1 = vector.load %arg1[%c0_1, %c0_2] : memref<16x32xf32, #tpu.memory_space<vmem>>, vector<16x32xf32>
    %c0_3 = arith.constant 0 : index
    %c0_4 = arith.constant 0 : index
    %2 = vector.load %arg2[%c0_3, %c0_4] : memref<16x32xf32, #tpu.memory_space<vmem>>, vector<16x32xf32>
    %cst = arith.constant 0.000000e+00 : f32
    %3 = vector.broadcast %cst : f32 to vector<16x32xf32>
    %c0_5 = arith.constant 0 : index
    %c0_6 = arith.constant 0 : index
    %4 = vector.load %arg11[%c0_5, %c0_6] : memref<1x32xf32, #tpu.memory_space<vmem>>, vector<1x32xf32>
    %5 = vector.broadcast %4 : vector<1x32xf32> to vector<16x32xf32>
    %6 = arith.addf %3, %5 : vector<16x32xf32>
    %c0_7 = arith.constant 0 : index
    %c0_8 = arith.constant 0 : index
    %7 = vector.load %arg13[%c0_7, %c0_8] : memref<16x32xf32, #tpu.memory_space<vmem>>, vector<16x32xf32>
    tpu.vector_store %arg13[%c0_7, %c0_8], %6 {strides = array<i32>} : memref<16x32xf32, #tpu.memory_space<vmem>>, vector<16x32xf32>,
    %c0_9 = arith.constant 0 : index
    %c0_10 = arith.constant 0 : index
    %8 = vector.load %arg3[%c0_9, %c0_10] : memref<8x8xf32, #tpu.memory_space<vmem>>, vector<8x8xf32>
    %c0_11 = arith.constant 0 : index
    %c0_12 = arith.constant 0 : index
    %c0_13 = arith.constant 0 : index
    %9 = vector.load %arg4[%c0_11, %c0_12, %c0_13] : memref<4x32x8xf32, #tpu.memory_space<vmem>>, vector<1x32x8xf32>
    %10 = vector.shape_cast %9 : vector<1x32x8xf32> to vector<32x8xf32>
    %cst_14 = arith.constant dense<0.000000e+00> : vector<16x8xf32>
    %11 = tpu.matmul %0, %10, %cst_14 {dimension_numbers = #tpu.dot_dimension_numbers<[1], [0], [0], [1], [0, 0, 1, 1], [], []>} : vector<16x32xf32>, vector<32x8xf32>, vector<16x8xf32> -> vector<16x8xf32>
    %c0_15 = arith.constant 0 : index
    %c0_16 = arith.constant 0 : index
    %c0_17 = arith.constant 0 : index
    %12 = vector.load %arg7[%c0_15, %c0_16, %c0_17] : memref<4x1x8xf32, #tpu.memory_space<vmem>>, vector<1x1x8xf32>
    %13 = vector.shape_cast %12 : vector<1x1x8xf32> to vector<1x8xf32>
    %14 = vector.broadcast %13 : vector<1x8xf32> to vector<16x8xf32>
    %15 = arith.addf %11, %14 : vector<16x8xf32>
    %16 = vector.shape_cast %15 : vector<16x8xf32> to vector<2x8x8xf32>
    %c0_18 = arith.constant 0 : index
    %c0_19 = arith.constant 0 : index
    %c0_20 = arith.constant 0 : index
    %17 = vector.load %arg5[%c0_18, %c0_19, %c0_20] : memref<4x32x8xf32, #tpu.memory_space<vmem>>, vector<1x32x8xf32>
    %18 = vector.shape_cast %17 : vector<1x32x8xf32> to vector<32x8xf32>
    %cst_21 = arith.constant dense<0.000000e+00> : vector<16x8xf32>
    %19 = tpu.matmul %1, %18, %cst_21 {dimension_numbers = #tpu.dot_dimension_numbers<[1], [0], [0], [1], [0, 0, 1, 1], [], []>} : vector<16x32xf32>, vector<32x8xf32>, vector<16x8xf32> -> vector<16x8xf32>
    %c0_22 = arith.constant 0 : index
    %c0_23 = arith.constant 0 : index
    %c0_24 = arith.constant 0 : index
    %20 = vector.load %arg8[%c0_22, %c0_23, %c0_24] : memref<4x1x8xf32, #tpu.memory_space<vmem>>, vector<1x1x8xf32>
    %21 = vector.shape_cast %20 : vector<1x1x8xf32> to vector<1x8xf32>
    %22 = vector.broadcast %21 : vector<1x8xf32> to vector<16x8xf32>
    %23 = arith.addf %19, %22 : vector<16x8xf32>
    %24 = vector.shape_cast %23 : vector<16x8xf32> to vector<2x8x8xf32>
    %c0_25 = arith.constant 0 : index
    %c0_26 = arith.constant 0 : index
    %c0_27 = arith.constant 0 : index
    %25 = vector.load %arg6[%c0_25, %c0_26, %c0_27] : memref<4x32x8xf32, #tpu.memory_space<vmem>>, vector<1x32x8xf32>
    %26 = vector.shape_cast %25 : vector<1x32x8xf32> to vector<32x8xf32>
    %cst_28 = arith.constant dense<0.000000e+00> : vector<16x8xf32>
    %27 = tpu.matmul %2, %26, %cst_28 {dimension_numbers = #tpu.dot_dimension_numbers<[1], [0], [0], [1], [0, 0, 1, 1], [], []>} : vector<16x32xf32>, vector<32x8xf32>, vector<16x8xf32> -> vector<16x8xf32>
    %c0_29 = arith.constant 0 : index
    %c0_30 = arith.constant 0 : index
    %c0_31 = arith.constant 0 : index
    %28 = vector.load %arg9[%c0_29, %c0_30, %c0_31] : memref<4x1x8xf32, #tpu.memory_space<vmem>>, vector<1x1x8xf32>
    %29 = vector.shape_cast %28 : vector<1x1x8xf32> to vector<1x8xf32>
    %30 = vector.broadcast %29 : vector<1x8xf32> to vector<16x8xf32>
    %31 = arith.addf %27, %30 : vector<16x8xf32>
    %32 = vector.shape_cast %31 : vector<16x8xf32> to vector<2x8x8xf32>
    "tpu.trace_start"() <{level = 10 : i32, message = "bsk,btk->bst"}> : () -> ()
    %cst_32 = arith.constant dense<0.000000e+00> : vector<2x8x8xf32>
    %33 = tpu.matmul %16, %24, %cst_32 {dimension_numbers = #tpu.dot_dimension_numbers<[2], [2], [1], [1], [0, 0, 0, 1, 1, 1], [0], [0]>} : vector<2x8x8xf32>, vector<2x8x8xf32>, vector<2x8x8xf32> -> vector<2x8x8xf32>
    "tpu.trace_stop"() : () -> ()
    %34 = vector.shape_cast %8 : vector<8x8xf32> to vector<1x8x8xf32>
    %35 = vector.broadcast %34 : vector<1x8x8xf32> to vector<2x8x8xf32>
    %36 = arith.addf %33, %35 : vector<2x8x8xf32>
    %cst_33 = arith.constant dense<0xFF800000> : vector<2x8xf32>
    %37 = vector.multi_reduction <maximumf>, %36, %cst_33 [2] : vector<2x8x8xf32> to vector<2x8xf32>
    %38 = vector.shape_cast %37 : vector<2x8xf32> to vector<2x8x1xf32>
    %39 = vector.broadcast %38 : vector<2x8x1xf32> to vector<2x8x8xf32>
    %40 = arith.subf %36, %39 : vector<2x8x8xf32>
    %41 = math.exp %40 : vector<2x8x8xf32>
    %cst_34 = arith.constant dense<0.000000e+00> : vector<2x8xf32>
    %42 = vector.multi_reduction <add>, %41, %cst_34 [2] : vector<2x8x8xf32> to vector<2x8xf32>
    %43 = vector.shape_cast %42 : vector<2x8xf32> to vector<2x8x1xf32>
    %44 = vector.broadcast %43 : vector<2x8x1xf32> to vector<2x8x8xf32>
    %45 = arith.divf %41, %44 : vector<2x8x8xf32>
    "tpu.trace_start"() <{level = 10 : i32, message = "bst,btk->bsk"}> : () -> ()
    %cst_35 = arith.constant dense<0.000000e+00> : vector<2x8x8xf32>
    %46 = tpu.matmul %45, %32, %cst_35 {dimension_numbers = #tpu.dot_dimension_numbers<[2], [1], [1], [2], [0, 0, 0, 1, 1, 2], [0], [0]>} : vector<2x8x8xf32>, vector<2x8x8xf32>, vector<2x8x8xf32> -> vector<2x8x8xf32>
    "tpu.trace_stop"() : () -> ()
    %c0_36 = arith.constant 0 : index
    %c0_37 = arith.constant 0 : index
    %47 = vector.load %arg13[%c0_36, %c0_37] : memref<16x32xf32, #tpu.memory_space<vmem>>, vector<16x32xf32>
    %48 = vector.shape_cast %46 : vector<2x8x8xf32> to vector<16x8xf32>
    %c0_38 = arith.constant 0 : index
    %c0_39 = arith.constant 0 : index
    %c0_40 = arith.constant 0 : index
    %49 = vector.load %arg10[%c0_38, %c0_39, %c0_40] : memref<4x8x32xf32, #tpu.memory_space<vmem>>, vector<1x8x32xf32>
    %50 = vector.shape_cast %49 : vector<1x8x32xf32> to vector<8x32xf32>
    %cst_41 = arith.constant dense<0.000000e+00> : vector<16x32xf32>
    %51 = tpu.matmul %48, %50, %cst_41 {dimension_numbers = #tpu.dot_dimension_numbers<[1], [0], [0], [1], [0, 0, 1, 1], [], []>} : vector<16x8xf32>, vector<8x32xf32>, vector<16x32xf32> -> vector<16x32xf32>
    %52 = arith.addf %47, %51 : vector<16x32xf32>
    %c0_42 = arith.constant 0 : index
    %c0_43 = arith.constant 0 : index
    %53 = vector.load %arg13[%c0_42, %c0_43] : memref<16x32xf32, #tpu.memory_space<vmem>>, vector<16x32xf32>
    tpu.vector_store %arg13[%c0_42, %c0_43], %52 {strides = array<i32>} : memref<16x32xf32, #tpu.memory_space<vmem>>, vector<16x32xf32>,
    %c1 = arith.constant 1 : index
    %c0_44 = arith.constant 0 : index
    %c0_45 = arith.constant 0 : index
    %54 = vector.load %arg4[%c1, %c0_44, %c0_45] : memref<4x32x8xf32, #tpu.memory_space<vmem>>, vector<1x32x8xf32>
    %55 = vector.shape_cast %54 : vector<1x32x8xf32> to vector<32x8xf32>
    %cst_46 = arith.constant dense<0.000000e+00> : vector<16x8xf32>
    %56 = tpu.matmul %0, %55, %cst_46 {dimension_numbers = #tpu.dot_dimension_numbers<[1], [0], [0], [1], [0, 0, 1, 1], [], []>} : vector<16x32xf32>, vector<32x8xf32>, vector<16x8xf32> -> vector<16x8xf32>
    %c1_47 = arith.constant 1 : index
    %c0_48 = arith.constant 0 : index
    %c0_49 = arith.constant 0 : index
    %57 = vector.load %arg7[%c1_47, %c0_48, %c0_49] : memref<4x1x8xf32, #tpu.memory_space<vmem>>, vector<1x1x8xf32>
    %58 = vector.shape_cast %57 : vector<1x1x8xf32> to vector<1x8xf32>
    %59 = vector.broadcast %58 : vector<1x8xf32> to vector<16x8xf32>
    %60 = arith.addf %56, %59 : vector<16x8xf32>
    %61 = vector.shape_cast %60 : vector<16x8xf32> to vector<2x8x8xf32>
    %c1_50 = arith.constant 1 : index
    %c0_51 = arith.constant 0 : index
    %c0_52 = arith.constant 0 : index
    %62 = vector.load %arg5[%c1_50, %c0_51, %c0_52] : memref<4x32x8xf32, #tpu.memory_space<vmem>>, vector<1x32x8xf32>
    %63 = vector.shape_cast %62 : vector<1x32x8xf32> to vector<32x8xf32>
    %cst_53 = arith.constant dense<0.000000e+00> : vector<16x8xf32>
    %64 = tpu.matmul %1, %63, %cst_53 {dimension_numbers = #tpu.dot_dimension_numbers<[1], [0], [0], [1], [0, 0, 1, 1], [], []>} : vector<16x32xf32>, vector<32x8xf32>, vector<16x8xf32> -> vector<16x8xf32>
    %c1_54 = arith.constant 1 : index
    %c0_55 = arith.constant 0 : index
    %c0_56 = arith.constant 0 : index
    %65 = vector.load %arg8[%c1_54, %c0_55, %c0_56] : memref<4x1x8xf32, #tpu.memory_space<vmem>>, vector<1x1x8xf32>
    %66 = vector.shape_cast %65 : vector<1x1x8xf32> to vector<1x8xf32>
    %67 = vector.broadcast %66 : vector<1x8xf32> to vector<16x8xf32>
    %68 = arith.addf %64, %67 : vector<16x8xf32>
    %69 = vector.shape_cast %68 : vector<16x8xf32> to vector<2x8x8xf32>
    %c1_57 = arith.constant 1 : index
    %c0_58 = arith.constant 0 : index
    %c0_59 = arith.constant 0 : index
    %70 = vector.load %arg6[%c1_57, %c0_58, %c0_59] : memref<4x32x8xf32, #tpu.memory_space<vmem>>, vector<1x32x8xf32>
    %71 = vector.shape_cast %70 : vector<1x32x8xf32> to vector<32x8xf32>
    %cst_60 = arith.constant dense<0.000000e+00> : vector<16x8xf32>
    %72 = tpu.matmul %2, %71, %cst_60 {dimension_numbers = #tpu.dot_dimension_numbers<[1], [0], [0], [1], [0, 0, 1, 1], [], []>} : vector<16x32xf32>, vector<32x8xf32>, vector<16x8xf32> -> vector<16x8xf32>
    %c1_61 = arith.constant 1 : index
    %c0_62 = arith.constant 0 : index
    %c0_63 = arith.constant 0 : index
    %73 = vector.load %arg9[%c1_61, %c0_62, %c0_63] : memref<4x1x8xf32, #tpu.memory_space<vmem>>, vector<1x1x8xf32>
    %74 = vector.shape_cast %73 : vector<1x1x8xf32> to vector<1x8xf32>
    %75 = vector.broadcast %74 : vector<1x8xf32> to vector<16x8xf32>
    %76 = arith.addf %72, %75 : vector<16x8xf32>
    %77 = vector.shape_cast %76 : vector<16x8xf32> to vector<2x8x8xf32>
    "tpu.trace_start"() <{level = 10 : i32, message = "bsk,btk->bst"}> : () -> ()
    %cst_64 = arith.constant dense<0.000000e+00> : vector<2x8x8xf32>
    %78 = tpu.matmul %61, %69, %cst_64 {dimension_numbers = #tpu.dot_dimension_numbers<[2], [2], [1], [1], [0, 0, 0, 1, 1, 1], [0], [0]>} : vector<2x8x8xf32>, vector<2x8x8xf32>, vector<2x8x8xf32> -> vector<2x8x8xf32>
    "tpu.trace_stop"() : () -> ()
    %79 = vector.shape_cast %8 : vector<8x8xf32> to vector<1x8x8xf32>
    %80 = vector.broadcast %79 : vector<1x8x8xf32> to vector<2x8x8xf32>
    %81 = arith.addf %78, %80 : vector<2x8x8xf32>
    %cst_65 = arith.constant dense<0xFF800000> : vector<2x8xf32>
    %82 = vector.multi_reduction <maximumf>, %81, %cst_65 [2] : vector<2x8x8xf32> to vector<2x8xf32>
    %83 = vector.shape_cast %82 : vector<2x8xf32> to vector<2x8x1xf32>
    %84 = vector.broadcast %83 : vector<2x8x1xf32> to vector<2x8x8xf32>
    %85 = arith.subf %81, %84 : vector<2x8x8xf32>
    %86 = math.exp %85 : vector<2x8x8xf32>
    %cst_66 = arith.constant dense<0.000000e+00> : vector<2x8xf32>
    %87 = vector.multi_reduction <add>, %86, %cst_66 [2] : vector<2x8x8xf32> to vector<2x8xf32>
    %88 = vector.shape_cast %87 : vector<2x8xf32> to vector<2x8x1xf32>
    %89 = vector.broadcast %88 : vector<2x8x1xf32> to vector<2x8x8xf32>
    %90 = arith.divf %86, %89 : vector<2x8x8xf32>
    "tpu.trace_start"() <{level = 10 : i32, message = "bst,btk->bsk"}> : () -> ()
    %cst_67 = arith.constant dense<0.000000e+00> : vector<2x8x8xf32>
    %91 = tpu.matmul %90, %77, %cst_67 {dimension_numbers = #tpu.dot_dimension_numbers<[2], [1], [1], [2], [0, 0, 0, 1, 1, 2], [0], [0]>} : vector<2x8x8xf32>, vector<2x8x8xf32>, vector<2x8x8xf32> -> vector<2x8x8xf32>
    "tpu.trace_stop"() : () -> ()
    %c0_68 = arith.constant 0 : index
    %c0_69 = arith.constant 0 : index
    %92 = vector.load %arg13[%c0_68, %c0_69] : memref<16x32xf32, #tpu.memory_space<vmem>>, vector<16x32xf32>
    %93 = vector.shape_cast %91 : vector<2x8x8xf32> to vector<16x8xf32>
    %c1_70 = arith.constant 1 : index
    %c0_71 = arith.constant 0 : index
    %c0_72 = arith.constant 0 : index
    %94 = vector.load %arg10[%c1_70, %c0_71, %c0_72] : memref<4x8x32xf32, #tpu.memory_space<vmem>>, vector<1x8x32xf32>
    %95 = vector.shape_cast %94 : vector<1x8x32xf32> to vector<8x32xf32>
    %cst_73 = arith.constant dense<0.000000e+00> : vector<16x32xf32>
    %96 = tpu.matmul %93, %95, %cst_73 {dimension_numbers = #tpu.dot_dimension_numbers<[1], [0], [0], [1], [0, 0, 1, 1], [], []>} : vector<16x8xf32>, vector<8x32xf32>, vector<16x32xf32> -> vector<16x32xf32>
    %97 = arith.addf %92, %96 : vector<16x32xf32>
    %c0_74 = arith.constant 0 : index
    %c0_75 = arith.constant 0 : index
    %98 = vector.load %arg13[%c0_74, %c0_75] : memref<16x32xf32, #tpu.memory_space<vmem>>, vector<16x32xf32>
    tpu.vector_store %arg13[%c0_74, %c0_75], %97 {strides = array<i32>} : memref<16x32xf32, #tpu.memory_space<vmem>>, vector<16x32xf32>,
    %c2 = arith.constant 2 : index
    %c0_76 = arith.constant 0 : index
    %c0_77 = arith.constant 0 : index
    %99 = vector.load %arg4[%c2, %c0_76, %c0_77] : memref<4x32x8xf32, #tpu.memory_space<vmem>>, vector<1x32x8xf32>
    %100 = vector.shape_cast %99 : vector<1x32x8xf32> to vector<32x8xf32>
    %cst_78 = arith.constant dense<0.000000e+00> : vector<16x8xf32>
    %101 = tpu.matmul %0, %100, %cst_78 {dimension_numbers = #tpu.dot_dimension_numbers<[1], [0], [0], [1], [0, 0, 1, 1], [], []>} : vector<16x32xf32>, vector<32x8xf32>, vector<16x8xf32> -> vector<16x8xf32>
    %c2_79 = arith.constant 2 : index
    %c0_80 = arith.constant 0 : index
    %c0_81 = arith.constant 0 : index
    %102 = vector.load %arg7[%c2_79, %c0_80, %c0_81] : memref<4x1x8xf32, #tpu.memory_space<vmem>>, vector<1x1x8xf32>
    %103 = vector.shape_cast %102 : vector<1x1x8xf32> to vector<1x8xf32>
    %104 = vector.broadcast %103 : vector<1x8xf32> to vector<16x8xf32>
    %105 = arith.addf %101, %104 : vector<16x8xf32>
    %106 = vector.shape_cast %105 : vector<16x8xf32> to vector<2x8x8xf32>
    %c2_82 = arith.constant 2 : index
    %c0_83 = arith.constant 0 : index
    %c0_84 = arith.constant 0 : index
    %107 = vector.load %arg5[%c2_82, %c0_83, %c0_84] : memref<4x32x8xf32, #tpu.memory_space<vmem>>, vector<1x32x8xf32>
    %108 = vector.shape_cast %107 : vector<1x32x8xf32> to vector<32x8xf32>
    %cst_85 = arith.constant dense<0.000000e+00> : vector<16x8xf32>
    %109 = tpu.matmul %1, %108, %cst_85 {dimension_numbers = #tpu.dot_dimension_numbers<[1], [0], [0], [1], [0, 0, 1, 1], [], []>} : vector<16x32xf32>, vector<32x8xf32>, vector<16x8xf32> -> vector<16x8xf32>
    %c2_86 = arith.constant 2 : index
    %c0_87 = arith.constant 0 : index
    %c0_88 = arith.constant 0 : index
    %110 = vector.load %arg8[%c2_86, %c0_87, %c0_88] : memref<4x1x8xf32, #tpu.memory_space<vmem>>, vector<1x1x8xf32>
    %111 = vector.shape_cast %110 : vector<1x1x8xf32> to vector<1x8xf32>
    %112 = vector.broadcast %111 : vector<1x8xf32> to vector<16x8xf32>
    %113 = arith.addf %109, %112 : vector<16x8xf32>
    %114 = vector.shape_cast %113 : vector<16x8xf32> to vector<2x8x8xf32>
    %c2_89 = arith.constant 2 : index
    %c0_90 = arith.constant 0 : index
    %c0_91 = arith.constant 0 : index
    %115 = vector.load %arg6[%c2_89, %c0_90, %c0_91] : memref<4x32x8xf32, #tpu.memory_space<vmem>>, vector<1x32x8xf32>
    %116 = vector.shape_cast %115 : vector<1x32x8xf32> to vector<32x8xf32>
    %cst_92 = arith.constant dense<0.000000e+00> : vector<16x8xf32>
    %117 = tpu.matmul %2, %116, %cst_92 {dimension_numbers = #tpu.dot_dimension_numbers<[1], [0], [0], [1], [0, 0, 1, 1], [], []>} : vector<16x32xf32>, vector<32x8xf32>, vector<16x8xf32> -> vector<16x8xf32>
    %c2_93 = arith.constant 2 : index
    %c0_94 = arith.constant 0 : index
    %c0_95 = arith.constant 0 : index
    %118 = vector.load %arg9[%c2_93, %c0_94, %c0_95] : memref<4x1x8xf32, #tpu.memory_space<vmem>>, vector<1x1x8xf32>
    %119 = vector.shape_cast %118 : vector<1x1x8xf32> to vector<1x8xf32>
    %120 = vector.broadcast %119 : vector<1x8xf32> to vector<16x8xf32>
    %121 = arith.addf %117, %120 : vector<16x8xf32>
    %122 = vector.shape_cast %121 : vector<16x8xf32> to vector<2x8x8xf32>
    "tpu.trace_start"() <{level = 10 : i32, message = "bsk,btk->bst"}> : () -> ()
    %cst_96 = arith.constant dense<0.000000e+00> : vector<2x8x8xf32>
    %123 = tpu.matmul %106, %114, %cst_96 {dimension_numbers = #tpu.dot_dimension_numbers<[2], [2], [1], [1], [0, 0, 0, 1, 1, 1], [0], [0]>} : vector<2x8x8xf32>, vector<2x8x8xf32>, vector<2x8x8xf32> -> vector<2x8x8xf32>
    "tpu.trace_stop"() : () -> ()
    %124 = vector.shape_cast %8 : vector<8x8xf32> to vector<1x8x8xf32>
    %125 = vector.broadcast %124 : vector<1x8x8xf32> to vector<2x8x8xf32>
    %126 = arith.addf %123, %125 : vector<2x8x8xf32>
    %cst_97 = arith.constant dense<0xFF800000> : vector<2x8xf32>
    %127 = vector.multi_reduction <maximumf>, %126, %cst_97 [2] : vector<2x8x8xf32> to vector<2x8xf32>
    %128 = vector.shape_cast %127 : vector<2x8xf32> to vector<2x8x1xf32>
    %129 = vector.broadcast %128 : vector<2x8x1xf32> to vector<2x8x8xf32>
    %130 = arith.subf %126, %129 : vector<2x8x8xf32>
    %131 = math.exp %130 : vector<2x8x8xf32>
    %cst_98 = arith.constant dense<0.000000e+00> : vector<2x8xf32>
    %132 = vector.multi_reduction <add>, %131, %cst_98 [2] : vector<2x8x8xf32> to vector<2x8xf32>
    %133 = vector.shape_cast %132 : vector<2x8xf32> to vector<2x8x1xf32>
    %134 = vector.broadcast %133 : vector<2x8x1xf32> to vector<2x8x8xf32>
    %135 = arith.divf %131, %134 : vector<2x8x8xf32>
    "tpu.trace_start"() <{level = 10 : i32, message = "bst,btk->bsk"}> : () -> ()
    %cst_99 = arith.constant dense<0.000000e+00> : vector<2x8x8xf32>
    %136 = tpu.matmul %135, %122, %cst_99 {dimension_numbers = #tpu.dot_dimension_numbers<[2], [1], [1], [2], [0, 0, 0, 1, 1, 2], [0], [0]>} : vector<2x8x8xf32>, vector<2x8x8xf32>, vector<2x8x8xf32> -> vector<2x8x8xf32>
    "tpu.trace_stop"() : () -> ()
    %c0_100 = arith.constant 0 : index
    %c0_101 = arith.constant 0 : index
    %137 = vector.load %arg13[%c0_100, %c0_101] : memref<16x32xf32, #tpu.memory_space<vmem>>, vector<16x32xf32>
    %138 = vector.shape_cast %136 : vector<2x8x8xf32> to vector<16x8xf32>
    %c2_102 = arith.constant 2 : index
    %c0_103 = arith.constant 0 : index
    %c0_104 = arith.constant 0 : index
    %139 = vector.load %arg10[%c2_102, %c0_103, %c0_104] : memref<4x8x32xf32, #tpu.memory_space<vmem>>, vector<1x8x32xf32>
    %140 = vector.shape_cast %139 : vector<1x8x32xf32> to vector<8x32xf32>
    %cst_105 = arith.constant dense<0.000000e+00> : vector<16x32xf32>
    %141 = tpu.matmul %138, %140, %cst_105 {dimension_numbers = #tpu.dot_dimension_numbers<[1], [0], [0], [1], [0, 0, 1, 1], [], []>} : vector<16x8xf32>, vector<8x32xf32>, vector<16x32xf32> -> vector<16x32xf32>
    %142 = arith.addf %137, %141 : vector<16x32xf32>
    %c0_106 = arith.constant 0 : index
    %c0_107 = arith.constant 0 : index
    %143 = vector.load %arg13[%c0_106, %c0_107] : memref<16x32xf32, #tpu.memory_space<vmem>>, vector<16x32xf32>
    tpu.vector_store %arg13[%c0_106, %c0_107], %142 {strides = array<i32>} : memref<16x32xf32, #tpu.memory_space<vmem>>, vector<16x32xf32>,
    %c3 = arith.constant 3 : index
    %c0_108 = arith.constant 0 : index
    %c0_109 = arith.constant 0 : index
    %144 = vector.load %arg4[%c3, %c0_108, %c0_109] : memref<4x32x8xf32, #tpu.memory_space<vmem>>, vector<1x32x8xf32>
    %145 = vector.shape_cast %144 : vector<1x32x8xf32> to vector<32x8xf32>
    %cst_110 = arith.constant dense<0.000000e+00> : vector<16x8xf32>
    %146 = tpu.matmul %0, %145, %cst_110 {dimension_numbers = #tpu.dot_dimension_numbers<[1], [0], [0], [1], [0, 0, 1, 1], [], []>} : vector<16x32xf32>, vector<32x8xf32>, vector<16x8xf32> -> vector<16x8xf32>
    %c3_111 = arith.constant 3 : index
    %c0_112 = arith.constant 0 : index
    %c0_113 = arith.constant 0 : index
    %147 = vector.load %arg7[%c3_111, %c0_112, %c0_113] : memref<4x1x8xf32, #tpu.memory_space<vmem>>, vector<1x1x8xf32>
    %148 = vector.shape_cast %147 : vector<1x1x8xf32> to vector<1x8xf32>
    %149 = vector.broadcast %148 : vector<1x8xf32> to vector<16x8xf32>
    %150 = arith.addf %146, %149 : vector<16x8xf32>
    %151 = vector.shape_cast %150 : vector<16x8xf32> to vector<2x8x8xf32>
    %c3_114 = arith.constant 3 : index
    %c0_115 = arith.constant 0 : index
    %c0_116 = arith.constant 0 : index
    %152 = vector.load %arg5[%c3_114, %c0_115, %c0_116] : memref<4x32x8xf32, #tpu.memory_space<vmem>>, vector<1x32x8xf32>
    %153 = vector.shape_cast %152 : vector<1x32x8xf32> to vector<32x8xf32>
    %cst_117 = arith.constant dense<0.000000e+00> : vector<16x8xf32>
    %154 = tpu.matmul %1, %153, %cst_117 {dimension_numbers = #tpu.dot_dimension_numbers<[1], [0], [0], [1], [0, 0, 1, 1], [], []>} : vector<16x32xf32>, vector<32x8xf32>, vector<16x8xf32> -> vector<16x8xf32>
    %c3_118 = arith.constant 3 : index
    %c0_119 = arith.constant 0 : index
    %c0_120 = arith.constant 0 : index
    %155 = vector.load %arg8[%c3_118, %c0_119, %c0_120] : memref<4x1x8xf32, #tpu.memory_space<vmem>>, vector<1x1x8xf32>
    %156 = vector.shape_cast %155 : vector<1x1x8xf32> to vector<1x8xf32>
    %157 = vector.broadcast %156 : vector<1x8xf32> to vector<16x8xf32>
    %158 = arith.addf %154, %157 : vector<16x8xf32>
    %159 = vector.shape_cast %158 : vector<16x8xf32> to vector<2x8x8xf32>
    %c3_121 = arith.constant 3 : index
    %c0_122 = arith.constant 0 : index
    %c0_123 = arith.constant 0 : index
    %160 = vector.load %arg6[%c3_121, %c0_122, %c0_123] : memref<4x32x8xf32, #tpu.memory_space<vmem>>, vector<1x32x8xf32>
    %161 = vector.shape_cast %160 : vector<1x32x8xf32> to vector<32x8xf32>
    %cst_124 = arith.constant dense<0.000000e+00> : vector<16x8xf32>
    %162 = tpu.matmul %2, %161, %cst_124 {dimension_numbers = #tpu.dot_dimension_numbers<[1], [0], [0], [1], [0, 0, 1, 1], [], []>} : vector<16x32xf32>, vector<32x8xf32>, vector<16x8xf32> -> vector<16x8xf32>
    %c3_125 = arith.constant 3 : index
    %c0_126 = arith.constant 0 : index
    %c0_127 = arith.constant 0 : index
    %163 = vector.load %arg9[%c3_125, %c0_126, %c0_127] : memref<4x1x8xf32, #tpu.memory_space<vmem>>, vector<1x1x8xf32>
    %164 = vector.shape_cast %163 : vector<1x1x8xf32> to vector<1x8xf32>
    %165 = vector.broadcast %164 : vector<1x8xf32> to vector<16x8xf32>
    %166 = arith.addf %162, %165 : vector<16x8xf32>
    %167 = vector.shape_cast %166 : vector<16x8xf32> to vector<2x8x8xf32>
    "tpu.trace_start"() <{level = 10 : i32, message = "bsk,btk->bst"}> : () -> ()
    %cst_128 = arith.constant dense<0.000000e+00> : vector<2x8x8xf32>
    %168 = tpu.matmul %151, %159, %cst_128 {dimension_numbers = #tpu.dot_dimension_numbers<[2], [2], [1], [1], [0, 0, 0, 1, 1, 1], [0], [0]>} : vector<2x8x8xf32>, vector<2x8x8xf32>, vector<2x8x8xf32> -> vector<2x8x8xf32>
    "tpu.trace_stop"() : () -> ()
    %169 = vector.shape_cast %8 : vector<8x8xf32> to vector<1x8x8xf32>
    %170 = vector.broadcast %169 : vector<1x8x8xf32> to vector<2x8x8xf32>
    %171 = arith.addf %168, %170 : vector<2x8x8xf32>
    %cst_129 = arith.constant dense<0xFF800000> : vector<2x8xf32>
    %172 = vector.multi_reduction <maximumf>, %171, %cst_129 [2] : vector<2x8x8xf32> to vector<2x8xf32>
    %173 = vector.shape_cast %172 : vector<2x8xf32> to vector<2x8x1xf32>
    %174 = vector.broadcast %173 : vector<2x8x1xf32> to vector<2x8x8xf32>
    %175 = arith.subf %171, %174 : vector<2x8x8xf32>
    %176 = math.exp %175 : vector<2x8x8xf32>
    %cst_130 = arith.constant dense<0.000000e+00> : vector<2x8xf32>
    %177 = vector.multi_reduction <add>, %176, %cst_130 [2] : vector<2x8x8xf32> to vector<2x8xf32>
    %178 = vector.shape_cast %177 : vector<2x8xf32> to vector<2x8x1xf32>
    %179 = vector.broadcast %178 : vector<2x8x1xf32> to vector<2x8x8xf32>
    %180 = arith.divf %176, %179 : vector<2x8x8xf32>
    "tpu.trace_start"() <{level = 10 : i32, message = "bst,btk->bsk"}> : () -> ()
    %cst_131 = arith.constant dense<0.000000e+00> : vector<2x8x8xf32>
    %181 = tpu.matmul %180, %167, %cst_131 {dimension_numbers = #tpu.dot_dimension_numbers<[2], [1], [1], [2], [0, 0, 0, 1, 1, 2], [0], [0]>} : vector<2x8x8xf32>, vector<2x8x8xf32>, vector<2x8x8xf32> -> vector<2x8x8xf32>
    "tpu.trace_stop"() : () -> ()
    %c0_132 = arith.constant 0 : index
    %c0_133 = arith.constant 0 : index
    %182 = vector.load %arg13[%c0_132, %c0_133] : memref<16x32xf32, #tpu.memory_space<vmem>>, vector<16x32xf32>
    %183 = vector.shape_cast %181 : vector<2x8x8xf32> to vector<16x8xf32>
    %c3_134 = arith.constant 3 : index
    %c0_135 = arith.constant 0 : index
    %c0_136 = arith.constant 0 : index
    %184 = vector.load %arg10[%c3_134, %c0_135, %c0_136] : memref<4x8x32xf32, #tpu.memory_space<vmem>>, vector<1x8x32xf32>
    %185 = vector.shape_cast %184 : vector<1x8x32xf32> to vector<8x32xf32>
    %cst_137 = arith.constant dense<0.000000e+00> : vector<16x32xf32>
    %186 = tpu.matmul %183, %185, %cst_137 {dimension_numbers = #tpu.dot_dimension_numbers<[1], [0], [0], [1], [0, 0, 1, 1], [], []>} : vector<16x8xf32>, vector<8x32xf32>, vector<16x32xf32> -> vector<16x32xf32>
    %187 = arith.addf %182, %186 : vector<16x32xf32>
    %c0_138 = arith.constant 0 : index
    %c0_139 = arith.constant 0 : index
    %188 = vector.load %arg13[%c0_138, %c0_139] : memref<16x32xf32, #tpu.memory_space<vmem>>, vector<16x32xf32>
    tpu.vector_store %arg13[%c0_138, %c0_139], %187 {strides = array<i32>} : memref<16x32xf32, #tpu.memory_space<vmem>>, vector<16x32xf32>,
    %c0_140 = arith.constant 0 : index
    %c0_141 = arith.constant 0 : index
    %189 = vector.load %arg13[%c0_140, %c0_141] : memref<16x32xf32, #tpu.memory_space<vmem>>, vector<16x32xf32>
    %c0_142 = arith.constant 0 : index
    %c0_143 = arith.constant 0 : index
    %190 = vector.load %arg12[%c0_142, %c0_143] : memref<16x32xf32, #tpu.memory_space<vmem>>, vector<16x32xf32>
    tpu.vector_store %arg12[%c0_142, %c0_143], %189 {strides = array<i32>} : memref<16x32xf32, #tpu.memory_space<vmem>>, vector<16x32xf32>,
    return
  }
}

</mosaic_0001>

<llo_original>
// kernel: tpu_custom_call.1
$region0: #{tpu_custom_call.1}
  #allocation0 [shape = 'u32[]', space=smem, size = 0x4, offset = 0x4, fixed_abs, tag = 'smem constant byte address 0x4 - core index']
  #allocation1 [shape = 'u32[144,128]{1,0:T(1,128)}', space=vmem, size = 0x12000, scoped, tag = 'internal scratch']
  #allocation2 [shape = 'f32[16,32]{1,0:T(8,128)}', space=vmem, size = 0x2000, scoped, tag = 'scratch operand']
  %s0 = inlined_call_operand.vmem [shape: f32[16,32], index: 0, kind: input, shape index: {}]
  %s1 = inlined_call_operand.vmem [shape: f32[16,32], index: 1, kind: input, shape index: {}]
  %s2 = inlined_call_operand.vmem [shape: f32[16,32], index: 2, kind: input, shape index: {}]
  %s3 = inlined_call_operand.vmem [shape: f32[8,8], index: 3, kind: input, shape index: {}]
  %s4 = inlined_call_operand.vmem [shape: f32[4,32,8], index: 4, kind: input, shape index: {}]
  %s5 = inlined_call_operand.vmem [shape: f32[4,32,8], index: 5, kind: input, shape index: {}]
  %s6 = inlined_call_operand.vmem [shape: f32[4,32,8], index: 6, kind: input, shape index: {}]
  %s7 = inlined_call_operand.vmem [shape: f32[4,1,8], index: 7, kind: input, shape index: {}]
  %s8 = inlined_call_operand.vmem [shape: f32[4,1,8], index: 8, kind: input, shape index: {}]
  %s9 = inlined_call_operand.vmem [shape: f32[4,1,8], index: 9, kind: input, shape index: {}]
  %s10 = inlined_call_operand.vmem [shape: f32[4,8,32], index: 10, kind: input, shape index: {}]
  %s11 = inlined_call_operand.vmem [shape: f32[1,32], index: 11, kind: input, shape index: {}]
  %s12 = inlined_call_operand.hbm [shape: f32[16,32], index: 12, kind: output, shape index: {}]
  %s13 = sld [smem:[#allocation0]]
  $region58: #{tpu_custom_call.1} parent=0
    _
  %s15 = ssub.s32 1, %s13
  %s16 = scalar_select 0, %s15, %s13
  $region1: #{tpu_custom_call.1} parent=0
    #allocation3 [shape = 'u8[8192]{0}', space=vmem, size = 0x2000, scoped, tag = 'output window, operand 0, single buffered']
    #allocation4 [shape = 's32[1]{0}', space=sflag, size = 0x4, scoped, tag = 'scoped memory for tpu_custom_call.1']
    %17 = vsyncpa [#allocation4], 0
    // Predicated region
    $region2: #{tpu_custom_call.1} parent=1 // pred_check
      _
    $region3: #{tpu_custom_call.1} parent=1 // pred_check_branch
      %19 = sbr.rel (0) target = $region5
    $region4: #{tpu_custom_call.1} parent=1 // pred_region
      _
    $region5: #{tpu_custom_call.1} parent=1 // pred_fallthru
      _
    // Predicated region
    $region6: #{tpu_custom_call.1} parent=1 // pred_check
      _
    $region7: #{tpu_custom_call.1} parent=1 // pred_check_branch
      %21 = sbr.rel (0) target = $region9
    $region8: #{tpu_custom_call.1} parent=1 // pred_region
      _
    $region9: #{tpu_custom_call.1} parent=1 // pred_fallthru
      _
    // Predicated region
    $region10: #{tpu_custom_call.1} parent=1 // pred_check
      _
    $region11: #{tpu_custom_call.1} parent=1 // pred_check_branch
      %23 = sbr.rel (0) target = $region13
    $region12: #{tpu_custom_call.1} parent=1 // pred_region
      _
    $region13: #{tpu_custom_call.1} parent=1 // pred_fallthru
      _
    // Predicated region
    $region14: #{tpu_custom_call.1} parent=1 // pred_check
      _
    $region15: #{tpu_custom_call.1} parent=1 // pred_check_branch
      %25 = sbr.rel (0) target = $region17
    $region16: #{tpu_custom_call.1} parent=1 // pred_region
      _
    $region17: #{tpu_custom_call.1} parent=1 // pred_fallthru
      _
    // Predicated region
    $region18: #{tpu_custom_call.1} parent=1 // pred_check
      _
    $region19: #{tpu_custom_call.1} parent=1 // pred_check_branch
      %27 = sbr.rel (0) target = $region21
    $region20: #{tpu_custom_call.1} parent=1 // pred_region
      _
    $region21: #{tpu_custom_call.1} parent=1 // pred_fallthru
      _
    // Predicated region
    $region22: #{tpu_custom_call.1} parent=1 // pred_check
      _
    $region23: #{tpu_custom_call.1} parent=1 // pred_check_branch
      %29 = sbr.rel (0) target = $region25
    $region24: #{tpu_custom_call.1} parent=1 // pred_region
      _
    $region25: #{tpu_custom_call.1} parent=1 // pred_fallthru
      _
    // Predicated region
    $region26: #{tpu_custom_call.1} parent=1 // pred_check
      _
    $region27: #{tpu_custom_call.1} parent=1 // pred_check_branch
      %31 = sbr.rel (0) target = $region29
    $region28: #{tpu_custom_call.1} parent=1 // pred_region
      _
    $region29: #{tpu_custom_call.1} parent=1 // pred_fallthru
      _
    // Predicated region
    $region30: #{tpu_custom_call.1} parent=1 // pred_check
      _
    $region31: #{tpu_custom_call.1} parent=1 // pred_check_branch
      %33 = sbr.rel (0) target = $region33
    $region32: #{tpu_custom_call.1} parent=1 // pred_region
      _
    $region33: #{tpu_custom_call.1} parent=1 // pred_fallthru
      _
    // Predicated region
    $region34: #{tpu_custom_call.1} parent=1 // pred_check
      _
    $region35: #{tpu_custom_call.1} parent=1 // pred_check_branch
      %35 = sbr.rel (0) target = $region37
    $region36: #{tpu_custom_call.1} parent=1 // pred_region
      _
    $region37: #{tpu_custom_call.1} parent=1 // pred_fallthru
      _
    // Predicated region
    $region38: #{tpu_custom_call.1} parent=1 // pred_check
      _
    $region39: #{tpu_custom_call.1} parent=1 // pred_check_branch
      %37 = sbr.rel (0) target = $region41
    $region40: #{tpu_custom_call.1} parent=1 // pred_region
      _
    $region41: #{tpu_custom_call.1} parent=1 // pred_fallthru
      _
    // Predicated region
    $region42: #{tpu_custom_call.1} parent=1 // pred_check
      _
    $region43: #{tpu_custom_call.1} parent=1 // pred_check_branch
      %39 = sbr.rel (0) target = $region45
    $region44: #{tpu_custom_call.1} parent=1 // pred_region
      _
    $region45: #{tpu_custom_call.1} parent=1 // pred_fallthru
      _
    // Predicated region
    $region46: #{tpu_custom_call.1} parent=1 // pred_check
      _
    $region47: #{tpu_custom_call.1} parent=1 // pred_check_branch
      %41 = sbr.rel (0) target = $region49
    $region48: #{tpu_custom_call.1} parent=1 // pred_region
      _
    $region49: #{tpu_custom_call.1} parent=1 // pred_fallthru
      _
    %v42 = vld [vmem:[%s0] sm:$0xff]
    %v43 = vld [vmem:[%s0 + $0x8] sm:$0xff]
    %v44 = vld [vmem:[%s1] sm:$0xff]
    %v45 = vld [vmem:[%s1 + $0x8] sm:$0xff]
    %v46 = vld [vmem:[%s2] sm:$0xff]
    %v47 = vld [vmem:[%s2 + $0x8] sm:$0xff]
    %v48 = vld [vmem:[%s11] sm:$0x1]
    %v50 = vlaneseq
    %v51 = vshrl.u32 %v50, 7
    %v52 = vsub.s32 0, %v51
    %v53 = vrot.slane %v48, %v52
    %v55 = vadd.f32 %v53, 0.0
    %vm56 = vcmask 261120
    %57 = vst.msk [vmem:[#allocation2] sm:$0xff] %vm56, %v55
    %58 = vst.msk [vmem:[#allocation2 + $0x8] sm:$0xff] %vm56, %v55
    %v59 = vld [vmem:[%s3] sm:$0xff]
    %v60 = vld [vmem:[%s4] sm:$0xff]
    %v61 = vld [vmem:[%s4 + $0x8] sm:$0xff]
    %v62 = vld [vmem:[%s4 + $0x10] sm:$0xff]
    %v63 = vld [vmem:[%s4 + $0x18] sm:$0xff]
    %v64 = vld [vmem:[%s7] sm:$0x1]
    %v66 = vlaneseq
    %v67 = vshrl.u32 %v66, 7
    %v68 = vsub.s32 0, %v67
    %v69 = vrot.slane %v64, %v68
    %v72 = vsel %vm56, %v42, 0
    %v75 = vsel %vm56, %v43, 0
    %77 = vmatprep.subr.mxu0 0.0
    %78 = vmatpush1.msra.mxu0 %v60
    %79 = vmatprep.subr.mxu0 0.0
    %80 = vmatpush1.msra.mxu0 %v61
    %81 = vmatprep.subr.mxu0 0.0
    %82 = vmatpush1.msra.mxu0 %v62
    %83 = vmatprep.subr.mxu0 0.0
    %84 = vmatpush1.msra.mxu0 %v63
    %85 = vmatprep.subr.mxu0 0.0
    %86 = vmatpush1.msra.mxu0 0.0
    %87 = vmatprep.subr.mxu0 0.0
    %88 = vmatpush1.msra.mxu0 0.0
    %89 = vmatprep.subr.mxu0 0.0
    %90 = vmatpush1.msra.mxu0 0.0
    %91 = vmatprep.subr.mxu0 0.0
    %92 = vmatpush1.msra.mxu0 0.0
    %93 = vmatprep.subr.mxu0 0.0
    %94 = vmatpush1.msra.mxu0 0.0
    %95 = vmatprep.subr.mxu0 0.0
    %96 = vmatpush1.msra.mxu0 0.0
    %97 = vmatprep.subr.mxu0 0.0
    %98 = vmatpush1.msra.mxu0 0.0
    %99 = vmatprep.subr.mxu0 0.0
    %100 = vmatpush1.msra.mxu0 0.0
    %101 = vmatprep.subr.mxu0 0.0
    %102 = vmatpush1.msra.mxu0 0.0
    %103 = vmatprep.subr.mxu0 0.0
    %104 = vmatpush1.msra.mxu0 0.0
    %105 = vmatprep.subr.mxu0 0.0
    %106 = vmatpush1.msra.mxu0 0.0
    %107 = vmatprep.subr.mxu0 0.0
    %108 = vmatpush1.msra.mxu0 0.0
    %109 = vmatprep.subr.mxu0 0.0
    %110 = vmatpush1.msra.mxu0 0.0
    %111 = vmatprep.subr.mxu0 0.0
    %112 = vmatpush1.msra.mxu0 0.0
    %113 = vmatprep.subr.mxu0 0.0
    %114 = vmatpush1.msra.mxu0 0.0
    %115 = vmatprep.subr.mxu0 0.0
    %116 = vmatpush1.msra.mxu0 0.0
    %117 = vmatprep.subr.mxu0 0.0
    %118 = vmatpush1.msra.mxu0 0.0
    %119 = vmatprep.subr.mxu0 0.0
    %120 = vmatpush1.msra.mxu0 0.0
    %121 = vmatprep.subr.mxu0 0.0
    %122 = vmatpush1.msra.mxu0 0.0
    %123 = vmatprep.subr.mxu0 0.0
    %124 = vmatpush1.msra.mxu0 0.0
    %125 = vmatprep.subr.mxu0 0.0
    %126 = vmatpush1.msra.mxu0 0.0
    %127 = vmatprep.subr.mxu0 0.0
    %128 = vmatpush1.msra.mxu0 0.0
    %129 = vmatprep.subr.mxu0 0.0
    %130 = vmatpush1.msra.mxu0 0.0
    %131 = vmatprep.subr.mxu0 0.0
    %132 = vmatpush1.msra.mxu0 0.0
    %133 = vmatprep.subr.mxu0 0.0
    %134 = vmatpush1.msra.mxu0 0.0
    %135 = vmatprep.subr.mxu0 0.0
    %136 = vmatpush1.msra.mxu0 0.0
    %137 = vmatprep.subr.mxu0 0.0
    %138 = vmatpush1.msra.mxu0 0.0
    %139 = vmatprep.subr.mxu0 0.0
    %140 = vmatpush1.msra.mxu0 0.0
    %141 = vmatprep.mubr.f32.mxu0 0.0
    %142 = vmatmul.mubr.f32.gmra.mrb[0].mxu0 %v72
    %v143 = vpop.f32.mrb[0].mxu0
    %v144 = vadd.f32 %v69, %v143
    %v145 = vpop.f32.mrb[0].mxu0
    %146 = vmatprep.mubr.f32.mxu0 0.0
    %147 = vmatmul.mubr.f32.gmra.mrb[0].mxu0 %v75
    %v148 = vpop.f32.mrb[0].mxu0
    %v149 = vadd.f32 %v69, %v148
    %v150 = vpop.f32.mrb[0].mxu0
    %151 = vdwg.mxu0
    %v152 = vld [vmem:[%s5] sm:$0xff]
    %v153 = vld [vmem:[%s5 + $0x8] sm:$0xff]
    %v154 = vld [vmem:[%s5 + $0x10] sm:$0xff]
    %v155 = vld [vmem:[%s5 + $0x18] sm:$0xff]
    %v156 = vld [vmem:[%s8] sm:$0x1]
    %v158 = vlaneseq
    %v159 = vshrl.u32 %v158, 7
    %v160 = vsub.s32 0, %v159
    %v161 = vrot.slane %v156, %v160
    %v164 = vsel %vm56, %v44, 0
    %v167 = vsel %vm56, %v45, 0
    %169 = vmatprep.subr.mxu0 0.0
    %170 = vmatpush1.msra.mxu0 %v152
    %171 = vmatprep.subr.mxu0 0.0
    %172 = vmatpush1.msra.mxu0 %v153
    %173 = vmatprep.subr.mxu0 0.0
    %174 = vmatpush1.msra.mxu0 %v154
    %175 = vmatprep.subr.mxu0 0.0
    %176 = vmatpush1.msra.mxu0 %v155
    %177 = vmatprep.subr.mxu0 0.0
    %178 = vmatpush1.msra.mxu0 0.0
    %179 = vmatprep.subr.mxu0 0.0
    %180 = vmatpush1.msra.mxu0 0.0
    %181 = vmatprep.subr.mxu0 0.0
    %182 = vmatpush1.msra.mxu0 0.0
    %183 = vmatprep.subr.mxu0 0.0
    %184 = vmatpush1.msra.mxu0 0.0
    %185 = vmatprep.subr.mxu0 0.0
    %186 = vmatpush1.msra.mxu0 0.0
    %187 = vmatprep.subr.mxu0 0.0
    %188 = vmatpush1.msra.mxu0 0.0
    %189 = vmatprep.subr.mxu0 0.0
    %190 = vmatpush1.msra.mxu0 0.0
    %191 = vmatprep.subr.mxu0 0.0
    %192 = vmatpush1.msra.mxu0 0.0
    %193 = vmatprep.subr.mxu0 0.0
    %194 = vmatpush1.msra.mxu0 0.0
    %195 = vmatprep.subr.mxu0 0.0
    %196 = vmatpush1.msra.mxu0 0.0
    %197 = vmatprep.subr.mxu0 0.0
    %198 = vmatpush1.msra.mxu0 0.0
    %199 = vmatprep.subr.mxu0 0.0
    %200 = vmatpush1.msra.mxu0 0.0
    %201 = vmatprep.subr.mxu0 0.0
    %202 = vmatpush1.msra.mxu0 0.0
    %203 = vmatprep.subr.mxu0 0.0
    %204 = vmatpush1.msra.mxu0 0.0
    %205 = vmatprep.subr.mxu0 0.0
    %206 = vmatpush1.msra.mxu0 0.0
    %207 = vmatprep.subr.mxu0 0.0
    %208 = vmatpush1.msra.mxu0 0.0
    %209 = vmatprep.subr.mxu0 0.0
    %210 = vmatpush1.msra.mxu0 0.0
    %211 = vmatprep.subr.mxu0 0.0
    %212 = vmatpush1.msra.mxu0 0.0
    %213 = vmatprep.subr.mxu0 0.0
    %214 = vmatpush1.msra.mxu0 0.0
    %215 = vmatprep.subr.mxu0 0.0
    %216 = vmatpush1.msra.mxu0 0.0
    %217 = vmatprep.subr.mxu0 0.0
    %218 = vmatpush1.msra.mxu0 0.0
    %219 = vmatprep.subr.mxu0 0.0
    %220 = vmatpush1.msra.mxu0 0.0
    %221 = vmatprep.subr.mxu0 0.0
    %222 = vmatpush1.msra.mxu0 0.0
    %223 = vmatprep.subr.mxu0 0.0
    %224 = vmatpush1.msra.mxu0 0.0
    %225 = vmatprep.subr.mxu0 0.0
    %226 = vmatpush1.msra.mxu0 0.0
    %227 = vmatprep.subr.mxu0 0.0
    %228 = vmatpush1.msra.mxu0 0.0
    %229 = vmatprep.subr.mxu0 0.0
    %230 = vmatpush1.msra.mxu0 0.0
    %231 = vmatprep.subr.mxu0 0.0
    %232 = vmatpush1.msra.mxu0 0.0
    %233 = vmatprep.mubr.f32.mxu0 0.0
    %234 = vmatmul.mubr.f32.gmra.mrb[0].mxu0 %v164
    %v235 = vpop.f32.mrb[0].mxu0
    %v236 = vadd.f32 %v161, %v235
    %v237 = vpop.f32.mrb[0].mxu0
    %238 = vmatprep.mubr.f32.mxu0 0.0
    %239 = vmatmul.mubr.f32.gmra.mrb[0].mxu0 %v167
    %v240 = vpop.f32.mrb[0].mxu0
    %v241 = vadd.f32 %v161, %v240
    %v242 = vpop.f32.mrb[0].mxu0
    %243 = vdwg.mxu0
    %v244 = vld [vmem:[%s6] sm:$0xff]
    %v245 = vld [vmem:[%s6 + $0x8] sm:$0xff]
    %v246 = vld [vmem:[%s6 + $0x10] sm:$0xff]
    %v247 = vld [vmem:[%s6 + $0x18] sm:$0xff]
    %v248 = vld [vmem:[%s9] sm:$0x1]
    %v250 = vlaneseq
    %v251 = vshrl.u32 %v250, 7
    %v252 = vsub.s32 0, %v251
    %v253 = vrot.slane %v248, %v252
    %v256 = vsel %vm56, %v46, 0
    %v259 = vsel %vm56, %v47, 0
    %261 = vmatprep.subr.mxu0 0.0
    %262 = vmatpush1.msra.mxu0 %v244
    %263 = vmatprep.subr.mxu0 0.0
    %264 = vmatpush1.msra.mxu0 %v245
    %265 = vmatprep.subr.mxu0 0.0
    %266 = vmatpush1.msra.mxu0 %v246
    %267 = vmatprep.subr.mxu0 0.0
    %268 = vmatpush1.msra.mxu0 %v247
    %269 = vmatprep.subr.mxu0 0.0
    %270 = vmatpush1.msra.mxu0 0.0
    %271 = vmatprep.subr.mxu0 0.0
    %272 = vmatpush1.msra.mxu0 0.0
    %273 = vmatprep.subr.mxu0 0.0
    %274 = vmatpush1.msra.mxu0 0.0
    %275 = vmatprep.subr.mxu0 0.0
    %276 = vmatpush1.msra.mxu0 0.0
    %277 = vmatprep.subr.mxu0 0.0
    %278 = vmatpush1.msra.mxu0 0.0
    %279 = vmatprep.subr.mxu0 0.0
    %280 = vmatpush1.msra.mxu0 0.0
    %281 = vmatprep.subr.mxu0 0.0
    %282 = vmatpush1.msra.mxu0 0.0
    %283 = vmatprep.subr.mxu0 0.0
    %284 = vmatpush1.msra.mxu0 0.0
    %285 = vmatprep.subr.mxu0 0.0
    %286 = vmatpush1.msra.mxu0 0.0
    %287 = vmatprep.subr.mxu0 0.0
    %288 = vmatpush1.msra.mxu0 0.0
    %289 = vmatprep.subr.mxu0 0.0
    %290 = vmatpush1.msra.mxu0 0.0
    %291 = vmatprep.subr.mxu0 0.0
    %292 = vmatpush1.msra.mxu0 0.0
    %293 = vmatprep.subr.mxu0 0.0
    %294 = vmatpush1.msra.mxu0 0.0
    %295 = vmatprep.subr.mxu0 0.0
    %296 = vmatpush1.msra.mxu0 0.0
    %297 = vmatprep.subr.mxu0 0.0
    %298 = vmatpush1.msra.mxu0 0.0
    %299 = vmatprep.subr.mxu0 0.0
    %300 = vmatpush1.msra.mxu0 0.0
    %301 = vmatprep.subr.mxu0 0.0
    %302 = vmatpush1.msra.mxu0 0.0
    %303 = vmatprep.subr.mxu0 0.0
    %304 = vmatpush1.msra.mxu0 0.0
    %305 = vmatprep.subr.mxu0 0.0
    %306 = vmatpush1.msra.mxu0 0.0
    %307 = vmatprep.subr.mxu0 0.0
    %308 = vmatpush1.msra.mxu0 0.0
    %309 = vmatprep.subr.mxu0 0.0
    %310 = vmatpush1.msra.mxu0 0.0
    %311 = vmatprep.subr.mxu0 0.0
    %312 = vmatpush1.msra.mxu0 0.0
    %313 = vmatprep.subr.mxu0 0.0
    %314 = vmatpush1.msra.mxu0 0.0
    %315 = vmatprep.subr.mxu0 0.0
    %316 = vmatpush1.msra.mxu0 0.0
    %317 = vmatprep.subr.mxu0 0.0
    %318 = vmatpush1.msra.mxu0 0.0
    %319 = vmatprep.subr.mxu0 0.0
    %320 = vmatpush1.msra.mxu0 0.0
    %321 = vmatprep.subr.mxu0 0.0
    %322 = vmatpush1.msra.mxu0 0.0
    %323 = vmatprep.subr.mxu0 0.0
    %324 = vmatpush1.msra.mxu0 0.0
    %325 = vmatprep.mubr.f32.mxu0 0.0
    %326 = vmatmul.mubr.f32.gmra.mrb[0].mxu0 %v256
    %v327 = vpop.f32.mrb[0].mxu0
    %v328 = vadd.f32 %v253, %v327
    %v329 = vpop.f32.mrb[0].mxu0
    %330 = vmatprep.mubr.f32.mxu0 0.0
    %331 = vmatmul.mubr.f32.gmra.mrb[0].mxu0 %v259
    %v332 = vpop.f32.mrb[0].mxu0
    %v333 = vadd.f32 %v253, %v332
    %v334 = vpop.f32.mrb[0].mxu0
    %335 = vdwg.mxu0
    %vm336 = vcmask 64512
    %v338 = vsel %vm336, %v144, 0
    %v341 = vsel %vm336, %v236, 0
    %343 = vmatprep.subr.mxu0 0.0
    %344 = vmatpush1.xpose.msra.mxu0 %v341
    %345 = vmatprep.subr.mxu0 0.0
    %346 = vmatpush1.xpose.msra.mxu0 0.0
    %347 = vmatprep.subr.mxu0 0.0
    %348 = vmatpush1.xpose.msra.mxu0 0.0
    %349 = vmatprep.subr.mxu0 0.0
    %350 = vmatpush1.xpose.msra.mxu0 0.0
    %351 = vmatprep.subr.mxu0 0.0
    %352 = vmatpush1.xpose.msra.mxu0 0.0
    %353 = vmatprep.subr.mxu0 0.0
    %354 = vmatpush1.xpose.msra.mxu0 0.0
    %355 = vmatprep.subr.mxu0 0.0
    %356 = vmatpush1.xpose.msra.mxu0 0.0
    %357 = vmatprep.subr.mxu0 0.0
    %358 = vmatpush1.xpose.msra.mxu0 0.0
    %359 = vmatprep.subr.mxu0 0.0
    %360 = vmatpush1.xpose.msra.mxu0 0.0
    %361 = vmatprep.subr.mxu0 0.0
    %362 = vmatpush1.xpose.msra.mxu0 0.0
    %363 = vmatprep.subr.mxu0 0.0
    %364 = vmatpush1.xpose.msra.mxu0 0.0
    %365 = vmatprep.subr.mxu0 0.0
    %366 = vmatpush1.xpose.msra.mxu0 0.0
    %367 = vmatprep.subr.mxu0 0.0
    %368 = vmatpush1.xpose.msra.mxu0 0.0
    %369 = vmatprep.subr.mxu0 0.0
    %370 = vmatpush1.xpose.msra.mxu0 0.0
    %371 = vmatprep.subr.mxu0 0.0
    %372 = vmatpush1.xpose.msra.mxu0 0.0
    %373 = vmatprep.subr.mxu0 0.0
    %374 = vmatpush1.xpose.msra.mxu0 0.0
    %375 = vmatprep.subr.mxu0 0.0
    %376 = vmatpush1.xpose.msra.mxu0 0.0
    %377 = vmatprep.subr.mxu0 0.0
    %378 = vmatpush1.xpose.msra.mxu0 0.0
    %379 = vmatprep.subr.mxu0 0.0
    %380 = vmatpush1.xpose.msra.mxu0 0.0
    %381 = vmatprep.subr.mxu0 0.0
    %382 = vmatpush1.xpose.msra.mxu0 0.0
    %383 = vmatprep.subr.mxu0 0.0
    %384 = vmatpush1.xpose.msra.mxu0 0.0
    %385 = vmatprep.subr.mxu0 0.0
    %386 = vmatpush1.xpose.msra.mxu0 0.0
    %387 = vmatprep.subr.mxu0 0.0
    %388 = vmatpush1.xpose.msra.mxu0 0.0
    %389 = vmatprep.subr.mxu0 0.0
    %390 = vmatpush1.xpose.msra.mxu0 0.0
    %391 = vmatprep.subr.mxu0 0.0
    %392 = vmatpush1.xpose.msra.mxu0 0.0
    %393 = vmatprep.subr.mxu0 0.0
    %394 = vmatpush1.xpose.msra.mxu0 0.0
    %395 = vmatprep.subr.mxu0 0.0
    %396 = vmatpush1.xpose.msra.mxu0 0.0
    %397 = vmatprep.subr.mxu0 0.0
    %398 = vmatpush1.xpose.msra.mxu0 0.0
    %399 = vmatprep.subr.mxu0 0.0
    %400 = vmatpush1.xpose.msra.mxu0 0.0
    %401 = vmatprep.subr.mxu0 0.0
    %402 = vmatpush1.xpose.msra.mxu0 0.0
    %403 = vmatprep.subr.mxu0 0.0
    %404 = vmatpush1.xpose.msra.mxu0 0.0
    %405 = vmatprep.subr.mxu0 0.0
    %406 = vmatpush1.xpose.msra.mxu0 0.0
    %407 = vmatprep.mubr.f32.mxu0 0.0
    %408 = vmatmul.mubr.f32.gmra.mrb[0].mxu0 %v338
    %v409 = vpop.f32.mrb[0].mxu0
    %v410 = vadd.f32 %v59, %v409
    %v411 = vpop.f32.mrb[0].mxu0
    %412 = vdwg.mxu0
    %v414 = vsel %vm336, %v149, 0
    %v417 = vsel %vm336, %v241, 0
    %419 = vmatprep.subr.mxu0 0.0
    %420 = vmatpush1.xpose.msra.mxu0 %v417
    %421 = vmatprep.subr.mxu0 0.0
    %422 = vmatpush1.xpose.msra.mxu0 0.0
    %423 = vmatprep.subr.mxu0 0.0
    %424 = vmatpush1.xpose.msra.mxu0 0.0
    %425 = vmatprep.subr.mxu0 0.0
    %426 = vmatpush1.xpose.msra.mxu0 0.0
    %427 = vmatprep.subr.mxu0 0.0
    %428 = vmatpush1.xpose.msra.mxu0 0.0
    %429 = vmatprep.subr.mxu0 0.0
    %430 = vmatpush1.xpose.msra.mxu0 0.0
    %431 = vmatprep.subr.mxu0 0.0
    %432 = vmatpush1.xpose.msra.mxu0 0.0
    %433 = vmatprep.subr.mxu0 0.0
    %434 = vmatpush1.xpose.msra.mxu0 0.0
    %435 = vmatprep.subr.mxu0 0.0
    %436 = vmatpush1.xpose.msra.mxu0 0.0
    %437 = vmatprep.subr.mxu0 0.0
    %438 = vmatpush1.xpose.msra.mxu0 0.0
    %439 = vmatprep.subr.mxu0 0.0
    %440 = vmatpush1.xpose.msra.mxu0 0.0
    %441 = vmatprep.subr.mxu0 0.0
    %442 = vmatpush1.xpose.msra.mxu0 0.0
    %443 = vmatprep.subr.mxu0 0.0
    %444 = vmatpush1.xpose.msra.mxu0 0.0
    %445 = vmatprep.subr.mxu0 0.0
    %446 = vmatpush1.xpose.msra.mxu0 0.0
    %447 = vmatprep.subr.mxu0 0.0
    %448 = vmatpush1.xpose.msra.mxu0 0.0
    %449 = vmatprep.subr.mxu0 0.0
    %450 = vmatpush1.xpose.msra.mxu0 0.0
    %451 = vmatprep.subr.mxu0 0.0
    %452 = vmatpush1.xpose.msra.mxu0 0.0
    %453 = vmatprep.subr.mxu0 0.0
    %454 = vmatpush1.xpose.msra.mxu0 0.0
    %455 = vmatprep.subr.mxu0 0.0
    %456 = vmatpush1.xpose.msra.mxu0 0.0
    %457 = vmatprep.subr.mxu0 0.0
    %458 = vmatpush1.xpose.msra.mxu0 0.0
    %459 = vmatprep.subr.mxu0 0.0
    %460 = vmatpush1.xpose.msra.mxu0 0.0
    %461 = vmatprep.subr.mxu0 0.0
    %462 = vmatpush1.xpose.msra.mxu0 0.0
    %463 = vmatprep.subr.mxu0 0.0
    %464 = vmatpush1.xpose.msra.mxu0 0.0
    %465 = vmatprep.subr.mxu0 0.0
    %466 = vmatpush1.xpose.msra.mxu0 0.0
    %467 = vmatprep.subr.mxu0 0.0
    %468 = vmatpush1.xpose.msra.mxu0 0.0
    %469 = vmatprep.subr.mxu0 0.0
    %470 = vmatpush1.xpose.msra.mxu0 0.0
    %471 = vmatprep.subr.mxu0 0.0
    %472 = vmatpush1.xpose.msra.mxu0 0.0
    %473 = vmatprep.subr.mxu0 0.0
    %474 = vmatpush1.xpose.msra.mxu0 0.0
    %475 = vmatprep.subr.mxu0 0.0
    %476 = vmatpush1.xpose.msra.mxu0 0.0
    %477 = vmatprep.subr.mxu0 0.0
    %478 = vmatpush1.xpose.msra.mxu0 0.0
    %479 = vmatprep.subr.mxu0 0.0
    %480 = vmatpush1.xpose.msra.mxu0 0.0
    %481 = vmatprep.subr.mxu0 0.0
    %482 = vmatpush1.xpose.msra.mxu0 0.0
    %483 = vmatprep.mubr.f32.mxu0 0.0
    %484 = vmatmul.mubr.f32.gmra.mrb[0].mxu0 %v414
    %v485 = vpop.f32.mrb[0].mxu0
    %v486 = vadd.f32 %v59, %v485
    %v487 = vpop.f32.mrb[0].mxu0
    %488 = vdwg.mxu0
    %v489 = vsel %vm336, %v410, -inf
    %490 = vmax.xlane.f32.xlu0 %v489
    %v491 = vpop.xlane.xlu0 %490
    %v492 = vsel %vm336, %v486, -inf
    %493 = vmax.xlane.f32.xlu0 %v492
    %v494 = vpop.xlane.xlu0 %493
    %v495 = vsub.f32 %v410, %v491
    %v496 = vsub.f32 %v486, %v494
    %v497 = vmul.f32 %v495, 1.442695
    %v498 = vpow.pop %v497
    %v499 = vmul.f32 %v496, 1.442695
    %v500 = vpow.pop %v499
    %v501 = vsel %vm336, %v498, 0.0
    %502 = vadd.xlane.f32.xlu0 %v501
    %v503 = vpop.xlane.xlu0 %502
    %v504 = vsel %vm336, %v500, 0.0
    %505 = vadd.xlane.f32.xlu0 %v504
    %v506 = vpop.xlane.xlu0 %505
    %v507 = vrcp.pop %v503
    %v508 = vmul.f32 %v498, %v507
    %v509 = vrcp.pop %v506
    %v510 = vmul.f32 %v500, %v509
    %v512 = vsel %vm336, %v508, 0
    %514 = vmatprep.subr.mxu0 0.0
    %515 = vmatpush1.msra.mxu0 %v328
    %516 = vmatprep.subr.mxu0 0.0
    %517 = vmatpush1.msra.mxu0 0.0
    %518 = vmatprep.subr.mxu0 0.0
    %519 = vmatpush1.msra.mxu0 0.0
    %520 = vmatprep.subr.mxu0 0.0
    %521 = vmatpush1.msra.mxu0 0.0
    %522 = vmatprep.subr.mxu0 0.0
    %523 = vmatpush1.msra.mxu0 0.0
    %524 = vmatprep.subr.mxu0 0.0
    %525 = vmatpush1.msra.mxu0 0.0
    %526 = vmatprep.subr.mxu0 0.0
    %527 = vmatpush1.msra.mxu0 0.0
    %528 = vmatprep.subr.mxu0 0.0
    %529 = vmatpush1.msra.mxu0 0.0
    %530 = vmatprep.subr.mxu0 0.0
    %531 = vmatpush1.msra.mxu0 0.0
    %532 = vmatprep.subr.mxu0 0.0
    %533 = vmatpush1.msra.mxu0 0.0
    %534 = vmatprep.subr.mxu0 0.0
    %535 = vmatpush1.msra.mxu0 0.0
    %536 = vmatprep.subr.mxu0 0.0
    %537 = vmatpush1.msra.mxu0 0.0
    %538 = vmatprep.subr.mxu0 0.0
    %539 = vmatpush1.msra.mxu0 0.0
    %540 = vmatprep.subr.mxu0 0.0
    %541 = vmatpush1.msra.mxu0 0.0
    %542 = vmatprep.subr.mxu0 0.0
    %543 = vmatpush1.msra.mxu0 0.0
    %544 = vmatprep.subr.mxu0 0.0
    %545 = vmatpush1.msra.mxu0 0.0
    %546 = vmatprep.subr.mxu0 0.0
    %547 = vmatpush1.msra.mxu0 0.0
    %548 = vmatprep.subr.mxu0 0.0
    %549 = vmatpush1.msra.mxu0 0.0
    %550 = vmatprep.subr.mxu0 0.0
    %551 = vmatpush1.msra.mxu0 0.0
    %552 = vmatprep.subr.mxu0 0.0
    %553 = vmatpush1.msra.mxu0 0.0
    %554 = vmatprep.subr.mxu0 0.0
    %555 = vmatpush1.msra.mxu0 0.0
    %556 = vmatprep.subr.mxu0 0.0
    %557 = vmatpush1.msra.mxu0 0.0
    %558 = vmatprep.subr.mxu0 0.0
    %559 = vmatpush1.msra.mxu0 0.0
    %560 = vmatprep.subr.mxu0 0.0
    %561 = vmatpush1.msra.mxu0 0.0
    %562 = vmatprep.subr.mxu0 0.0
    %563 = vmatpush1.msra.mxu0 0.0
    %564 = vmatprep.subr.mxu0 0.0
    %565 = vmatpush1.msra.mxu0 0.0
    %566 = vmatprep.subr.mxu0 0.0
    %567 = vmatpush1.msra.mxu0 0.0
    %568 = vmatprep.subr.mxu0 0.0
    %569 = vmatpush1.msra.mxu0 0.0
    %570 = vmatprep.subr.mxu0 0.0
    %571 = vmatpush1.msra.mxu0 0.0
    %572 = vmatprep.subr.mxu0 0.0
    %573 = vmatpush1.msra.mxu0 0.0
    %574 = vmatprep.subr.mxu0 0.0
    %575 = vmatpush1.msra.mxu0 0.0
    %576 = vmatprep.subr.mxu0 0.0
    %577 = vmatpush1.msra.mxu0 0.0
    %578 = vmatprep.mubr.f32.mxu0 0.0
    %579 = vmatmul.mubr.f32.gmra.mrb[0].mxu0 %v512
    %v580 = vpop.f32.mrb[0].mxu0
    %v581 = vadd.f32 0.0, %v580
    %v582 = vpop.f32.mrb[0].mxu0
    %583 = vdwg.mxu0
    %v585 = vsel %vm336, %v510, 0
    %587 = vmatprep.subr.mxu0 0.0
    %588 = vmatpush1.msra.mxu0 %v333
    %589 = vmatprep.subr.mxu0 0.0
    %590 = vmatpush1.msra.mxu0 0.0
    %591 = vmatprep.subr.mxu0 0.0
    %592 = vmatpush1.msra.mxu0 0.0
    %593 = vmatprep.subr.mxu0 0.0
    %594 = vmatpush1.msra.mxu0 0.0
    %595 = vmatprep.subr.mxu0 0.0
    %596 = vmatpush1.msra.mxu0 0.0
    %597 = vmatprep.subr.mxu0 0.0
    %598 = vmatpush1.msra.mxu0 0.0
    %599 = vmatprep.subr.mxu0 0.0
    %600 = vmatpush1.msra.mxu0 0.0
    %601 = vmatprep.subr.mxu0 0.0
    %602 = vmatpush1.msra.mxu0 0.0
    %603 = vmatprep.subr.mxu0 0.0
    %604 = vmatpush1.msra.mxu0 0.0
    %605 = vmatprep.subr.mxu0 0.0
    %606 = vmatpush1.msra.mxu0 0.0
    %607 = vmatprep.subr.mxu0 0.0
    %608 = vmatpush1.msra.mxu0 0.0
    %609 = vmatprep.subr.mxu0 0.0
    %610 = vmatpush1.msra.mxu0 0.0
    %611 = vmatprep.subr.mxu0 0.0
    %612 = vmatpush1.msra.mxu0 0.0
    %613 = vmatprep.subr.mxu0 0.0
    %614 = vmatpush1.msra.mxu0 0.0
    %615 = vmatprep.subr.mxu0 0.0
    %616 = vmatpush1.msra.mxu0 0.0
    %617 = vmatprep.subr.mxu0 0.0
    %618 = vmatpush1.msra.mxu0 0.0
    %619 = vmatprep.subr.mxu0 0.0
    %620 = vmatpush1.msra.mxu0 0.0
    %621 = vmatprep.subr.mxu0 0.0
    %622 = vmatpush1.msra.mxu0 0.0
    %623 = vmatprep.subr.mxu0 0.0
    %624 = vmatpush1.msra.mxu0 0.0
    %625 = vmatprep.subr.mxu0 0.0
    %626 = vmatpush1.msra.mxu0 0.0
    %627 = vmatprep.subr.mxu0 0.0
    %628 = vmatpush1.msra.mxu0 0.0
    %629 = vmatprep.subr.mxu0 0.0
    %630 = vmatpush1.msra.mxu0 0.0
    %631 = vmatprep.subr.mxu0 0.0
    %632 = vmatpush1.msra.mxu0 0.0
    %633 = vmatprep.subr.mxu0 0.0
    %634 = vmatpush1.msra.mxu0 0.0
    %635 = vmatprep.subr.mxu0 0.0
    %636 = vmatpush1.msra.mxu0 0.0
    %637 = vmatprep.subr.mxu0 0.0
    %638 = vmatpush1.msra.mxu0 0.0
    %639 = vmatprep.subr.mxu0 0.0
    %640 = vmatpush1.msra.mxu0 0.0
    %641 = vmatprep.subr.mxu0 0.0
    %642 = vmatpush1.msra.mxu0 0.0
    %643 = vmatprep.subr.mxu0 0.0
    %644 = vmatpush1.msra.mxu0 0.0
    %645 = vmatprep.subr.mxu0 0.0
    %646 = vmatpush1.msra.mxu0 0.0
    %647 = vmatprep.subr.mxu0 0.0
    %648 = vmatpush1.msra.mxu0 0.0
    %649 = vmatprep.subr.mxu0 0.0
    %650 = vmatpush1.msra.mxu0 0.0
    %651 = vmatprep.mubr.f32.mxu0 0.0
    %652 = vmatmul.mubr.f32.gmra.mrb[0].mxu0 %v585
    %v653 = vpop.f32.mrb[0].mxu0
    %v654 = vadd.f32 0.0, %v653
    %v655 = vpop.f32.mrb[0].mxu0
    %656 = vdwg.mxu0
    %v657 = vld [vmem:[#allocation2] sm:$0xff]
    %v658 = vld [vmem:[#allocation2 + $0x8] sm:$0xff]
    %v659 = vld [vmem:[%s10] sm:$0xff]
    %v661 = vsel %vm336, %v581, 0
    %v664 = vsel %vm336, %v654, 0
    %666 = vmatprep.subr.mxu0 0.0
    %667 = vmatpush1.msra.mxu0 %v659
    %668 = vmatprep.subr.mxu0 0.0
    %669 = vmatpush1.msra.mxu0 0.0
    %670 = vmatprep.subr.mxu0 0.0
    %671 = vmatpush1.msra.mxu0 0.0
    %672 = vmatprep.subr.mxu0 0.0
    %673 = vmatpush1.msra.mxu0 0.0
    %674 = vmatprep.subr.mxu0 0.0
    %675 = vmatpush1.msra.mxu0 0.0
    %676 = vmatprep.subr.mxu0 0.0
    %677 = vmatpush1.msra.mxu0 0.0
    %678 = vmatprep.subr.mxu0 0.0
    %679 = vmatpush1.msra.mxu0 0.0
    %680 = vmatprep.subr.mxu0 0.0
    %681 = vmatpush1.msra.mxu0 0.0
    %682 = vmatprep.subr.mxu0 0.0
    %683 = vmatpush1.msra.mxu0 0.0
    %684 = vmatprep.subr.mxu0 0.0
    %685 = vmatpush1.msra.mxu0 0.0
    %686 = vmatprep.subr.mxu0 0.0
    %687 = vmatpush1.msra.mxu0 0.0
    %688 = vmatprep.subr.mxu0 0.0
    %689 = vmatpush1.msra.mxu0 0.0
    %690 = vmatprep.subr.mxu0 0.0
    %691 = vmatpush1.msra.mxu0 0.0
    %692 = vmatprep.subr.mxu0 0.0
    %693 = vmatpush1.msra.mxu0 0.0
    %694 = vmatprep.subr.mxu0 0.0
    %695 = vmatpush1.msra.mxu0 0.0
    %696 = vmatprep.subr.mxu0 0.0
    %697 = vmatpush1.msra.mxu0 0.0
    %698 = vmatprep.subr.mxu0 0.0
    %699 = vmatpush1.msra.mxu0 0.0
    %700 = vmatprep.subr.mxu0 0.0
    %701 = vmatpush1.msra.mxu0 0.0
    %702 = vmatprep.subr.mxu0 0.0
    %703 = vmatpush1.msra.mxu0 0.0
    %704 = vmatprep.subr.mxu0 0.0
    %705 = vmatpush1.msra.mxu0 0.0
    %706 = vmatprep.subr.mxu0 0.0
    %707 = vmatpush1.msra.mxu0 0.0
    %708 = vmatprep.subr.mxu0 0.0
    %709 = vmatpush1.msra.mxu0 0.0
    %710 = vmatprep.subr.mxu0 0.0
    %711 = vmatpush1.msra.mxu0 0.0
    %712 = vmatprep.subr.mxu0 0.0
    %713 = vmatpush1.msra.mxu0 0.0
    %714 = vmatprep.subr.mxu0 0.0
    %715 = vmatpush1.msra.mxu0 0.0
    %716 = vmatprep.subr.mxu0 0.0
    %717 = vmatpush1.msra.mxu0 0.0
    %718 = vmatprep.subr.mxu0 0.0
    %719 = vmatpush1.msra.mxu0 0.0
    %720 = vmatprep.subr.mxu0 0.0
    %721 = vmatpush1.msra.mxu0 0.0
    %722 = vmatprep.subr.mxu0 0.0
    %723 = vmatpush1.msra.mxu0 0.0
    %724 = vmatprep.subr.mxu0 0.0
    %725 = vmatpush1.msra.mxu0 0.0
    %726 = vmatprep.subr.mxu0 0.0
    %727 = vmatpush1.msra.mxu0 0.0
    %728 = vmatprep.subr.mxu0 0.0
    %729 = vmatpush1.msra.mxu0 0.0
    %730 = vmatprep.mubr.f32.mxu0 0.0
    %731 = vmatmul.mubr.f32.gmra.mrb[0].mxu0 %v661
    %v732 = vpop.f32.mrb[0].mxu0
    %v733 = vadd.f32 0.0, %v732
    %v734 = vpop.f32.mrb[0].mxu0
    %735 = vmatprep.mubr.f32.mxu0 0.0
    %736 = vmatmul.mubr.f32.gmra.mrb[0].mxu0 %v664
    %v737 = vpop.f32.mrb[0].mxu0
    %v738 = vadd.f32 0.0, %v737
    %v739 = vpop.f32.mrb[0].mxu0
    %740 = vdwg.mxu0
    %v741 = vadd.f32 %v657, %v733
    %v742 = vadd.f32 %v658, %v738
    %743 = vst.msk [vmem:[#allocation2] sm:$0xff] %vm56, %v741
    %744 = vst.msk [vmem:[#allocation2 + $0x8] sm:$0xff] %vm56, %v742
    %s745 = scalar_lea.vmem %s4, 32
    %v746 = vld [vmem:[%s745] sm:$0xff]
    %v747 = vld [vmem:[%s745 + $0x8] sm:$0xff]
    %v748 = vld [vmem:[%s745 + $0x10] sm:$0xff]
    %v749 = vld [vmem:[%s745 + $0x18] sm:$0xff]
    %s750 = scalar_lea.vmem %s7, 1
    %v751 = vld [vmem:[%s750] sm:$0x1]
    %v753 = vlaneseq
    %v754 = vshrl.u32 %v753, 7
    %v755 = vsub.s32 0, %v754
    %v756 = vrot.slane %v751, %v755
    %758 = vmatprep.subr.mxu0 0.0
    %759 = vmatpush1.msra.mxu0 %v746
    %760 = vmatprep.subr.mxu0 0.0
    %761 = vmatpush1.msra.mxu0 %v747
    %762 = vmatprep.subr.mxu0 0.0
    %763 = vmatpush1.msra.mxu0 %v748
    %764 = vmatprep.subr.mxu0 0.0
    %765 = vmatpush1.msra.mxu0 %v749
    %766 = vmatprep.subr.mxu0 0.0
    %767 = vmatpush1.msra.mxu0 0.0
    %768 = vmatprep.subr.mxu0 0.0
    %769 = vmatpush1.msra.mxu0 0.0
    %770 = vmatprep.subr.mxu0 0.0
    %771 = vmatpush1.msra.mxu0 0.0
    %772 = vmatprep.subr.mxu0 0.0
    %773 = vmatpush1.msra.mxu0 0.0
    %774 = vmatprep.subr.mxu0 0.0
    %775 = vmatpush1.msra.mxu0 0.0
    %776 = vmatprep.subr.mxu0 0.0
    %777 = vmatpush1.msra.mxu0 0.0
    %778 = vmatprep.subr.mxu0 0.0
    %779 = vmatpush1.msra.mxu0 0.0
    %780 = vmatprep.subr.mxu0 0.0
    %781 = vmatpush1.msra.mxu0 0.0
    %782 = vmatprep.subr.mxu0 0.0
    %783 = vmatpush1.msra.mxu0 0.0
    %784 = vmatprep.subr.mxu0 0.0
    %785 = vmatpush1.msra.mxu0 0.0
    %786 = vmatprep.subr.mxu0 0.0
    %787 = vmatpush1.msra.mxu0 0.0
    %788 = vmatprep.subr.mxu0 0.0
    %789 = vmatpush1.msra.mxu0 0.0
    %790 = vmatprep.subr.mxu0 0.0
    %791 = vmatpush1.msra.mxu0 0.0
    %792 = vmatprep.subr.mxu0 0.0
    %793 = vmatpush1.msra.mxu0 0.0
    %794 = vmatprep.subr.mxu0 0.0
    %795 = vmatpush1.msra.mxu0 0.0
    %796 = vmatprep.subr.mxu0 0.0
    %797 = vmatpush1.msra.mxu0 0.0
    %798 = vmatprep.subr.mxu0 0.0
    %799 = vmatpush1.msra.mxu0 0.0
    %800 = vmatprep.subr.mxu0 0.0
    %801 = vmatpush1.msra.mxu0 0.0
    %802 = vmatprep.subr.mxu0 0.0
    %803 = vmatpush1.msra.mxu0 0.0
    %804 = vmatprep.subr.mxu0 0.0
    %805 = vmatpush1.msra.mxu0 0.0
    %806 = vmatprep.subr.mxu0 0.0
    %807 = vmatpush1.msra.mxu0 0.0
    %808 = vmatprep.subr.mxu0 0.0
    %809 = vmatpush1.msra.mxu0 0.0
    %810 = vmatprep.subr.mxu0 0.0
    %811 = vmatpush1.msra.mxu0 0.0
    %812 = vmatprep.subr.mxu0 0.0
    %813 = vmatpush1.msra.mxu0 0.0
    %814 = vmatprep.subr.mxu0 0.0
    %815 = vmatpush1.msra.mxu0 0.0
    %816 = vmatprep.subr.mxu0 0.0
    %817 = vmatpush1.msra.mxu0 0.0
    %818 = vmatprep.subr.mxu0 0.0
    %819 = vmatpush1.msra.mxu0 0.0
    %820 = vmatprep.subr.mxu0 0.0
    %821 = vmatpush1.msra.mxu0 0.0
    %822 = vmatprep.mubr.f32.mxu0 0.0
    %823 = vmatmul.mubr.f32.gmra.mrb[0].mxu0 %v72
    %v824 = vpop.f32.mrb[0].mxu0
    %v825 = vadd.f32 %v756, %v824
    %v826 = vpop.f32.mrb[0].mxu0
    %827 = vmatprep.mubr.f32.mxu0 0.0
    %828 = vmatmul.mubr.f32.gmra.mrb[0].mxu0 %v75
    %v829 = vpop.f32.mrb[0].mxu0
    %v830 = vadd.f32 %v756, %v829
    %v831 = vpop.f32.mrb[0].mxu0
    %832 = vdwg.mxu0
    %s833 = scalar_lea.vmem %s5, 32
    %v834 = vld [vmem:[%s833] sm:$0xff]
    %v835 = vld [vmem:[%s833 + $0x8] sm:$0xff]
    %v836 = vld [vmem:[%s833 + $0x10] sm:$0xff]
    %v837 = vld [vmem:[%s833 + $0x18] sm:$0xff]
    %s838 = scalar_lea.vmem %s8, 1
    %v839 = vld [vmem:[%s838] sm:$0x1]
    %v841 = vlaneseq
    %v842 = vshrl.u32 %v841, 7
    %v843 = vsub.s32 0, %v842
    %v844 = vrot.slane %v839, %v843
    %846 = vmatprep.subr.mxu0 0.0
    %847 = vmatpush1.msra.mxu0 %v834
    %848 = vmatprep.subr.mxu0 0.0
    %849 = vmatpush1.msra.mxu0 %v835
    %850 = vmatprep.subr.mxu0 0.0
    %851 = vmatpush1.msra.mxu0 %v836
    %852 = vmatprep.subr.mxu0 0.0
    %853 = vmatpush1.msra.mxu0 %v837
    %854 = vmatprep.subr.mxu0 0.0
    %855 = vmatpush1.msra.mxu0 0.0
    %856 = vmatprep.subr.mxu0 0.0
    %857 = vmatpush1.msra.mxu0 0.0
    %858 = vmatprep.subr.mxu0 0.0
    %859 = vmatpush1.msra.mxu0 0.0
    %860 = vmatprep.subr.mxu0 0.0
    %861 = vmatpush1.msra.mxu0 0.0
    %862 = vmatprep.subr.mxu0 0.0
    %863 = vmatpush1.msra.mxu0 0.0
    %864 = vmatprep.subr.mxu0 0.0
    %865 = vmatpush1.msra.mxu0 0.0
    %866 = vmatprep.subr.mxu0 0.0
    %867 = vmatpush1.msra.mxu0 0.0
    %868 = vmatprep.subr.mxu0 0.0
    %869 = vmatpush1.msra.mxu0 0.0
    %870 = vmatprep.subr.mxu0 0.0
    %871 = vmatpush1.msra.mxu0 0.0
    %872 = vmatprep.subr.mxu0 0.0
    %873 = vmatpush1.msra.mxu0 0.0
    %874 = vmatprep.subr.mxu0 0.0
    %875 = vmatpush1.msra.mxu0 0.0
    %876 = vmatprep.subr.mxu0 0.0
    %877 = vmatpush1.msra.mxu0 0.0
    %878 = vmatprep.subr.mxu0 0.0
    %879 = vmatpush1.msra.mxu0 0.0
    %880 = vmatprep.subr.mxu0 0.0
    %881 = vmatpush1.msra.mxu0 0.0
    %882 = vmatprep.subr.mxu0 0.0
    %883 = vmatpush1.msra.mxu0 0.0
    %884 = vmatprep.subr.mxu0 0.0
    %885 = vmatpush1.msra.mxu0 0.0
    %886 = vmatprep.subr.mxu0 0.0
    %887 = vmatpush1.msra.mxu0 0.0
    %888 = vmatprep.subr.mxu0 0.0
    %889 = vmatpush1.msra.mxu0 0.0
    %890 = vmatprep.subr.mxu0 0.0
    %891 = vmatpush1.msra.mxu0 0.0
    %892 = vmatprep.subr.mxu0 0.0
    %893 = vmatpush1.msra.mxu0 0.0
    %894 = vmatprep.subr.mxu0 0.0
    %895 = vmatpush1.msra.mxu0 0.0
    %896 = vmatprep.subr.mxu0 0.0
    %897 = vmatpush1.msra.mxu0 0.0
    %898 = vmatprep.subr.mxu0 0.0
    %899 = vmatpush1.msra.mxu0 0.0
    %900 = vmatprep.subr.mxu0 0.0
    %901 = vmatpush1.msra.mxu0 0.0
    %902 = vmatprep.subr.mxu0 0.0
    %903 = vmatpush1.msra.mxu0 0.0
    %904 = vmatprep.subr.mxu0 0.0
    %905 = vmatpush1.msra.mxu0 0.0
    %906 = vmatprep.subr.mxu0 0.0
    %907 = vmatpush1.msra.mxu0 0.0
    %908 = vmatprep.subr.mxu0 0.0
    %909 = vmatpush1.msra.mxu0 0.0
    %910 = vmatprep.mubr.f32.mxu0 0.0
    %911 = vmatmul.mubr.f32.gmra.mrb[0].mxu0 %v164
    %v912 = vpop.f32.mrb[0].mxu0
    %v913 = vadd.f32 %v844, %v912
    %v914 = vpop.f32.mrb[0].mxu0
    %915 = vmatprep.mubr.f32.mxu0 0.0
    %916 = vmatmul.mubr.f32.gmra.mrb[0].mxu0 %v167
    %v917 = vpop.f32.mrb[0].mxu0
    %v918 = vadd.f32 %v844, %v917
    %v919 = vpop.f32.mrb[0].mxu0
    %920 = vdwg.mxu0
    %s921 = scalar_lea.vmem %s6, 32
    %v922 = vld [vmem:[%s921] sm:$0xff]
    %v923 = vld [vmem:[%s921 + $0x8] sm:$0xff]
    %v924 = vld [vmem:[%s921 + $0x10] sm:$0xff]
    %v925 = vld [vmem:[%s921 + $0x18] sm:$0xff]
    %s926 = scalar_lea.vmem %s9, 1
    %v927 = vld [vmem:[%s926] sm:$0x1]
    %v929 = vlaneseq
    %v930 = vshrl.u32 %v929, 7
    %v931 = vsub.s32 0, %v930
    %v932 = vrot.slane %v927, %v931
    %934 = vmatprep.subr.mxu0 0.0
    %935 = vmatpush1.msra.mxu0 %v922
    %936 = vmatprep.subr.mxu0 0.0
    %937 = vmatpush1.msra.mxu0 %v923
    %938 = vmatprep.subr.mxu0 0.0
    %939 = vmatpush1.msra.mxu0 %v924
    %940 = vmatprep.subr.mxu0 0.0
    %941 = vmatpush1.msra.mxu0 %v925
    %942 = vmatprep.subr.mxu0 0.0
    %943 = vmatpush1.msra.mxu0 0.0
    %944 = vmatprep.subr.mxu0 0.0
    %945 = vmatpush1.msra.mxu0 0.0
    %946 = vmatprep.subr.mxu0 0.0
    %947 = vmatpush1.msra.mxu0 0.0
    %948 = vmatprep.subr.mxu0 0.0
    %949 = vmatpush1.msra.mxu0 0.0
    %950 = vmatprep.subr.mxu0 0.0
    %951 = vmatpush1.msra.mxu0 0.0
    %952 = vmatprep.subr.mxu0 0.0
    %953 = vmatpush1.msra.mxu0 0.0
    %954 = vmatprep.subr.mxu0 0.0
    %955 = vmatpush1.msra.mxu0 0.0
    %956 = vmatprep.subr.mxu0 0.0
    %957 = vmatpush1.msra.mxu0 0.0
    %958 = vmatprep.subr.mxu0 0.0
    %959 = vmatpush1.msra.mxu0 0.0
    %960 = vmatprep.subr.mxu0 0.0
    %961 = vmatpush1.msra.mxu0 0.0
    %962 = vmatprep.subr.mxu0 0.0
    %963 = vmatpush1.msra.mxu0 0.0
    %964 = vmatprep.subr.mxu0 0.0
    %965 = vmatpush1.msra.mxu0 0.0
    %966 = vmatprep.subr.mxu0 0.0
    %967 = vmatpush1.msra.mxu0 0.0
    %968 = vmatprep.subr.mxu0 0.0
    %969 = vmatpush1.msra.mxu0 0.0
    %970 = vmatprep.subr.mxu0 0.0
    %971 = vmatpush1.msra.mxu0 0.0
    %972 = vmatprep.subr.mxu0 0.0
    %973 = vmatpush1.msra.mxu0 0.0
    %974 = vmatprep.subr.mxu0 0.0
    %975 = vmatpush1.msra.mxu0 0.0
    %976 = vmatprep.subr.mxu0 0.0
    %977 = vmatpush1.msra.mxu0 0.0
    %978 = vmatprep.subr.mxu0 0.0
    %979 = vmatpush1.msra.mxu0 0.0
    %980 = vmatprep.subr.mxu0 0.0
    %981 = vmatpush1.msra.mxu0 0.0
    %982 = vmatprep.subr.mxu0 0.0
    %983 = vmatpush1.msra.mxu0 0.0
    %984 = vmatprep.subr.mxu0 0.0
    %985 = vmatpush1.msra.mxu0 0.0
    %986 = vmatprep.subr.mxu0 0.0
    %987 = vmatpush1.msra.mxu0 0.0
    %988 = vmatprep.subr.mxu0 0.0
    %989 = vmatpush1.msra.mxu0 0.0
    %990 = vmatprep.subr.mxu0 0.0
    %991 = vmatpush1.msra.mxu0 0.0
    %992 = vmatprep.subr.mxu0 0.0
    %993 = vmatpush1.msra.mxu0 0.0
    %994 = vmatprep.subr.mxu0 0.0
    %995 = vmatpush1.msra.mxu0 0.0
    %996 = vmatprep.subr.mxu0 0.0
    %997 = vmatpush1.msra.mxu0 0.0
    %998 = vmatprep.mubr.f32.mxu0 0.0
    %999 = vmatmul.mubr.f32.gmra.mrb[0].mxu0 %v256
    %v1000 = vpop.f32.mrb[0].mxu0
    %v1001 = vadd.f32 %v932, %v1000
    %v1002 = vpop.f32.mrb[0].mxu0
    %1003 = vmatprep.mubr.f32.mxu0 0.0
    %1004 = vmatmul.mubr.f32.gmra.mrb[0].mxu0 %v259
    %v1005 = vpop.f32.mrb[0].mxu0
    %v1006 = vadd.f32 %v932, %v1005
    %v1007 = vpop.f32.mrb[0].mxu0
    %1008 = vdwg.mxu0
    %v1010 = vsel %vm336, %v825, 0
    %v1013 = vsel %vm336, %v913, 0
    %1015 = vmatprep.subr.mxu0 0.0
    %1016 = vmatpush1.xpose.msra.mxu0 %v1013
    %1017 = vmatprep.subr.mxu0 0.0
    %1018 = vmatpush1.xpose.msra.mxu0 0.0
    %1019 = vmatprep.subr.mxu0 0.0
    %1020 = vmatpush1.xpose.msra.mxu0 0.0
    %1021 = vmatprep.subr.mxu0 0.0
    %1022 = vmatpush1.xpose.msra.mxu0 0.0
    %1023 = vmatprep.subr.mxu0 0.0
    %1024 = vmatpush1.xpose.msra.mxu0 0.0
    %1025 = vmatprep.subr.mxu0 0.0
    %1026 = vmatpush1.xpose.msra.mxu0 0.0
    %1027 = vmatprep.subr.mxu0 0.0
    %1028 = vmatpush1.xpose.msra.mxu0 0.0
    %1029 = vmatprep.subr.mxu0 0.0
    %1030 = vmatpush1.xpose.msra.mxu0 0.0
    %1031 = vmatprep.subr.mxu0 0.0
    %1032 = vmatpush1.xpose.msra.mxu0 0.0
    %1033 = vmatprep.subr.mxu0 0.0
    %1034 = vmatpush1.xpose.msra.mxu0 0.0
    %1035 = vmatprep.subr.mxu0 0.0
    %1036 = vmatpush1.xpose.msra.mxu0 0.0
    %1037 = vmatprep.subr.mxu0 0.0
    %1038 = vmatpush1.xpose.msra.mxu0 0.0
    %1039 = vmatprep.subr.mxu0 0.0
    %1040 = vmatpush1.xpose.msra.mxu0 0.0
    %1041 = vmatprep.subr.mxu0 0.0
    %1042 = vmatpush1.xpose.msra.mxu0 0.0
    %1043 = vmatprep.subr.mxu0 0.0
    %1044 = vmatpush1.xpose.msra.mxu0 0.0
    %1045 = vmatprep.subr.mxu0 0.0
    %1046 = vmatpush1.xpose.msra.mxu0 0.0
    %1047 = vmatprep.subr.mxu0 0.0
    %1048 = vmatpush1.xpose.msra.mxu0 0.0
    %1049 = vmatprep.subr.mxu0 0.0
    %1050 = vmatpush1.xpose.msra.mxu0 0.0
    %1051 = vmatprep.subr.mxu0 0.0
    %1052 = vmatpush1.xpose.msra.mxu0 0.0
    %1053 = vmatprep.subr.mxu0 0.0
    %1054 = vmatpush1.xpose.msra.mxu0 0.0
    %1055 = vmatprep.subr.mxu0 0.0
    %1056 = vmatpush1.xpose.msra.mxu0 0.0
    %1057 = vmatprep.subr.mxu0 0.0
    %1058 = vmatpush1.xpose.msra.mxu0 0.0
    %1059 = vmatprep.subr.mxu0 0.0
    %1060 = vmatpush1.xpose.msra.mxu0 0.0
    %1061 = vmatprep.subr.mxu0 0.0
    %1062 = vmatpush1.xpose.msra.mxu0 0.0
    %1063 = vmatprep.subr.mxu0 0.0
    %1064 = vmatpush1.xpose.msra.mxu0 0.0
    %1065 = vmatprep.subr.mxu0 0.0
    %1066 = vmatpush1.xpose.msra.mxu0 0.0
    %1067 = vmatprep.subr.mxu0 0.0
    %1068 = vmatpush1.xpose.msra.mxu0 0.0
    %1069 = vmatprep.subr.mxu0 0.0
    %1070 = vmatpush1.xpose.msra.mxu0 0.0
    %1071 = vmatprep.subr.mxu0 0.0
    %1072 = vmatpush1.xpose.msra.mxu0 0.0
    %1073 = vmatprep.subr.mxu0 0.0
    %1074 = vmatpush1.xpose.msra.mxu0 0.0
    %1075 = vmatprep.subr.mxu0 0.0
    %1076 = vmatpush1.xpose.msra.mxu0 0.0
    %1077 = vmatprep.subr.mxu0 0.0
    %1078 = vmatpush1.xpose.msra.mxu0 0.0
    %1079 = vmatprep.mubr.f32.mxu0 0.0
    %1080 = vmatmul.mubr.f32.gmra.mrb[0].mxu0 %v1010
    %v1081 = vpop.f32.mrb[0].mxu0
    %v1082 = vadd.f32 %v59, %v1081
    %v1083 = vpop.f32.mrb[0].mxu0
    %1084 = vdwg.mxu0
    %v1086 = vsel %vm336, %v830, 0
    %v1089 = vsel %vm336, %v918, 0
    %1091 = vmatprep.subr.mxu0 0.0
    %1092 = vmatpush1.xpose.msra.mxu0 %v1089
    %1093 = vmatprep.subr.mxu0 0.0
    %1094 = vmatpush1.xpose.msra.mxu0 0.0
    %1095 = vmatprep.subr.mxu0 0.0
    %1096 = vmatpush1.xpose.msra.mxu0 0.0
    %1097 = vmatprep.subr.mxu0 0.0
    %1098 = vmatpush1.xpose.msra.mxu0 0.0
    %1099 = vmatprep.subr.mxu0 0.0
    %1100 = vmatpush1.xpose.msra.mxu0 0.0
    %1101 = vmatprep.subr.mxu0 0.0
    %1102 = vmatpush1.xpose.msra.mxu0 0.0
    %1103 = vmatprep.subr.mxu0 0.0
    %1104 = vmatpush1.xpose.msra.mxu0 0.0
    %1105 = vmatprep.subr.mxu0 0.0
    %1106 = vmatpush1.xpose.msra.mxu0 0.0
    %1107 = vmatprep.subr.mxu0 0.0
    %1108 = vmatpush1.xpose.msra.mxu0 0.0
    %1109 = vmatprep.subr.mxu0 0.0
    %1110 = vmatpush1.xpose.msra.mxu0 0.0
    %1111 = vmatprep.subr.mxu0 0.0
    %1112 = vmatpush1.xpose.msra.mxu0 0.0
    %1113 = vmatprep.subr.mxu0 0.0
    %1114 = vmatpush1.xpose.msra.mxu0 0.0
    %1115 = vmatprep.subr.mxu0 0.0
    %1116 = vmatpush1.xpose.msra.mxu0 0.0
    %1117 = vmatprep.subr.mxu0 0.0
    %1118 = vmatpush1.xpose.msra.mxu0 0.0
    %1119 = vmatprep.subr.mxu0 0.0
    %1120 = vmatpush1.xpose.msra.mxu0 0.0
    %1121 = vmatprep.subr.mxu0 0.0
    %1122 = vmatpush1.xpose.msra.mxu0 0.0
    %1123 = vmatprep.subr.mxu0 0.0
    %1124 = vmatpush1.xpose.msra.mxu0 0.0
    %1125 = vmatprep.subr.mxu0 0.0
    %1126 = vmatpush1.xpose.msra.mxu0 0.0
    %1127 = vmatprep.subr.mxu0 0.0
    %1128 = vmatpush1.xpose.msra.mxu0 0.0
    %1129 = vmatprep.subr.mxu0 0.0
    %1130 = vmatpush1.xpose.msra.mxu0 0.0
    %1131 = vmatprep.subr.mxu0 0.0
    %1132 = vmatpush1.xpose.msra.mxu0 0.0
    %1133 = vmatprep.subr.mxu0 0.0
    %1134 = vmatpush1.xpose.msra.mxu0 0.0
    %1135 = vmatprep.subr.mxu0 0.0
    %1136 = vmatpush1.xpose.msra.mxu0 0.0
    %1137 = vmatprep.subr.mxu0 0.0
    %1138 = vmatpush1.xpose.msra.mxu0 0.0
    %1139 = vmatprep.subr.mxu0 0.0
    %1140 = vmatpush1.xpose.msra.mxu0 0.0
    %1141 = vmatprep.subr.mxu0 0.0
    %1142 = vmatpush1.xpose.msra.mxu0 0.0
    %1143 = vmatprep.subr.mxu0 0.0
    %1144 = vmatpush1.xpose.msra.mxu0 0.0
    %1145 = vmatprep.subr.mxu0 0.0
    %1146 = vmatpush1.xpose.msra.mxu0 0.0
    %1147 = vmatprep.subr.mxu0 0.0
    %1148 = vmatpush1.xpose.msra.mxu0 0.0
    %1149 = vmatprep.subr.mxu0 0.0
    %1150 = vmatpush1.xpose.msra.mxu0 0.0
    %1151 = vmatprep.subr.mxu0 0.0
    %1152 = vmatpush1.xpose.msra.mxu0 0.0
    %1153 = vmatprep.subr.mxu0 0.0
    %1154 = vmatpush1.xpose.msra.mxu0 0.0
    %1155 = vmatprep.mubr.f32.mxu0 0.0
    %1156 = vmatmul.mubr.f32.gmra.mrb[0].mxu0 %v1086
    %v1157 = vpop.f32.mrb[0].mxu0
    %v1158 = vadd.f32 %v59, %v1157
    %v1159 = vpop.f32.mrb[0].mxu0
    %1160 = vdwg.mxu0
    %v1161 = vsel %vm336, %v1082, -inf
    %1162 = vmax.xlane.f32.xlu0 %v1161
    %v1163 = vpop.xlane.xlu0 %1162
    %v1164 = vsel %vm336, %v1158, -inf
    %1165 = vmax.xlane.f32.xlu0 %v1164
    %v1166 = vpop.xlane.xlu0 %1165
    %v1167 = vsub.f32 %v1082, %v1163
    %v1168 = vsub.f32 %v1158, %v1166
    %v1169 = vmul.f32 %v1167, 1.442695
    %v1170 = vpow.pop %v1169
    %v1171 = vmul.f32 %v1168, 1.442695
    %v1172 = vpow.pop %v1171
    %v1173 = vsel %vm336, %v1170, 0.0
    %1174 = vadd.xlane.f32.xlu0 %v1173
    %v1175 = vpop.xlane.xlu0 %1174
    %v1176 = vsel %vm336, %v1172, 0.0
    %1177 = vadd.xlane.f32.xlu0 %v1176
    %v1178 = vpop.xlane.xlu0 %1177
    %v1179 = vrcp.pop %v1175
    %v1180 = vmul.f32 %v1170, %v1179
    %v1181 = vrcp.pop %v1178
    %v1182 = vmul.f32 %v1172, %v1181
    %v1184 = vsel %vm336, %v1180, 0
    %1186 = vmatprep.subr.mxu0 0.0
    %1187 = vmatpush1.msra.mxu0 %v1001
    %1188 = vmatprep.subr.mxu0 0.0
    %1189 = vmatpush1.msra.mxu0 0.0
    %1190 = vmatprep.subr.mxu0 0.0
    %1191 = vmatpush1.msra.mxu0 0.0
    %1192 = vmatprep.subr.mxu0 0.0
    %1193 = vmatpush1.msra.mxu0 0.0
    %1194 = vmatprep.subr.mxu0 0.0
    %1195 = vmatpush1.msra.mxu0 0.0
    %1196 = vmatprep.subr.mxu0 0.0
    %1197 = vmatpush1.msra.mxu0 0.0
    %1198 = vmatprep.subr.mxu0 0.0
    %1199 = vmatpush1.msra.mxu0 0.0
    %1200 = vmatprep.subr.mxu0 0.0
    %1201 = vmatpush1.msra.mxu0 0.0
    %1202 = vmatprep.subr.mxu0 0.0
    %1203 = vmatpush1.msra.mxu0 0.0
    %1204 = vmatprep.subr.mxu0 0.0
    %1205 = vmatpush1.msra.mxu0 0.0
    %1206 = vmatprep.subr.mxu0 0.0
    %1207 = vmatpush1.msra.mxu0 0.0
    %1208 = vmatprep.subr.mxu0 0.0
    %1209 = vmatpush1.msra.mxu0 0.0
    %1210 = vmatprep.subr.mxu0 0.0
    %1211 = vmatpush1.msra.mxu0 0.0
    %1212 = vmatprep.subr.mxu0 0.0
    %1213 = vmatpush1.msra.mxu0 0.0
    %1214 = vmatprep.subr.mxu0 0.0
    %1215 = vmatpush1.msra.mxu0 0.0
    %1216 = vmatprep.subr.mxu0 0.0
    %1217 = vmatpush1.msra.mxu0 0.0
    %1218 = vmatprep.subr.mxu0 0.0
    %1219 = vmatpush1.msra.mxu0 0.0
    %1220 = vmatprep.subr.mxu0 0.0
    %1221 = vmatpush1.msra.mxu0 0.0
    %1222 = vmatprep.subr.mxu0 0.0
    %1223 = vmatpush1.msra.mxu0 0.0
    %1224 = vmatprep.subr.mxu0 0.0
    %1225 = vmatpush1.msra.mxu0 0.0
    %1226 = vmatprep.subr.mxu0 0.0
    %1227 = vmatpush1.msra.mxu0 0.0
    %1228 = vmatprep.subr.mxu0 0.0
    %1229 = vmatpush1.msra.mxu0 0.0
    %1230 = vmatprep.subr.mxu0 0.0
    %1231 = vmatpush1.msra.mxu0 0.0
    %1232 = vmatprep.subr.mxu0 0.0
    %1233 = vmatpush1.msra.mxu0 0.0
    %1234 = vmatprep.subr.mxu0 0.0
    %1235 = vmatpush1.msra.mxu0 0.0
    %1236 = vmatprep.subr.mxu0 0.0
    %1237 = vmatpush1.msra.mxu0 0.0
    %1238 = vmatprep.subr.mxu0 0.0
    %1239 = vmatpush1.msra.mxu0 0.0
    %1240 = vmatprep.subr.mxu0 0.0
    %1241 = vmatpush1.msra.mxu0 0.0
    %1242 = vmatprep.subr.mxu0 0.0
    %1243 = vmatpush1.msra.mxu0 0.0
    %1244 = vmatprep.subr.mxu0 0.0
    %1245 = vmatpush1.msra.mxu0 0.0
    %1246 = vmatprep.subr.mxu0 0.0
    %1247 = vmatpush1.msra.mxu0 0.0
    %1248 = vmatprep.subr.mxu0 0.0
    %1249 = vmatpush1.msra.mxu0 0.0
    %1250 = vmatprep.mubr.f32.mxu0 0.0
    %1251 = vmatmul.mubr.f32.gmra.mrb[0].mxu0 %v1184
    %v1252 = vpop.f32.mrb[0].mxu0
    %v1253 = vadd.f32 0.0, %v1252
    %v1254 = vpop.f32.mrb[0].mxu0
    %1255 = vdwg.mxu0
    %v1257 = vsel %vm336, %v1182, 0
    %1259 = vmatprep.subr.mxu0 0.0
    %1260 = vmatpush1.msra.mxu0 %v1006
    %1261 = vmatprep.subr.mxu0 0.0
    %1262 = vmatpush1.msra.mxu0 0.0
    %1263 = vmatprep.subr.mxu0 0.0
    %1264 = vmatpush1.msra.mxu0 0.0
    %1265 = vmatprep.subr.mxu0 0.0
    %1266 = vmatpush1.msra.mxu0 0.0
    %1267 = vmatprep.subr.mxu0 0.0
    %1268 = vmatpush1.msra.mxu0 0.0
    %1269 = vmatprep.subr.mxu0 0.0
    %1270 = vmatpush1.msra.mxu0 0.0
    %1271 = vmatprep.subr.mxu0 0.0
    %1272 = vmatpush1.msra.mxu0 0.0
    %1273 = vmatprep.subr.mxu0 0.0
    %1274 = vmatpush1.msra.mxu0 0.0
    %1275 = vmatprep.subr.mxu0 0.0
    %1276 = vmatpush1.msra.mxu0 0.0
    %1277 = vmatprep.subr.mxu0 0.0
    %1278 = vmatpush1.msra.mxu0 0.0
    %1279 = vmatprep.subr.mxu0 0.0
    %1280 = vmatpush1.msra.mxu0 0.0
    %1281 = vmatprep.subr.mxu0 0.0
    %1282 = vmatpush1.msra.mxu0 0.0
    %1283 = vmatprep.subr.mxu0 0.0
    %1284 = vmatpush1.msra.mxu0 0.0
    %1285 = vmatprep.subr.mxu0 0.0
    %1286 = vmatpush1.msra.mxu0 0.0
    %1287 = vmatprep.subr.mxu0 0.0
    %1288 = vmatpush1.msra.mxu0 0.0
    %1289 = vmatprep.subr.mxu0 0.0
    %1290 = vmatpush1.msra.mxu0 0.0
    %1291 = vmatprep.subr.mxu0 0.0
    %1292 = vmatpush1.msra.mxu0 0.0
    %1293 = vmatprep.subr.mxu0 0.0
    %1294 = vmatpush1.msra.mxu0 0.0
    %1295 = vmatprep.subr.mxu0 0.0
    %1296 = vmatpush1.msra.mxu0 0.0
    %1297 = vmatprep.subr.mxu0 0.0
    %1298 = vmatpush1.msra.mxu0 0.0
    %1299 = vmatprep.subr.mxu0 0.0
    %1300 = vmatpush1.msra.mxu0 0.0
    %1301 = vmatprep.subr.mxu0 0.0
    %1302 = vmatpush1.msra.mxu0 0.0
    %1303 = vmatprep.subr.mxu0 0.0
    %1304 = vmatpush1.msra.mxu0 0.0
    %1305 = vmatprep.subr.mxu0 0.0
    %1306 = vmatpush1.msra.mxu0 0.0
    %1307 = vmatprep.subr.mxu0 0.0
    %1308 = vmatpush1.msra.mxu0 0.0
    %1309 = vmatprep.subr.mxu0 0.0
    %1310 = vmatpush1.msra.mxu0 0.0
    %1311 = vmatprep.subr.mxu0 0.0
    %1312 = vmatpush1.msra.mxu0 0.0
    %1313 = vmatprep.subr.mxu0 0.0
    %1314 = vmatpush1.msra.mxu0 0.0
    %1315 = vmatprep.subr.mxu0 0.0
    %1316 = vmatpush1.msra.mxu0 0.0
    %1317 = vmatprep.subr.mxu0 0.0
    %1318 = vmatpush1.msra.mxu0 0.0
    %1319 = vmatprep.subr.mxu0 0.0
    %1320 = vmatpush1.msra.mxu0 0.0
    %1321 = vmatprep.subr.mxu0 0.0
    %1322 = vmatpush1.msra.mxu0 0.0
    %1323 = vmatprep.mubr.f32.mxu0 0.0
    %1324 = vmatmul.mubr.f32.gmra.mrb[0].mxu0 %v1257
    %v1325 = vpop.f32.mrb[0].mxu0
    %v1326 = vadd.f32 0.0, %v1325
    %v1327 = vpop.f32.mrb[0].mxu0
    %1328 = vdwg.mxu0
    %v1329 = vld [vmem:[#allocation2] sm:$0xff]
    %v1330 = vld [vmem:[#allocation2 + $0x8] sm:$0xff]
    %s1331 = scalar_lea.vmem %s10, 8
    %v1332 = vld [vmem:[%s1331] sm:$0xff]
    %v1334 = vsel %vm336, %v1253, 0
    %v1337 = vsel %vm336, %v1326, 0
    %1339 = vmatprep.subr.mxu0 0.0
    %1340 = vmatpush1.msra.mxu0 %v1332
    %1341 = vmatprep.subr.mxu0 0.0
    %1342 = vmatpush1.msra.mxu0 0.0
    %1343 = vmatprep.subr.mxu0 0.0
    %1344 = vmatpush1.msra.mxu0 0.0
    %1345 = vmatprep.subr.mxu0 0.0
    %1346 = vmatpush1.msra.mxu0 0.0
    %1347 = vmatprep.subr.mxu0 0.0
    %1348 = vmatpush1.msra.mxu0 0.0
    %1349 = vmatprep.subr.mxu0 0.0
    %1350 = vmatpush1.msra.mxu0 0.0
    %1351 = vmatprep.subr.mxu0 0.0
    %1352 = vmatpush1.msra.mxu0 0.0
    %1353 = vmatprep.subr.mxu0 0.0
    %1354 = vmatpush1.msra.mxu0 0.0
    %1355 = vmatprep.subr.mxu0 0.0
    %1356 = vmatpush1.msra.mxu0 0.0
    %1357 = vmatprep.subr.mxu0 0.0
    %1358 = vmatpush1.msra.mxu0 0.0
    %1359 = vmatprep.subr.mxu0 0.0
    %1360 = vmatpush1.msra.mxu0 0.0
    %1361 = vmatprep.subr.mxu0 0.0
    %1362 = vmatpush1.msra.mxu0 0.0
    %1363 = vmatprep.subr.mxu0 0.0
    %1364 = vmatpush1.msra.mxu0 0.0
    %1365 = vmatprep.subr.mxu0 0.0
    %1366 = vmatpush1.msra.mxu0 0.0
    %1367 = vmatprep.subr.mxu0 0.0
    %1368 = vmatpush1.msra.mxu0 0.0
    %1369 = vmatprep.subr.mxu0 0.0
    %1370 = vmatpush1.msra.mxu0 0.0
    %1371 = vmatprep.subr.mxu0 0.0
    %1372 = vmatpush1.msra.mxu0 0.0
    %1373 = vmatprep.subr.mxu0 0.0
    %1374 = vmatpush1.msra.mxu0 0.0
    %1375 = vmatprep.subr.mxu0 0.0
    %1376 = vmatpush1.msra.mxu0 0.0
    %1377 = vmatprep.subr.mxu0 0.0
    %1378 = vmatpush1.msra.mxu0 0.0
    %1379 = vmatprep.subr.mxu0 0.0
    %1380 = vmatpush1.msra.mxu0 0.0
    %1381 = vmatprep.subr.mxu0 0.0
    %1382 = vmatpush1.msra.mxu0 0.0
    %1383 = vmatprep.subr.mxu0 0.0
    %1384 = vmatpush1.msra.mxu0 0.0
    %1385 = vmatprep.subr.mxu0 0.0
    %1386 = vmatpush1.msra.mxu0 0.0
    %1387 = vmatprep.subr.mxu0 0.0
    %1388 = vmatpush1.msra.mxu0 0.0
    %1389 = vmatprep.subr.mxu0 0.0
    %1390 = vmatpush1.msra.mxu0 0.0
    %1391 = vmatprep.subr.mxu0 0.0
    %1392 = vmatpush1.msra.mxu0 0.0
    %1393 = vmatprep.subr.mxu0 0.0
    %1394 = vmatpush1.msra.mxu0 0.0
    %1395 = vmatprep.subr.mxu0 0.0
    %1396 = vmatpush1.msra.mxu0 0.0
    %1397 = vmatprep.subr.mxu0 0.0
    %1398 = vmatpush1.msra.mxu0 0.0
    %1399 = vmatprep.subr.mxu0 0.0
    %1400 = vmatpush1.msra.mxu0 0.0
    %1401 = vmatprep.subr.mxu0 0.0
    %1402 = vmatpush1.msra.mxu0 0.0
    %1403 = vmatprep.mubr.f32.mxu0 0.0
    %1404 = vmatmul.mubr.f32.gmra.mrb[0].mxu0 %v1334
    %v1405 = vpop.f32.mrb[0].mxu0
    %v1406 = vadd.f32 0.0, %v1405
    %v1407 = vpop.f32.mrb[0].mxu0
    %1408 = vmatprep.mubr.f32.mxu0 0.0
    %1409 = vmatmul.mubr.f32.gmra.mrb[0].mxu0 %v1337
    %v1410 = vpop.f32.mrb[0].mxu0
    %v1411 = vadd.f32 0.0, %v1410
    %v1412 = vpop.f32.mrb[0].mxu0
    %1413 = vdwg.mxu0
    %v1414 = vadd.f32 %v1329, %v1406
    %v1415 = vadd.f32 %v1330, %v1411
    %1416 = vst.msk [vmem:[#allocation2] sm:$0xff] %vm56, %v1414
    %1417 = vst.msk [vmem:[#allocation2 + $0x8] sm:$0xff] %vm56, %v1415
    %s1418 = scalar_lea.vmem %s4, 64
    %v1419 = vld [vmem:[%s1418] sm:$0xff]
    %v1420 = vld [vmem:[%s1418 + $0x8] sm:$0xff]
    %v1421 = vld [vmem:[%s1418 + $0x10] sm:$0xff]
    %v1422 = vld [vmem:[%s1418 + $0x18] sm:$0xff]
    %s1423 = scalar_lea.vmem %s7, 2
    %v1424 = vld [vmem:[%s1423] sm:$0x1]
    %v1426 = vlaneseq
    %v1427 = vshrl.u32 %v1426, 7
    %v1428 = vsub.s32 0, %v1427
    %v1429 = vrot.slane %v1424, %v1428
    %1431 = vmatprep.subr.mxu0 0.0
    %1432 = vmatpush1.msra.mxu0 %v1419
    %1433 = vmatprep.subr.mxu0 0.0
    %1434 = vmatpush1.msra.mxu0 %v1420
    %1435 = vmatprep.subr.mxu0 0.0
    %1436 = vmatpush1.msra.mxu0 %v1421
    %1437 = vmatprep.subr.mxu0 0.0
    %1438 = vmatpush1.msra.mxu0 %v1422
    %1439 = vmatprep.subr.mxu0 0.0
    %1440 = vmatpush1.msra.mxu0 0.0
    %1441 = vmatprep.subr.mxu0 0.0
    %1442 = vmatpush1.msra.mxu0 0.0
    %1443 = vmatprep.subr.mxu0 0.0
    %1444 = vmatpush1.msra.mxu0 0.0
    %1445 = vmatprep.subr.mxu0 0.0
    %1446 = vmatpush1.msra.mxu0 0.0
    %1447 = vmatprep.subr.mxu0 0.0
    %1448 = vmatpush1.msra.mxu0 0.0
    %1449 = vmatprep.subr.mxu0 0.0
    %1450 = vmatpush1.msra.mxu0 0.0
    %1451 = vmatprep.subr.mxu0 0.0
    %1452 = vmatpush1.msra.mxu0 0.0
    %1453 = vmatprep.subr.mxu0 0.0
    %1454 = vmatpush1.msra.mxu0 0.0
    %1455 = vmatprep.subr.mxu0 0.0
    %1456 = vmatpush1.msra.mxu0 0.0
    %1457 = vmatprep.subr.mxu0 0.0
    %1458 = vmatpush1.msra.mxu0 0.0
    %1459 = vmatprep.subr.mxu0 0.0
    %1460 = vmatpush1.msra.mxu0 0.0
    %1461 = vmatprep.subr.mxu0 0.0
    %1462 = vmatpush1.msra.mxu0 0.0
    %1463 = vmatprep.subr.mxu0 0.0
    %1464 = vmatpush1.msra.mxu0 0.0
    %1465 = vmatprep.subr.mxu0 0.0
    %1466 = vmatpush1.msra.mxu0 0.0
    %1467 = vmatprep.subr.mxu0 0.0
    %1468 = vmatpush1.msra.mxu0 0.0
    %1469 = vmatprep.subr.mxu0 0.0
    %1470 = vmatpush1.msra.mxu0 0.0
    %1471 = vmatprep.subr.mxu0 0.0
    %1472 = vmatpush1.msra.mxu0 0.0
    %1473 = vmatprep.subr.mxu0 0.0
    %1474 = vmatpush1.msra.mxu0 0.0
    %1475 = vmatprep.subr.mxu0 0.0
    %1476 = vmatpush1.msra.mxu0 0.0
    %1477 = vmatprep.subr.mxu0 0.0
    %1478 = vmatpush1.msra.mxu0 0.0
    %1479 = vmatprep.subr.mxu0 0.0
    %1480 = vmatpush1.msra.mxu0 0.0
    %1481 = vmatprep.subr.mxu0 0.0
    %1482 = vmatpush1.msra.mxu0 0.0
    %1483 = vmatprep.subr.mxu0 0.0
    %1484 = vmatpush1.msra.mxu0 0.0
    %1485 = vmatprep.subr.mxu0 0.0
    %1486 = vmatpush1.msra.mxu0 0.0
    %1487 = vmatprep.subr.mxu0 0.0
    %1488 = vmatpush1.msra.mxu0 0.0
    %1489 = vmatprep.subr.mxu0 0.0
    %1490 = vmatpush1.msra.mxu0 0.0
    %1491 = vmatprep.subr.mxu0 0.0
    %1492 = vmatpush1.msra.mxu0 0.0
    %1493 = vmatprep.subr.mxu0 0.0
    %1494 = vmatpush1.msra.mxu0 0.0
    %1495 = vmatprep.mubr.f32.mxu0 0.0
    %1496 = vmatmul.mubr.f32.gmra.mrb[0].mxu0 %v72
    %v1497 = vpop.f32.mrb[0].mxu0
    %v1498 = vadd.f32 %v1429, %v1497
    %v1499 = vpop.f32.mrb[0].mxu0
    %1500 = vmatprep.mubr.f32.mxu0 0.0
    %1501 = vmatmul.mubr.f32.gmra.mrb[0].mxu0 %v75
    %v1502 = vpop.f32.mrb[0].mxu0
    %v1503 = vadd.f32 %v1429, %v1502
    %v1504 = vpop.f32.mrb[0].mxu0
    %1505 = vdwg.mxu0
    %s1506 = scalar_lea.vmem %s5, 64
    %v1507 = vld [vmem:[%s1506] sm:$0xff]
    %v1508 = vld [vmem:[%s1506 + $0x8] sm:$0xff]
    %v1509 = vld [vmem:[%s1506 + $0x10] sm:$0xff]
    %v1510 = vld [vmem:[%s1506 + $0x18] sm:$0xff]
    %s1511 = scalar_lea.vmem %s8, 2
    %v1512 = vld [vmem:[%s1511] sm:$0x1]
    %v1514 = vlaneseq
    %v1515 = vshrl.u32 %v1514, 7
    %v1516 = vsub.s32 0, %v1515
    %v1517 = vrot.slane %v1512, %v1516
    %1519 = vmatprep.subr.mxu0 0.0
    %1520 = vmatpush1.msra.mxu0 %v1507
    %1521 = vmatprep.subr.mxu0 0.0
    %1522 = vmatpush1.msra.mxu0 %v1508
    %1523 = vmatprep.subr.mxu0 0.0
    %1524 = vmatpush1.msra.mxu0 %v1509
    %1525 = vmatprep.subr.mxu0 0.0
    %1526 = vmatpush1.msra.mxu0 %v1510
    %1527 = vmatprep.subr.mxu0 0.0
    %1528 = vmatpush1.msra.mxu0 0.0
    %1529 = vmatprep.subr.mxu0 0.0
    %1530 = vmatpush1.msra.mxu0 0.0
    %1531 = vmatprep.subr.mxu0 0.0
    %1532 = vmatpush1.msra.mxu0 0.0
    %1533 = vmatprep.subr.mxu0 0.0
    %1534 = vmatpush1.msra.mxu0 0.0
    %1535 = vmatprep.subr.mxu0 0.0
    %1536 = vmatpush1.msra.mxu0 0.0
    %1537 = vmatprep.subr.mxu0 0.0
    %1538 = vmatpush1.msra.mxu0 0.0
    %1539 = vmatprep.subr.mxu0 0.0
    %1540 = vmatpush1.msra.mxu0 0.0
    %1541 = vmatprep.subr.mxu0 0.0
    %1542 = vmatpush1.msra.mxu0 0.0
    %1543 = vmatprep.subr.mxu0 0.0
    %1544 = vmatpush1.msra.mxu0 0.0
    %1545 = vmatprep.subr.mxu0 0.0
    %1546 = vmatpush1.msra.mxu0 0.0
    %1547 = vmatprep.subr.mxu0 0.0
    %1548 = vmatpush1.msra.mxu0 0.0
    %1549 = vmatprep.subr.mxu0 0.0
    %1550 = vmatpush1.msra.mxu0 0.0
    %1551 = vmatprep.subr.mxu0 0.0
    %1552 = vmatpush1.msra.mxu0 0.0
    %1553 = vmatprep.subr.mxu0 0.0
    %1554 = vmatpush1.msra.mxu0 0.0
    %1555 = vmatprep.subr.mxu0 0.0
    %1556 = vmatpush1.msra.mxu0 0.0
    %1557 = vmatprep.subr.mxu0 0.0
    %1558 = vmatpush1.msra.mxu0 0.0
    %1559 = vmatprep.subr.mxu0 0.0
    %1560 = vmatpush1.msra.mxu0 0.0
    %1561 = vmatprep.subr.mxu0 0.0
    %1562 = vmatpush1.msra.mxu0 0.0
    %1563 = vmatprep.subr.mxu0 0.0
    %1564 = vmatpush1.msra.mxu0 0.0
    %1565 = vmatprep.subr.mxu0 0.0
    %1566 = vmatpush1.msra.mxu0 0.0
    %1567 = vmatprep.subr.mxu0 0.0
    %1568 = vmatpush1.msra.mxu0 0.0
    %1569 = vmatprep.subr.mxu0 0.0
    %1570 = vmatpush1.msra.mxu0 0.0
    %1571 = vmatprep.subr.mxu0 0.0
    %1572 = vmatpush1.msra.mxu0 0.0
    %1573 = vmatprep.subr.mxu0 0.0
    %1574 = vmatpush1.msra.mxu0 0.0
    %1575 = vmatprep.subr.mxu0 0.0
    %1576 = vmatpush1.msra.mxu0 0.0
    %1577 = vmatprep.subr.mxu0 0.0
    %1578 = vmatpush1.msra.mxu0 0.0
    %1579 = vmatprep.subr.mxu0 0.0
    %1580 = vmatpush1.msra.mxu0 0.0
    %1581 = vmatprep.subr.mxu0 0.0
    %1582 = vmatpush1.msra.mxu0 0.0
    %1583 = vmatprep.mubr.f32.mxu0 0.0
    %1584 = vmatmul.mubr.f32.gmra.mrb[0].mxu0 %v164
    %v1585 = vpop.f32.mrb[0].mxu0
    %v1586 = vadd.f32 %v1517, %v1585
    %v1587 = vpop.f32.mrb[0].mxu0
    %1588 = vmatprep.mubr.f32.mxu0 0.0
    %1589 = vmatmul.mubr.f32.gmra.mrb[0].mxu0 %v167
    %v1590 = vpop.f32.mrb[0].mxu0
    %v1591 = vadd.f32 %v1517, %v1590
    %v1592 = vpop.f32.mrb[0].mxu0
    %1593 = vdwg.mxu0
    %s1594 = scalar_lea.vmem %s6, 64
    %v1595 = vld [vmem:[%s1594] sm:$0xff]
    %v1596 = vld [vmem:[%s1594 + $0x8] sm:$0xff]
    %v1597 = vld [vmem:[%s1594 + $0x10] sm:$0xff]
    %v1598 = vld [vmem:[%s1594 + $0x18] sm:$0xff]
    %s1599 = scalar_lea.vmem %s9, 2
    %v1600 = vld [vmem:[%s1599] sm:$0x1]
    %v1602 = vlaneseq
    %v1603 = vshrl.u32 %v1602, 7
    %v1604 = vsub.s32 0, %v1603
    %v1605 = vrot.slane %v1600, %v1604
    %1607 = vmatprep.subr.mxu0 0.0
    %1608 = vmatpush1.msra.mxu0 %v1595
    %1609 = vmatprep.subr.mxu0 0.0
    %1610 = vmatpush1.msra.mxu0 %v1596
    %1611 = vmatprep.subr.mxu0 0.0
    %1612 = vmatpush1.msra.mxu0 %v1597
    %1613 = vmatprep.subr.mxu0 0.0
    %1614 = vmatpush1.msra.mxu0 %v1598
    %1615 = vmatprep.subr.mxu0 0.0
    %1616 = vmatpush1.msra.mxu0 0.0
    %1617 = vmatprep.subr.mxu0 0.0
    %1618 = vmatpush1.msra.mxu0 0.0
    %1619 = vmatprep.subr.mxu0 0.0
    %1620 = vmatpush1.msra.mxu0 0.0
    %1621 = vmatprep.subr.mxu0 0.0
    %1622 = vmatpush1.msra.mxu0 0.0
    %1623 = vmatprep.subr.mxu0 0.0
    %1624 = vmatpush1.msra.mxu0 0.0
    %1625 = vmatprep.subr.mxu0 0.0
    %1626 = vmatpush1.msra.mxu0 0.0
    %1627 = vmatprep.subr.mxu0 0.0
    %1628 = vmatpush1.msra.mxu0 0.0
    %1629 = vmatprep.subr.mxu0 0.0
    %1630 = vmatpush1.msra.mxu0 0.0
    %1631 = vmatprep.subr.mxu0 0.0
    %1632 = vmatpush1.msra.mxu0 0.0
    %1633 = vmatprep.subr.mxu0 0.0
    %1634 = vmatpush1.msra.mxu0 0.0
    %1635 = vmatprep.subr.mxu0 0.0
    %1636 = vmatpush1.msra.mxu0 0.0
    %1637 = vmatprep.subr.mxu0 0.0
    %1638 = vmatpush1.msra.mxu0 0.0
    %1639 = vmatprep.subr.mxu0 0.0
    %1640 = vmatpush1.msra.mxu0 0.0
    %1641 = vmatprep.subr.mxu0 0.0
    %1642 = vmatpush1.msra.mxu0 0.0
    %1643 = vmatprep.subr.mxu0 0.0
    %1644 = vmatpush1.msra.mxu0 0.0
    %1645 = vmatprep.subr.mxu0 0.0
    %1646 = vmatpush1.msra.mxu0 0.0
    %1647 = vmatprep.subr.mxu0 0.0
    %1648 = vmatpush1.msra.mxu0 0.0
    %1649 = vmatprep.subr.mxu0 0.0
    %1650 = vmatpush1.msra.mxu0 0.0
    %1651 = vmatprep.subr.mxu0 0.0
    %1652 = vmatpush1.msra.mxu0 0.0
    %1653 = vmatprep.subr.mxu0 0.0
    %1654 = vmatpush1.msra.mxu0 0.0
    %1655 = vmatprep.subr.mxu0 0.0
    %1656 = vmatpush1.msra.mxu0 0.0
    %1657 = vmatprep.subr.mxu0 0.0
    %1658 = vmatpush1.msra.mxu0 0.0
    %1659 = vmatprep.subr.mxu0 0.0
    %1660 = vmatpush1.msra.mxu0 0.0
    %1661 = vmatprep.subr.mxu0 0.0
    %1662 = vmatpush1.msra.mxu0 0.0
    %1663 = vmatprep.subr.mxu0 0.0
    %1664 = vmatpush1.msra.mxu0 0.0
    %1665 = vmatprep.subr.mxu0 0.0
    %1666 = vmatpush1.msra.mxu0 0.0
    %1667 = vmatprep.subr.mxu0 0.0
    %1668 = vmatpush1.msra.mxu0 0.0
    %1669 = vmatprep.subr.mxu0 0.0
    %1670 = vmatpush1.msra.mxu0 0.0
    %1671 = vmatprep.mubr.f32.mxu0 0.0
    %1672 = vmatmul.mubr.f32.gmra.mrb[0].mxu0 %v256
    %v1673 = vpop.f32.mrb[0].mxu0
    %v1674 = vadd.f32 %v1605, %v1673
    %v1675 = vpop.f32.mrb[0].mxu0
    %1676 = vmatprep.mubr.f32.mxu0 0.0
    %1677 = vmatmul.mubr.f32.gmra.mrb[0].mxu0 %v259
    %v1678 = vpop.f32.mrb[0].mxu0
    %v1679 = vadd.f32 %v1605, %v1678
    %v1680 = vpop.f32.mrb[0].mxu0
    %1681 = vdwg.mxu0
    %v1683 = vsel %vm336, %v1498, 0
    %v1686 = vsel %vm336, %v1586, 0
    %1688 = vmatprep.subr.mxu0 0.0
    %1689 = vmatpush1.xpose.msra.mxu0 %v1686
    %1690 = vmatprep.subr.mxu0 0.0
    %1691 = vmatpush1.xpose.msra.mxu0 0.0
    %1692 = vmatprep.subr.mxu0 0.0
    %1693 = vmatpush1.xpose.msra.mxu0 0.0
    %1694 = vmatprep.subr.mxu0 0.0
    %1695 = vmatpush1.xpose.msra.mxu0 0.0
    %1696 = vmatprep.subr.mxu0 0.0
    %1697 = vmatpush1.xpose.msra.mxu0 0.0
    %1698 = vmatprep.subr.mxu0 0.0
    %1699 = vmatpush1.xpose.msra.mxu0 0.0
    %1700 = vmatprep.subr.mxu0 0.0
    %1701 = vmatpush1.xpose.msra.mxu0 0.0
    %1702 = vmatprep.subr.mxu0 0.0
    %1703 = vmatpush1.xpose.msra.mxu0 0.0
    %1704 = vmatprep.subr.mxu0 0.0
    %1705 = vmatpush1.xpose.msra.mxu0 0.0
    %1706 = vmatprep.subr.mxu0 0.0
    %1707 = vmatpush1.xpose.msra.mxu0 0.0
    %1708 = vmatprep.subr.mxu0 0.0
    %1709 = vmatpush1.xpose.msra.mxu0 0.0
    %1710 = vmatprep.subr.mxu0 0.0
    %1711 = vmatpush1.xpose.msra.mxu0 0.0
    %1712 = vmatprep.subr.mxu0 0.0
    %1713 = vmatpush1.xpose.msra.mxu0 0.0
    %1714 = vmatprep.subr.mxu0 0.0
    %1715 = vmatpush1.xpose.msra.mxu0 0.0
    %1716 = vmatprep.subr.mxu0 0.0
    %1717 = vmatpush1.xpose.msra.mxu0 0.0
    %1718 = vmatprep.subr.mxu0 0.0
    %1719 = vmatpush1.xpose.msra.mxu0 0.0
    %1720 = vmatprep.subr.mxu0 0.0
    %1721 = vmatpush1.xpose.msra.mxu0 0.0
    %1722 = vmatprep.subr.mxu0 0.0
    %1723 = vmatpush1.xpose.msra.mxu0 0.0
    %1724 = vmatprep.subr.mxu0 0.0
    %1725 = vmatpush1.xpose.msra.mxu0 0.0
    %1726 = vmatprep.subr.mxu0 0.0
    %1727 = vmatpush1.xpose.msra.mxu0 0.0
    %1728 = vmatprep.subr.mxu0 0.0
    %1729 = vmatpush1.xpose.msra.mxu0 0.0
    %1730 = vmatprep.subr.mxu0 0.0
    %1731 = vmatpush1.xpose.msra.mxu0 0.0
    %1732 = vmatprep.subr.mxu0 0.0
    %1733 = vmatpush1.xpose.msra.mxu0 0.0
    %1734 = vmatprep.subr.mxu0 0.0
    %1735 = vmatpush1.xpose.msra.mxu0 0.0
    %1736 = vmatprep.subr.mxu0 0.0
    %1737 = vmatpush1.xpose.msra.mxu0 0.0
    %1738 = vmatprep.subr.mxu0 0.0
    %1739 = vmatpush1.xpose.msra.mxu0 0.0
    %1740 = vmatprep.subr.mxu0 0.0
    %1741 = vmatpush1.xpose.msra.mxu0 0.0
    %1742 = vmatprep.subr.mxu0 0.0
    %1743 = vmatpush1.xpose.msra.mxu0 0.0
    %1744 = vmatprep.subr.mxu0 0.0
    %1745 = vmatpush1.xpose.msra.mxu0 0.0
    %1746 = vmatprep.subr.mxu0 0.0
    %1747 = vmatpush1.xpose.msra.mxu0 0.0
    %1748 = vmatprep.subr.mxu0 0.0
    %1749 = vmatpush1.xpose.msra.mxu0 0.0
    %1750 = vmatprep.subr.mxu0 0.0
    %1751 = vmatpush1.xpose.msra.mxu0 0.0
    %1752 = vmatprep.mubr.f32.mxu0 0.0
    %1753 = vmatmul.mubr.f32.gmra.mrb[0].mxu0 %v1683
    %v1754 = vpop.f32.mrb[0].mxu0
    %v1755 = vadd.f32 %v59, %v1754
    %v1756 = vpop.f32.mrb[0].mxu0
    %1757 = vdwg.mxu0
    %v1759 = vsel %vm336, %v1503, 0
    %v1762 = vsel %vm336, %v1591, 0
    %1764 = vmatprep.subr.mxu0 0.0
    %1765 = vmatpush1.xpose.msra.mxu0 %v1762
    %1766 = vmatprep.subr.mxu0 0.0
    %1767 = vmatpush1.xpose.msra.mxu0 0.0
    %1768 = vmatprep.subr.mxu0 0.0
    %1769 = vmatpush1.xpose.msra.mxu0 0.0
    %1770 = vmatprep.subr.mxu0 0.0
    %1771 = vmatpush1.xpose.msra.mxu0 0.0
    %1772 = vmatprep.subr.mxu0 0.0
    %1773 = vmatpush1.xpose.msra.mxu0 0.0
    %1774 = vmatprep.subr.mxu0 0.0
    %1775 = vmatpush1.xpose.msra.mxu0 0.0
    %1776 = vmatprep.subr.mxu0 0.0
    %1777 = vmatpush1.xpose.msra.mxu0 0.0
    %1778 = vmatprep.subr.mxu0 0.0
    %1779 = vmatpush1.xpose.msra.mxu0 0.0
    %1780 = vmatprep.subr.mxu0 0.0
    %1781 = vmatpush1.xpose.msra.mxu0 0.0
    %1782 = vmatprep.subr.mxu0 0.0
    %1783 = vmatpush1.xpose.msra.mxu0 0.0
    %1784 = vmatprep.subr.mxu0 0.0
    %1785 = vmatpush1.xpose.msra.mxu0 0.0
    %1786 = vmatprep.subr.mxu0 0.0
    %1787 = vmatpush1.xpose.msra.mxu0 0.0
    %1788 = vmatprep.subr.mxu0 0.0
    %1789 = vmatpush1.xpose.msra.mxu0 0.0
    %1790 = vmatprep.subr.mxu0 0.0
    %1791 = vmatpush1.xpose.msra.mxu0 0.0
    %1792 = vmatprep.subr.mxu0 0.0
    %1793 = vmatpush1.xpose.msra.mxu0 0.0
    %1794 = vmatprep.subr.mxu0 0.0
    %1795 = vmatpush1.xpose.msra.mxu0 0.0
    %1796 = vmatprep.subr.mxu0 0.0
    %1797 = vmatpush1.xpose.msra.mxu0 0.0
    %1798 = vmatprep.subr.mxu0 0.0
    %1799 = vmatpush1.xpose.msra.mxu0 0.0
    %1800 = vmatprep.subr.mxu0 0.0
    %1801 = vmatpush1.xpose.msra.mxu0 0.0
    %1802 = vmatprep.subr.mxu0 0.0
    %1803 = vmatpush1.xpose.msra.mxu0 0.0
    %1804 = vmatprep.subr.mxu0 0.0
    %1805 = vmatpush1.xpose.msra.mxu0 0.0
    %1806 = vmatprep.subr.mxu0 0.0
    %1807 = vmatpush1.xpose.msra.mxu0 0.0
    %1808 = vmatprep.subr.mxu0 0.0
    %1809 = vmatpush1.xpose.msra.mxu0 0.0
    %1810 = vmatprep.subr.mxu0 0.0
    %1811 = vmatpush1.xpose.msra.mxu0 0.0
    %1812 = vmatprep.subr.mxu0 0.0
    %1813 = vmatpush1.xpose.msra.mxu0 0.0
    %1814 = vmatprep.subr.mxu0 0.0
    %1815 = vmatpush1.xpose.msra.mxu0 0.0
    %1816 = vmatprep.subr.mxu0 0.0
    %1817 = vmatpush1.xpose.msra.mxu0 0.0
    %1818 = vmatprep.subr.mxu0 0.0
    %1819 = vmatpush1.xpose.msra.mxu0 0.0
    %1820 = vmatprep.subr.mxu0 0.0
    %1821 = vmatpush1.xpose.msra.mxu0 0.0
    %1822 = vmatprep.subr.mxu0 0.0
    %1823 = vmatpush1.xpose.msra.mxu0 0.0
    %1824 = vmatprep.subr.mxu0 0.0
    %1825 = vmatpush1.xpose.msra.mxu0 0.0
    %1826 = vmatprep.subr.mxu0 0.0
    %1827 = vmatpush1.xpose.msra.mxu0 0.0
    %1828 = vmatprep.mubr.f32.mxu0 0.0
    %1829 = vmatmul.mubr.f32.gmra.mrb[0].mxu0 %v1759
    %v1830 = vpop.f32.mrb[0].mxu0
    %v1831 = vadd.f32 %v59, %v1830
    %v1832 = vpop.f32.mrb[0].mxu0
    %1833 = vdwg.mxu0
    %v1834 = vsel %vm336, %v1755, -inf
    %1835 = vmax.xlane.f32.xlu0 %v1834
    %v1836 = vpop.xlane.xlu0 %1835
    %v1837 = vsel %vm336, %v1831, -inf
    %1838 = vmax.xlane.f32.xlu0 %v1837
    %v1839 = vpop.xlane.xlu0 %1838
    %v1840 = vsub.f32 %v1755, %v1836
    %v1841 = vsub.f32 %v1831, %v1839
    %v1842 = vmul.f32 %v1840, 1.442695
    %v1843 = vpow.pop %v1842
    %v1844 = vmul.f32 %v1841, 1.442695
    %v1845 = vpow.pop %v1844
    %v1846 = vsel %vm336, %v1843, 0.0
    %1847 = vadd.xlane.f32.xlu0 %v1846
    %v1848 = vpop.xlane.xlu0 %1847
    %v1849 = vsel %vm336, %v1845, 0.0
    %1850 = vadd.xlane.f32.xlu0 %v1849
    %v1851 = vpop.xlane.xlu0 %1850
    %v1852 = vrcp.pop %v1848
    %v1853 = vmul.f32 %v1843, %v1852
    %v1854 = vrcp.pop %v1851
    %v1855 = vmul.f32 %v1845, %v1854
    %v1857 = vsel %vm336, %v1853, 0
    %1859 = vmatprep.subr.mxu0 0.0
    %1860 = vmatpush1.msra.mxu0 %v1674
    %1861 = vmatprep.subr.mxu0 0.0
    %1862 = vmatpush1.msra.mxu0 0.0
    %1863 = vmatprep.subr.mxu0 0.0
    %1864 = vmatpush1.msra.mxu0 0.0
    %1865 = vmatprep.subr.mxu0 0.0
    %1866 = vmatpush1.msra.mxu0 0.0
    %1867 = vmatprep.subr.mxu0 0.0
    %1868 = vmatpush1.msra.mxu0 0.0
    %1869 = vmatprep.subr.mxu0 0.0
    %1870 = vmatpush1.msra.mxu0 0.0
    %1871 = vmatprep.subr.mxu0 0.0
    %1872 = vmatpush1.msra.mxu0 0.0
    %1873 = vmatprep.subr.mxu0 0.0
    %1874 = vmatpush1.msra.mxu0 0.0
    %1875 = vmatprep.subr.mxu0 0.0
    %1876 = vmatpush1.msra.mxu0 0.0
    %1877 = vmatprep.subr.mxu0 0.0
    %1878 = vmatpush1.msra.mxu0 0.0
    %1879 = vmatprep.subr.mxu0 0.0
    %1880 = vmatpush1.msra.mxu0 0.0
    %1881 = vmatprep.subr.mxu0 0.0
    %1882 = vmatpush1.msra.mxu0 0.0
    %1883 = vmatprep.subr.mxu0 0.0
    %1884 = vmatpush1.msra.mxu0 0.0
    %1885 = vmatprep.subr.mxu0 0.0
    %1886 = vmatpush1.msra.mxu0 0.0
    %1887 = vmatprep.subr.mxu0 0.0
    %1888 = vmatpush1.msra.mxu0 0.0
    %1889 = vmatprep.subr.mxu0 0.0
    %1890 = vmatpush1.msra.mxu0 0.0
    %1891 = vmatprep.subr.mxu0 0.0
    %1892 = vmatpush1.msra.mxu0 0.0
    %1893 = vmatprep.subr.mxu0 0.0
    %1894 = vmatpush1.msra.mxu0 0.0
    %1895 = vmatprep.subr.mxu0 0.0
    %1896 = vmatpush1.msra.mxu0 0.0
    %1897 = vmatprep.subr.mxu0 0.0
    %1898 = vmatpush1.msra.mxu0 0.0
    %1899 = vmatprep.subr.mxu0 0.0
    %1900 = vmatpush1.msra.mxu0 0.0
    %1901 = vmatprep.subr.mxu0 0.0
    %1902 = vmatpush1.msra.mxu0 0.0
    %1903 = vmatprep.subr.mxu0 0.0
    %1904 = vmatpush1.msra.mxu0 0.0
    %1905 = vmatprep.subr.mxu0 0.0
    %1906 = vmatpush1.msra.mxu0 0.0
    %1907 = vmatprep.subr.mxu0 0.0
    %1908 = vmatpush1.msra.mxu0 0.0
    %1909 = vmatprep.subr.mxu0 0.0
    %1910 = vmatpush1.msra.mxu0 0.0
    %1911 = vmatprep.subr.mxu0 0.0
    %1912 = vmatpush1.msra.mxu0 0.0
    %1913 = vmatprep.subr.mxu0 0.0
    %1914 = vmatpush1.msra.mxu0 0.0
    %1915 = vmatprep.subr.mxu0 0.0
    %1916 = vmatpush1.msra.mxu0 0.0
    %1917 = vmatprep.subr.mxu0 0.0
    %1918 = vmatpush1.msra.mxu0 0.0
    %1919 = vmatprep.subr.mxu0 0.0
    %1920 = vmatpush1.msra.mxu0 0.0
    %1921 = vmatprep.subr.mxu0 0.0
    %1922 = vmatpush1.msra.mxu0 0.0
    %1923 = vmatprep.mubr.f32.mxu0 0.0
    %1924 = vmatmul.mubr.f32.gmra.mrb[0].mxu0 %v1857
    %v1925 = vpop.f32.mrb[0].mxu0
    %v1926 = vadd.f32 0.0, %v1925
    %v1927 = vpop.f32.mrb[0].mxu0
    %1928 = vdwg.mxu0
    %v1930 = vsel %vm336, %v1855, 0
    %1932 = vmatprep.subr.mxu0 0.0
    %1933 = vmatpush1.msra.mxu0 %v1679
    %1934 = vmatprep.subr.mxu0 0.0
    %1935 = vmatpush1.msra.mxu0 0.0
    %1936 = vmatprep.subr.mxu0 0.0
    %1937 = vmatpush1.msra.mxu0 0.0
    %1938 = vmatprep.subr.mxu0 0.0
    %1939 = vmatpush1.msra.mxu0 0.0
    %1940 = vmatprep.subr.mxu0 0.0
    %1941 = vmatpush1.msra.mxu0 0.0
    %1942 = vmatprep.subr.mxu0 0.0
    %1943 = vmatpush1.msra.mxu0 0.0
    %1944 = vmatprep.subr.mxu0 0.0
    %1945 = vmatpush1.msra.mxu0 0.0
    %1946 = vmatprep.subr.mxu0 0.0
    %1947 = vmatpush1.msra.mxu0 0.0
    %1948 = vmatprep.subr.mxu0 0.0
    %1949 = vmatpush1.msra.mxu0 0.0
    %1950 = vmatprep.subr.mxu0 0.0
    %1951 = vmatpush1.msra.mxu0 0.0
    %1952 = vmatprep.subr.mxu0 0.0
    %1953 = vmatpush1.msra.mxu0 0.0
    %1954 = vmatprep.subr.mxu0 0.0
    %1955 = vmatpush1.msra.mxu0 0.0
    %1956 = vmatprep.subr.mxu0 0.0
    %1957 = vmatpush1.msra.mxu0 0.0
    %1958 = vmatprep.subr.mxu0 0.0
    %1959 = vmatpush1.msra.mxu0 0.0
    %1960 = vmatprep.subr.mxu0 0.0
    %1961 = vmatpush1.msra.mxu0 0.0
    %1962 = vmatprep.subr.mxu0 0.0
    %1963 = vmatpush1.msra.mxu0 0.0
    %1964 = vmatprep.subr.mxu0 0.0
    %1965 = vmatpush1.msra.mxu0 0.0
    %1966 = vmatprep.subr.mxu0 0.0
    %1967 = vmatpush1.msra.mxu0 0.0
    %1968 = vmatprep.subr.mxu0 0.0
    %1969 = vmatpush1.msra.mxu0 0.0
    %1970 = vmatprep.subr.mxu0 0.0
    %1971 = vmatpush1.msra.mxu0 0.0
    %1972 = vmatprep.subr.mxu0 0.0
    %1973 = vmatpush1.msra.mxu0 0.0
    %1974 = vmatprep.subr.mxu0 0.0
    %1975 = vmatpush1.msra.mxu0 0.0
    %1976 = vmatprep.subr.mxu0 0.0
    %1977 = vmatpush1.msra.mxu0 0.0
    %1978 = vmatprep.subr.mxu0 0.0
    %1979 = vmatpush1.msra.mxu0 0.0
    %1980 = vmatprep.subr.mxu0 0.0
    %1981 = vmatpush1.msra.mxu0 0.0
    %1982 = vmatprep.subr.mxu0 0.0
    %1983 = vmatpush1.msra.mxu0 0.0
    %1984 = vmatprep.subr.mxu0 0.0
    %1985 = vmatpush1.msra.mxu0 0.0
    %1986 = vmatprep.subr.mxu0 0.0
    %1987 = vmatpush1.msra.mxu0 0.0
    %1988 = vmatprep.subr.mxu0 0.0
    %1989 = vmatpush1.msra.mxu0 0.0
    %1990 = vmatprep.subr.mxu0 0.0
    %1991 = vmatpush1.msra.mxu0 0.0
    %1992 = vmatprep.subr.mxu0 0.0
    %1993 = vmatpush1.msra.mxu0 0.0
    %1994 = vmatprep.subr.mxu0 0.0
    %1995 = vmatpush1.msra.mxu0 0.0
    %1996 = vmatprep.mubr.f32.mxu0 0.0
    %1997 = vmatmul.mubr.f32.gmra.mrb[0].mxu0 %v1930
    %v1998 = vpop.f32.mrb[0].mxu0
    %v1999 = vadd.f32 0.0, %v1998
    %v2000 = vpop.f32.mrb[0].mxu0
    %2001 = vdwg.mxu0
    %v2002 = vld [vmem:[#allocation2] sm:$0xff]
    %v2003 = vld [vmem:[#allocation2 + $0x8] sm:$0xff]
    %s2004 = scalar_lea.vmem %s10, 16
    %v2005 = vld [vmem:[%s2004] sm:$0xff]
    %v2007 = vsel %vm336, %v1926, 0
    %v2010 = vsel %vm336, %v1999, 0
    %2012 = vmatprep.subr.mxu0 0.0
    %2013 = vmatpush1.msra.mxu0 %v2005
    %2014 = vmatprep.subr.mxu0 0.0
    %2015 = vmatpush1.msra.mxu0 0.0
    %2016 = vmatprep.subr.mxu0 0.0
    %2017 = vmatpush1.msra.mxu0 0.0
    %2018 = vmatprep.subr.mxu0 0.0
    %2019 = vmatpush1.msra.mxu0 0.0
    %2020 = vmatprep.subr.mxu0 0.0
    %2021 = vmatpush1.msra.mxu0 0.0
    %2022 = vmatprep.subr.mxu0 0.0
    %2023 = vmatpush1.msra.mxu0 0.0
    %2024 = vmatprep.subr.mxu0 0.0
    %2025 = vmatpush1.msra.mxu0 0.0
    %2026 = vmatprep.subr.mxu0 0.0
    %2027 = vmatpush1.msra.mxu0 0.0
    %2028 = vmatprep.subr.mxu0 0.0
    %2029 = vmatpush1.msra.mxu0 0.0
    %2030 = vmatprep.subr.mxu0 0.0
    %2031 = vmatpush1.msra.mxu0 0.0
    %2032 = vmatprep.subr.mxu0 0.0
    %2033 = vmatpush1.msra.mxu0 0.0
    %2034 = vmatprep.subr.mxu0 0.0
    %2035 = vmatpush1.msra.mxu0 0.0
    %2036 = vmatprep.subr.mxu0 0.0
    %2037 = vmatpush1.msra.mxu0 0.0
    %2038 = vmatprep.subr.mxu0 0.0
    %2039 = vmatpush1.msra.mxu0 0.0
    %2040 = vmatprep.subr.mxu0 0.0
    %2041 = vmatpush1.msra.mxu0 0.0
    %2042 = vmatprep.subr.mxu0 0.0
    %2043 = vmatpush1.msra.mxu0 0.0
    %2044 = vmatprep.subr.mxu0 0.0
    %2045 = vmatpush1.msra.mxu0 0.0
    %2046 = vmatprep.subr.mxu0 0.0
    %2047 = vmatpush1.msra.mxu0 0.0
    %2048 = vmatprep.subr.mxu0 0.0
    %2049 = vmatpush1.msra.mxu0 0.0
    %2050 = vmatprep.subr.mxu0 0.0
    %2051 = vmatpush1.msra.mxu0 0.0
    %2052 = vmatprep.subr.mxu0 0.0
    %2053 = vmatpush1.msra.mxu0 0.0
    %2054 = vmatprep.subr.mxu0 0.0
    %2055 = vmatpush1.msra.mxu0 0.0
    %2056 = vmatprep.subr.mxu0 0.0
    %2057 = vmatpush1.msra.mxu0 0.0
    %2058 = vmatprep.subr.mxu0 0.0
    %2059 = vmatpush1.msra.mxu0 0.0
    %2060 = vmatprep.subr.mxu0 0.0
    %2061 = vmatpush1.msra.mxu0 0.0
    %2062 = vmatprep.subr.mxu0 0.0
    %2063 = vmatpush1.msra.mxu0 0.0
    %2064 = vmatprep.subr.mxu0 0.0
    %2065 = vmatpush1.msra.mxu0 0.0
    %2066 = vmatprep.subr.mxu0 0.0
    %2067 = vmatpush1.msra.mxu0 0.0
    %2068 = vmatprep.subr.mxu0 0.0
    %2069 = vmatpush1.msra.mxu0 0.0
    %2070 = vmatprep.subr.mxu0 0.0
    %2071 = vmatpush1.msra.mxu0 0.0
    %2072 = vmatprep.subr.mxu0 0.0
    %2073 = vmatpush1.msra.mxu0 0.0
    %2074 = vmatprep.subr.mxu0 0.0
    %2075 = vmatpush1.msra.mxu0 0.0
    %2076 = vmatprep.mubr.f32.mxu0 0.0
    %2077 = vmatmul.mubr.f32.gmra.mrb[0].mxu0 %v2007
    %v2078 = vpop.f32.mrb[0].mxu0
    %v2079 = vadd.f32 0.0, %v2078
    %v2080 = vpop.f32.mrb[0].mxu0
    %2081 = vmatprep.mubr.f32.mxu0 0.0
    %2082 = vmatmul.mubr.f32.gmra.mrb[0].mxu0 %v2010
    %v2083 = vpop.f32.mrb[0].mxu0
    %v2084 = vadd.f32 0.0, %v2083
    %v2085 = vpop.f32.mrb[0].mxu0
    %2086 = vdwg.mxu0
    %v2087 = vadd.f32 %v2002, %v2079
    %v2088 = vadd.f32 %v2003, %v2084
    %2089 = vst.msk [vmem:[#allocation2] sm:$0xff] %vm56, %v2087
    %2090 = vst.msk [vmem:[#allocation2 + $0x8] sm:$0xff] %vm56, %v2088
    %s2091 = scalar_lea.vmem %s4, 96
    %v2092 = vld [vmem:[%s2091] sm:$0xff]
    %v2093 = vld [vmem:[%s2091 + $0x8] sm:$0xff]
    %v2094 = vld [vmem:[%s2091 + $0x10] sm:$0xff]
    %v2095 = vld [vmem:[%s2091 + $0x18] sm:$0xff]
    %s2096 = scalar_lea.vmem %s7, 3
    %v2097 = vld [vmem:[%s2096] sm:$0x1]
    %v2099 = vlaneseq
    %v2100 = vshrl.u32 %v2099, 7
    %v2101 = vsub.s32 0, %v2100
    %v2102 = vrot.slane %v2097, %v2101
    %2104 = vmatprep.subr.mxu0 0.0
    %2105 = vmatpush1.msra.mxu0 %v2092
    %2106 = vmatprep.subr.mxu0 0.0
    %2107 = vmatpush1.msra.mxu0 %v2093
    %2108 = vmatprep.subr.mxu0 0.0
    %2109 = vmatpush1.msra.mxu0 %v2094
    %2110 = vmatprep.subr.mxu0 0.0
    %2111 = vmatpush1.msra.mxu0 %v2095
    %2112 = vmatprep.subr.mxu0 0.0
    %2113 = vmatpush1.msra.mxu0 0.0
    %2114 = vmatprep.subr.mxu0 0.0
    %2115 = vmatpush1.msra.mxu0 0.0
    %2116 = vmatprep.subr.mxu0 0.0
    %2117 = vmatpush1.msra.mxu0 0.0
    %2118 = vmatprep.subr.mxu0 0.0
    %2119 = vmatpush1.msra.mxu0 0.0
    %2120 = vmatprep.subr.mxu0 0.0
    %2121 = vmatpush1.msra.mxu0 0.0
    %2122 = vmatprep.subr.mxu0 0.0
    %2123 = vmatpush1.msra.mxu0 0.0
    %2124 = vmatprep.subr.mxu0 0.0
    %2125 = vmatpush1.msra.mxu0 0.0
    %2126 = vmatprep.subr.mxu0 0.0
    %2127 = vmatpush1.msra.mxu0 0.0
    %2128 = vmatprep.subr.mxu0 0.0
    %2129 = vmatpush1.msra.mxu0 0.0
    %2130 = vmatprep.subr.mxu0 0.0
    %2131 = vmatpush1.msra.mxu0 0.0
    %2132 = vmatprep.subr.mxu0 0.0
    %2133 = vmatpush1.msra.mxu0 0.0
    %2134 = vmatprep.subr.mxu0 0.0
    %2135 = vmatpush1.msra.mxu0 0.0
    %2136 = vmatprep.subr.mxu0 0.0
    %2137 = vmatpush1.msra.mxu0 0.0
    %2138 = vmatprep.subr.mxu0 0.0
    %2139 = vmatpush1.msra.mxu0 0.0
    %2140 = vmatprep.subr.mxu0 0.0
    %2141 = vmatpush1.msra.mxu0 0.0
    %2142 = vmatprep.subr.mxu0 0.0
    %2143 = vmatpush1.msra.mxu0 0.0
    %2144 = vmatprep.subr.mxu0 0.0
    %2145 = vmatpush1.msra.mxu0 0.0
    %2146 = vmatprep.subr.mxu0 0.0
    %2147 = vmatpush1.msra.mxu0 0.0
    %2148 = vmatprep.subr.mxu0 0.0
    %2149 = vmatpush1.msra.mxu0 0.0
    %2150 = vmatprep.subr.mxu0 0.0
    %2151 = vmatpush1.msra.mxu0 0.0
    %2152 = vmatprep.subr.mxu0 0.0
    %2153 = vmatpush1.msra.mxu0 0.0
    %2154 = vmatprep.subr.mxu0 0.0
    %2155 = vmatpush1.msra.mxu0 0.0
    %2156 = vmatprep.subr.mxu0 0.0
    %2157 = vmatpush1.msra.mxu0 0.0
    %2158 = vmatprep.subr.mxu0 0.0
    %2159 = vmatpush1.msra.mxu0 0.0
    %2160 = vmatprep.subr.mxu0 0.0
    %2161 = vmatpush1.msra.mxu0 0.0
    %2162 = vmatprep.subr.mxu0 0.0
    %2163 = vmatpush1.msra.mxu0 0.0
    %2164 = vmatprep.subr.mxu0 0.0
    %2165 = vmatpush1.msra.mxu0 0.0
    %2166 = vmatprep.subr.mxu0 0.0
    %2167 = vmatpush1.msra.mxu0 0.0
    %2168 = vmatprep.mubr.f32.mxu0 0.0
    %2169 = vmatmul.mubr.f32.gmra.mrb[0].mxu0 %v72
    %v2170 = vpop.f32.mrb[0].mxu0
    %v2171 = vadd.f32 %v2102, %v2170
    %v2172 = vpop.f32.mrb[0].mxu0
    %2173 = vmatprep.mubr.f32.mxu0 0.0
    %2174 = vmatmul.mubr.f32.gmra.mrb[0].mxu0 %v75
    %v2175 = vpop.f32.mrb[0].mxu0
    %v2176 = vadd.f32 %v2102, %v2175
    %v2177 = vpop.f32.mrb[0].mxu0
    %2178 = vdwg.mxu0
    %s2179 = scalar_lea.vmem %s5, 96
    %v2180 = vld [vmem:[%s2179] sm:$0xff]
    %v2181 = vld [vmem:[%s2179 + $0x8] sm:$0xff]
    %v2182 = vld [vmem:[%s2179 + $0x10] sm:$0xff]
    %v2183 = vld [vmem:[%s2179 + $0x18] sm:$0xff]
    %s2184 = scalar_lea.vmem %s8, 3
    %v2185 = vld [vmem:[%s2184] sm:$0x1]
    %v2187 = vlaneseq
    %v2188 = vshrl.u32 %v2187, 7
    %v2189 = vsub.s32 0, %v2188
    %v2190 = vrot.slane %v2185, %v2189
    %2192 = vmatprep.subr.mxu0 0.0
    %2193 = vmatpush1.msra.mxu0 %v2180
    %2194 = vmatprep.subr.mxu0 0.0
    %2195 = vmatpush1.msra.mxu0 %v2181
    %2196 = vmatprep.subr.mxu0 0.0
    %2197 = vmatpush1.msra.mxu0 %v2182
    %2198 = vmatprep.subr.mxu0 0.0
    %2199 = vmatpush1.msra.mxu0 %v2183
    %2200 = vmatprep.subr.mxu0 0.0
    %2201 = vmatpush1.msra.mxu0 0.0
    %2202 = vmatprep.subr.mxu0 0.0
    %2203 = vmatpush1.msra.mxu0 0.0
    %2204 = vmatprep.subr.mxu0 0.0
    %2205 = vmatpush1.msra.mxu0 0.0
    %2206 = vmatprep.subr.mxu0 0.0
    %2207 = vmatpush1.msra.mxu0 0.0
    %2208 = vmatprep.subr.mxu0 0.0
    %2209 = vmatpush1.msra.mxu0 0.0
    %2210 = vmatprep.subr.mxu0 0.0
    %2211 = vmatpush1.msra.mxu0 0.0
    %2212 = vmatprep.subr.mxu0 0.0
    %2213 = vmatpush1.msra.mxu0 0.0
    %2214 = vmatprep.subr.mxu0 0.0
    %2215 = vmatpush1.msra.mxu0 0.0
    %2216 = vmatprep.subr.mxu0 0.0
    %2217 = vmatpush1.msra.mxu0 0.0
    %2218 = vmatprep.subr.mxu0 0.0
    %2219 = vmatpush1.msra.mxu0 0.0
    %2220 = vmatprep.subr.mxu0 0.0
    %2221 = vmatpush1.msra.mxu0 0.0
    %2222 = vmatprep.subr.mxu0 0.0
    %2223 = vmatpush1.msra.mxu0 0.0
    %2224 = vmatprep.subr.mxu0 0.0
    %2225 = vmatpush1.msra.mxu0 0.0
    %2226 = vmatprep.subr.mxu0 0.0
    %2227 = vmatpush1.msra.mxu0 0.0
    %2228 = vmatprep.subr.mxu0 0.0
    %2229 = vmatpush1.msra.mxu0 0.0
    %2230 = vmatprep.subr.mxu0 0.0
    %2231 = vmatpush1.msra.mxu0 0.0
    %2232 = vmatprep.subr.mxu0 0.0
    %2233 = vmatpush1.msra.mxu0 0.0
    %2234 = vmatprep.subr.mxu0 0.0
    %2235 = vmatpush1.msra.mxu0 0.0
    %2236 = vmatprep.subr.mxu0 0.0
    %2237 = vmatpush1.msra.mxu0 0.0
    %2238 = vmatprep.subr.mxu0 0.0
    %2239 = vmatpush1.msra.mxu0 0.0
    %2240 = vmatprep.subr.mxu0 0.0
    %2241 = vmatpush1.msra.mxu0 0.0
    %2242 = vmatprep.subr.mxu0 0.0
    %2243 = vmatpush1.msra.mxu0 0.0
    %2244 = vmatprep.subr.mxu0 0.0
    %2245 = vmatpush1.msra.mxu0 0.0
    %2246 = vmatprep.subr.mxu0 0.0
    %2247 = vmatpush1.msra.mxu0 0.0
    %2248 = vmatprep.subr.mxu0 0.0
    %2249 = vmatpush1.msra.mxu0 0.0
    %2250 = vmatprep.subr.mxu0 0.0
    %2251 = vmatpush1.msra.mxu0 0.0
    %2252 = vmatprep.subr.mxu0 0.0
    %2253 = vmatpush1.msra.mxu0 0.0
    %2254 = vmatprep.subr.mxu0 0.0
    %2255 = vmatpush1.msra.mxu0 0.0
    %2256 = vmatprep.mubr.f32.mxu0 0.0
    %2257 = vmatmul.mubr.f32.gmra.mrb[0].mxu0 %v164
    %v2258 = vpop.f32.mrb[0].mxu0
    %v2259 = vadd.f32 %v2190, %v2258
    %v2260 = vpop.f32.mrb[0].mxu0
    %2261 = vmatprep.mubr.f32.mxu0 0.0
    %2262 = vmatmul.mubr.f32.gmra.mrb[0].mxu0 %v167
    %v2263 = vpop.f32.mrb[0].mxu0
    %v2264 = vadd.f32 %v2190, %v2263
    %v2265 = vpop.f32.mrb[0].mxu0
    %2266 = vdwg.mxu0
    %s2267 = scalar_lea.vmem %s6, 96
    %v2268 = vld [vmem:[%s2267] sm:$0xff]
    %v2269 = vld [vmem:[%s2267 + $0x8] sm:$0xff]
    %v2270 = vld [vmem:[%s2267 + $0x10] sm:$0xff]
    %v2271 = vld [vmem:[%s2267 + $0x18] sm:$0xff]
    %s2272 = scalar_lea.vmem %s9, 3
    %v2273 = vld [vmem:[%s2272] sm:$0x1]
    %v2275 = vlaneseq
    %v2276 = vshrl.u32 %v2275, 7
    %v2277 = vsub.s32 0, %v2276
    %v2278 = vrot.slane %v2273, %v2277
    %2280 = vmatprep.subr.mxu0 0.0
    %2281 = vmatpush1.msra.mxu0 %v2268
    %2282 = vmatprep.subr.mxu0 0.0
    %2283 = vmatpush1.msra.mxu0 %v2269
    %2284 = vmatprep.subr.mxu0 0.0
    %2285 = vmatpush1.msra.mxu0 %v2270
    %2286 = vmatprep.subr.mxu0 0.0
    %2287 = vmatpush1.msra.mxu0 %v2271
    %2288 = vmatprep.subr.mxu0 0.0
    %2289 = vmatpush1.msra.mxu0 0.0
    %2290 = vmatprep.subr.mxu0 0.0
    %2291 = vmatpush1.msra.mxu0 0.0
    %2292 = vmatprep.subr.mxu0 0.0
    %2293 = vmatpush1.msra.mxu0 0.0
    %2294 = vmatprep.subr.mxu0 0.0
    %2295 = vmatpush1.msra.mxu0 0.0
    %2296 = vmatprep.subr.mxu0 0.0
    %2297 = vmatpush1.msra.mxu0 0.0
    %2298 = vmatprep.subr.mxu0 0.0
    %2299 = vmatpush1.msra.mxu0 0.0
    %2300 = vmatprep.subr.mxu0 0.0
    %2301 = vmatpush1.msra.mxu0 0.0
    %2302 = vmatprep.subr.mxu0 0.0
    %2303 = vmatpush1.msra.mxu0 0.0
    %2304 = vmatprep.subr.mxu0 0.0
    %2305 = vmatpush1.msra.mxu0 0.0
    %2306 = vmatprep.subr.mxu0 0.0
    %2307 = vmatpush1.msra.mxu0 0.0
    %2308 = vmatprep.subr.mxu0 0.0
    %2309 = vmatpush1.msra.mxu0 0.0
    %2310 = vmatprep.subr.mxu0 0.0
    %2311 = vmatpush1.msra.mxu0 0.0
    %2312 = vmatprep.subr.mxu0 0.0
    %2313 = vmatpush1.msra.mxu0 0.0
    %2314 = vmatprep.subr.mxu0 0.0
    %2315 = vmatpush1.msra.mxu0 0.0
    %2316 = vmatprep.subr.mxu0 0.0
    %2317 = vmatpush1.msra.mxu0 0.0
    %2318 = vmatprep.subr.mxu0 0.0
    %2319 = vmatpush1.msra.mxu0 0.0
    %2320 = vmatprep.subr.mxu0 0.0
    %2321 = vmatpush1.msra.mxu0 0.0
    %2322 = vmatprep.subr.mxu0 0.0
    %2323 = vmatpush1.msra.mxu0 0.0
    %2324 = vmatprep.subr.mxu0 0.0
    %2325 = vmatpush1.msra.mxu0 0.0
    %2326 = vmatprep.subr.mxu0 0.0
    %2327 = vmatpush1.msra.mxu0 0.0
    %2328 = vmatprep.subr.mxu0 0.0
    %2329 = vmatpush1.msra.mxu0 0.0
    %2330 = vmatprep.subr.mxu0 0.0
    %2331 = vmatpush1.msra.mxu0 0.0
    %2332 = vmatprep.subr.mxu0 0.0
    %2333 = vmatpush1.msra.mxu0 0.0
    %2334 = vmatprep.subr.mxu0 0.0
    %2335 = vmatpush1.msra.mxu0 0.0
    %2336 = vmatprep.subr.mxu0 0.0
    %2337 = vmatpush1.msra.mxu0 0.0
    %2338 = vmatprep.subr.mxu0 0.0
    %2339 = vmatpush1.msra.mxu0 0.0
    %2340 = vmatprep.subr.mxu0 0.0
    %2341 = vmatpush1.msra.mxu0 0.0
    %2342 = vmatprep.subr.mxu0 0.0
    %2343 = vmatpush1.msra.mxu0 0.0
    %2344 = vmatprep.mubr.f32.mxu0 0.0
    %2345 = vmatmul.mubr.f32.gmra.mrb[0].mxu0 %v256
    %v2346 = vpop.f32.mrb[0].mxu0
    %v2347 = vadd.f32 %v2278, %v2346
    %v2348 = vpop.f32.mrb[0].mxu0
    %2349 = vmatprep.mubr.f32.mxu0 0.0
    %2350 = vmatmul.mubr.f32.gmra.mrb[0].mxu0 %v259
    %v2351 = vpop.f32.mrb[0].mxu0
    %v2352 = vadd.f32 %v2278, %v2351
    %v2353 = vpop.f32.mrb[0].mxu0
    %2354 = vdwg.mxu0
    %v2356 = vsel %vm336, %v2171, 0
    %v2359 = vsel %vm336, %v2259, 0
    %2361 = vmatprep.subr.mxu0 0.0
    %2362 = vmatpush1.xpose.msra.mxu0 %v2359
    %2363 = vmatprep.subr.mxu0 0.0
    %2364 = vmatpush1.xpose.msra.mxu0 0.0
    %2365 = vmatprep.subr.mxu0 0.0
    %2366 = vmatpush1.xpose.msra.mxu0 0.0
    %2367 = vmatprep.subr.mxu0 0.0
    %2368 = vmatpush1.xpose.msra.mxu0 0.0
    %2369 = vmatprep.subr.mxu0 0.0
    %2370 = vmatpush1.xpose.msra.mxu0 0.0
    %2371 = vmatprep.subr.mxu0 0.0
    %2372 = vmatpush1.xpose.msra.mxu0 0.0
    %2373 = vmatprep.subr.mxu0 0.0
    %2374 = vmatpush1.xpose.msra.mxu0 0.0
    %2375 = vmatprep.subr.mxu0 0.0
    %2376 = vmatpush1.xpose.msra.mxu0 0.0
    %2377 = vmatprep.subr.mxu0 0.0
    %2378 = vmatpush1.xpose.msra.mxu0 0.0
    %2379 = vmatprep.subr.mxu0 0.0
    %2380 = vmatpush1.xpose.msra.mxu0 0.0
    %2381 = vmatprep.subr.mxu0 0.0
    %2382 = vmatpush1.xpose.msra.mxu0 0.0
    %2383 = vmatprep.subr.mxu0 0.0
    %2384 = vmatpush1.xpose.msra.mxu0 0.0
    %2385 = vmatprep.subr.mxu0 0.0
    %2386 = vmatpush1.xpose.msra.mxu0 0.0
    %2387 = vmatprep.subr.mxu0 0.0
    %2388 = vmatpush1.xpose.msra.mxu0 0.0
    %2389 = vmatprep.subr.mxu0 0.0
    %2390 = vmatpush1.xpose.msra.mxu0 0.0
    %2391 = vmatprep.subr.mxu0 0.0
    %2392 = vmatpush1.xpose.msra.mxu0 0.0
    %2393 = vmatprep.subr.mxu0 0.0
    %2394 = vmatpush1.xpose.msra.mxu0 0.0
    %2395 = vmatprep.subr.mxu0 0.0
    %2396 = vmatpush1.xpose.msra.mxu0 0.0
    %2397 = vmatprep.subr.mxu0 0.0
    %2398 = vmatpush1.xpose.msra.mxu0 0.0
    %2399 = vmatprep.subr.mxu0 0.0
    %2400 = vmatpush1.xpose.msra.mxu0 0.0
    %2401 = vmatprep.subr.mxu0 0.0
    %2402 = vmatpush1.xpose.msra.mxu0 0.0
    %2403 = vmatprep.subr.mxu0 0.0
    %2404 = vmatpush1.xpose.msra.mxu0 0.0
    %2405 = vmatprep.subr.mxu0 0.0
    %2406 = vmatpush1.xpose.msra.mxu0 0.0
    %2407 = vmatprep.subr.mxu0 0.0
    %2408 = vmatpush1.xpose.msra.mxu0 0.0
    %2409 = vmatprep.subr.mxu0 0.0
    %2410 = vmatpush1.xpose.msra.mxu0 0.0
    %2411 = vmatprep.subr.mxu0 0.0
    %2412 = vmatpush1.xpose.msra.mxu0 0.0
    %2413 = vmatprep.subr.mxu0 0.0
    %2414 = vmatpush1.xpose.msra.mxu0 0.0
    %2415 = vmatprep.subr.mxu0 0.0
    %2416 = vmatpush1.xpose.msra.mxu0 0.0
    %2417 = vmatprep.subr.mxu0 0.0
    %2418 = vmatpush1.xpose.msra.mxu0 0.0
    %2419 = vmatprep.subr.mxu0 0.0
    %2420 = vmatpush1.xpose.msra.mxu0 0.0
    %2421 = vmatprep.subr.mxu0 0.0
    %2422 = vmatpush1.xpose.msra.mxu0 0.0
    %2423 = vmatprep.subr.mxu0 0.0
    %2424 = vmatpush1.xpose.msra.mxu0 0.0
    %2425 = vmatprep.mubr.f32.mxu0 0.0
    %2426 = vmatmul.mubr.f32.gmra.mrb[0].mxu0 %v2356
    %v2427 = vpop.f32.mrb[0].mxu0
    %v2428 = vadd.f32 %v59, %v2427
    %v2429 = vpop.f32.mrb[0].mxu0
    %2430 = vdwg.mxu0
    %v2432 = vsel %vm336, %v2176, 0
    %v2435 = vsel %vm336, %v2264, 0
    %2437 = vmatprep.subr.mxu0 0.0
    %2438 = vmatpush1.xpose.msra.mxu0 %v2435
    %2439 = vmatprep.subr.mxu0 0.0
    %2440 = vmatpush1.xpose.msra.mxu0 0.0
    %2441 = vmatprep.subr.mxu0 0.0
    %2442 = vmatpush1.xpose.msra.mxu0 0.0
    %2443 = vmatprep.subr.mxu0 0.0
    %2444 = vmatpush1.xpose.msra.mxu0 0.0
    %2445 = vmatprep.subr.mxu0 0.0
    %2446 = vmatpush1.xpose.msra.mxu0 0.0
    %2447 = vmatprep.subr.mxu0 0.0
    %2448 = vmatpush1.xpose.msra.mxu0 0.0
    %2449 = vmatprep.subr.mxu0 0.0
    %2450 = vmatpush1.xpose.msra.mxu0 0.0
    %2451 = vmatprep.subr.mxu0 0.0
    %2452 = vmatpush1.xpose.msra.mxu0 0.0
    %2453 = vmatprep.subr.mxu0 0.0
    %2454 = vmatpush1.xpose.msra.mxu0 0.0
    %2455 = vmatprep.subr.mxu0 0.0
    %2456 = vmatpush1.xpose.msra.mxu0 0.0
    %2457 = vmatprep.subr.mxu0 0.0
    %2458 = vmatpush1.xpose.msra.mxu0 0.0
    %2459 = vmatprep.subr.mxu0 0.0
    %2460 = vmatpush1.xpose.msra.mxu0 0.0
    %2461 = vmatprep.subr.mxu0 0.0
    %2462 = vmatpush1.xpose.msra.mxu0 0.0
    %2463 = vmatprep.subr.mxu0 0.0
    %2464 = vmatpush1.xpose.msra.mxu0 0.0
    %2465 = vmatprep.subr.mxu0 0.0
    %2466 = vmatpush1.xpose.msra.mxu0 0.0
    %2467 = vmatprep.subr.mxu0 0.0
    %2468 = vmatpush1.xpose.msra.mxu0 0.0
    %2469 = vmatprep.subr.mxu0 0.0
    %2470 = vmatpush1.xpose.msra.mxu0 0.0
    %2471 = vmatprep.subr.mxu0 0.0
    %2472 = vmatpush1.xpose.msra.mxu0 0.0
    %2473 = vmatprep.subr.mxu0 0.0
    %2474 = vmatpush1.xpose.msra.mxu0 0.0
    %2475 = vmatprep.subr.mxu0 0.0
    %2476 = vmatpush1.xpose.msra.mxu0 0.0
    %2477 = vmatprep.subr.mxu0 0.0
    %2478 = vmatpush1.xpose.msra.mxu0 0.0
    %2479 = vmatprep.subr.mxu0 0.0
    %2480 = vmatpush1.xpose.msra.mxu0 0.0
    %2481 = vmatprep.subr.mxu0 0.0
    %2482 = vmatpush1.xpose.msra.mxu0 0.0
    %2483 = vmatprep.subr.mxu0 0.0
    %2484 = vmatpush1.xpose.msra.mxu0 0.0
    %2485 = vmatprep.subr.mxu0 0.0
    %2486 = vmatpush1.xpose.msra.mxu0 0.0
    %2487 = vmatprep.subr.mxu0 0.0
    %2488 = vmatpush1.xpose.msra.mxu0 0.0
    %2489 = vmatprep.subr.mxu0 0.0
    %2490 = vmatpush1.xpose.msra.mxu0 0.0
    %2491 = vmatprep.subr.mxu0 0.0
    %2492 = vmatpush1.xpose.msra.mxu0 0.0
    %2493 = vmatprep.subr.mxu0 0.0
    %2494 = vmatpush1.xpose.msra.mxu0 0.0
    %2495 = vmatprep.subr.mxu0 0.0
    %2496 = vmatpush1.xpose.msra.mxu0 0.0
    %2497 = vmatprep.subr.mxu0 0.0
    %2498 = vmatpush1.xpose.msra.mxu0 0.0
    %2499 = vmatprep.subr.mxu0 0.0
    %2500 = vmatpush1.xpose.msra.mxu0 0.0
    %2501 = vmatprep.mubr.f32.mxu0 0.0
    %2502 = vmatmul.mubr.f32.gmra.mrb[0].mxu0 %v2432
    %v2503 = vpop.f32.mrb[0].mxu0
    %v2504 = vadd.f32 %v59, %v2503
    %v2505 = vpop.f32.mrb[0].mxu0
    %2506 = vdwg.mxu0
    %v2507 = vsel %vm336, %v2428, -inf
    %2508 = vmax.xlane.f32.xlu0 %v2507
    %v2509 = vpop.xlane.xlu0 %2508
    %v2510 = vsel %vm336, %v2504, -inf
    %2511 = vmax.xlane.f32.xlu0 %v2510
    %v2512 = vpop.xlane.xlu0 %2511
    %v2513 = vsub.f32 %v2428, %v2509
    %v2514 = vsub.f32 %v2504, %v2512
    %v2515 = vmul.f32 %v2513, 1.442695
    %v2516 = vpow.pop %v2515
    %v2517 = vmul.f32 %v2514, 1.442695
    %v2518 = vpow.pop %v2517
    %v2519 = vsel %vm336, %v2516, 0.0
    %2520 = vadd.xlane.f32.xlu0 %v2519
    %v2521 = vpop.xlane.xlu0 %2520
    %v2522 = vsel %vm336, %v2518, 0.0
    %2523 = vadd.xlane.f32.xlu0 %v2522
    %v2524 = vpop.xlane.xlu0 %2523
    %v2525 = vrcp.pop %v2521
    %v2526 = vmul.f32 %v2516, %v2525
    %v2527 = vrcp.pop %v2524
    %v2528 = vmul.f32 %v2518, %v2527
    %v2530 = vsel %vm336, %v2526, 0
    %2532 = vmatprep.subr.mxu0 0.0
    %2533 = vmatpush1.msra.mxu0 %v2347
    %2534 = vmatprep.subr.mxu0 0.0
    %2535 = vmatpush1.msra.mxu0 0.0
    %2536 = vmatprep.subr.mxu0 0.0
    %2537 = vmatpush1.msra.mxu0 0.0
    %2538 = vmatprep.subr.mxu0 0.0
    %2539 = vmatpush1.msra.mxu0 0.0
    %2540 = vmatprep.subr.mxu0 0.0
    %2541 = vmatpush1.msra.mxu0 0.0
    %2542 = vmatprep.subr.mxu0 0.0
    %2543 = vmatpush1.msra.mxu0 0.0
    %2544 = vmatprep.subr.mxu0 0.0
    %2545 = vmatpush1.msra.mxu0 0.0
    %2546 = vmatprep.subr.mxu0 0.0
    %2547 = vmatpush1.msra.mxu0 0.0
    %2548 = vmatprep.subr.mxu0 0.0
    %2549 = vmatpush1.msra.mxu0 0.0
    %2550 = vmatprep.subr.mxu0 0.0
    %2551 = vmatpush1.msra.mxu0 0.0
    %2552 = vmatprep.subr.mxu0 0.0
    %2553 = vmatpush1.msra.mxu0 0.0
    %2554 = vmatprep.subr.mxu0 0.0
    %2555 = vmatpush1.msra.mxu0 0.0
    %2556 = vmatprep.subr.mxu0 0.0
    %2557 = vmatpush1.msra.mxu0 0.0
    %2558 = vmatprep.subr.mxu0 0.0
    %2559 = vmatpush1.msra.mxu0 0.0
    %2560 = vmatprep.subr.mxu0 0.0
    %2561 = vmatpush1.msra.mxu0 0.0
    %2562 = vmatprep.subr.mxu0 0.0
    %2563 = vmatpush1.msra.mxu0 0.0
    %2564 = vmatprep.subr.mxu0 0.0
    %2565 = vmatpush1.msra.mxu0 0.0
    %2566 = vmatprep.subr.mxu0 0.0
    %2567 = vmatpush1.msra.mxu0 0.0
    %2568 = vmatprep.subr.mxu0 0.0
    %2569 = vmatpush1.msra.mxu0 0.0
    %2570 = vmatprep.subr.mxu0 0.0
    %2571 = vmatpush1.msra.mxu0 0.0
    %2572 = vmatprep.subr.mxu0 0.0
    %2573 = vmatpush1.msra.mxu0 0.0
    %2574 = vmatprep.subr.mxu0 0.0
    %2575 = vmatpush1.msra.mxu0 0.0
    %2576 = vmatprep.subr.mxu0 0.0
    %2577 = vmatpush1.msra.mxu0 0.0
    %2578 = vmatprep.subr.mxu0 0.0
    %2579 = vmatpush1.msra.mxu0 0.0
    %2580 = vmatprep.subr.mxu0 0.0
    %2581 = vmatpush1.msra.mxu0 0.0
    %2582 = vmatprep.subr.mxu0 0.0
    %2583 = vmatpush1.msra.mxu0 0.0
    %2584 = vmatprep.subr.mxu0 0.0
    %2585 = vmatpush1.msra.mxu0 0.0
    %2586 = vmatprep.subr.mxu0 0.0
    %2587 = vmatpush1.msra.mxu0 0.0
    %2588 = vmatprep.subr.mxu0 0.0
    %2589 = vmatpush1.msra.mxu0 0.0
    %2590 = vmatprep.subr.mxu0 0.0
    %2591 = vmatpush1.msra.mxu0 0.0
    %2592 = vmatprep.subr.mxu0 0.0
    %2593 = vmatpush1.msra.mxu0 0.0
    %2594 = vmatprep.subr.mxu0 0.0
    %2595 = vmatpush1.msra.mxu0 0.0
    %2596 = vmatprep.mubr.f32.mxu0 0.0
    %2597 = vmatmul.mubr.f32.gmra.mrb[0].mxu0 %v2530
    %v2598 = vpop.f32.mrb[0].mxu0
    %v2599 = vadd.f32 0.0, %v2598
    %v2600 = vpop.f32.mrb[0].mxu0
    %2601 = vdwg.mxu0
    %v2603 = vsel %vm336, %v2528, 0
    %2605 = vmatprep.subr.mxu0 0.0
    %2606 = vmatpush1.msra.mxu0 %v2352
    %2607 = vmatprep.subr.mxu0 0.0
    %2608 = vmatpush1.msra.mxu0 0.0
    %2609 = vmatprep.subr.mxu0 0.0
    %2610 = vmatpush1.msra.mxu0 0.0
    %2611 = vmatprep.subr.mxu0 0.0
    %2612 = vmatpush1.msra.mxu0 0.0
    %2613 = vmatprep.subr.mxu0 0.0
    %2614 = vmatpush1.msra.mxu0 0.0
    %2615 = vmatprep.subr.mxu0 0.0
    %2616 = vmatpush1.msra.mxu0 0.0
    %2617 = vmatprep.subr.mxu0 0.0
    %2618 = vmatpush1.msra.mxu0 0.0
    %2619 = vmatprep.subr.mxu0 0.0
    %2620 = vmatpush1.msra.mxu0 0.0
    %2621 = vmatprep.subr.mxu0 0.0
    %2622 = vmatpush1.msra.mxu0 0.0
    %2623 = vmatprep.subr.mxu0 0.0
    %2624 = vmatpush1.msra.mxu0 0.0
    %2625 = vmatprep.subr.mxu0 0.0
    %2626 = vmatpush1.msra.mxu0 0.0
    %2627 = vmatprep.subr.mxu0 0.0
    %2628 = vmatpush1.msra.mxu0 0.0
    %2629 = vmatprep.subr.mxu0 0.0
    %2630 = vmatpush1.msra.mxu0 0.0
    %2631 = vmatprep.subr.mxu0 0.0
    %2632 = vmatpush1.msra.mxu0 0.0
    %2633 = vmatprep.subr.mxu0 0.0
    %2634 = vmatpush1.msra.mxu0 0.0
    %2635 = vmatprep.subr.mxu0 0.0
    %2636 = vmatpush1.msra.mxu0 0.0
    %2637 = vmatprep.subr.mxu0 0.0
    %2638 = vmatpush1.msra.mxu0 0.0
    %2639 = vmatprep.subr.mxu0 0.0
    %2640 = vmatpush1.msra.mxu0 0.0
    %2641 = vmatprep.subr.mxu0 0.0
    %2642 = vmatpush1.msra.mxu0 0.0
    %2643 = vmatprep.subr.mxu0 0.0
    %2644 = vmatpush1.msra.mxu0 0.0
    %2645 = vmatprep.subr.mxu0 0.0
    %2646 = vmatpush1.msra.mxu0 0.0
    %2647 = vmatprep.subr.mxu0 0.0
    %2648 = vmatpush1.msra.mxu0 0.0
    %2649 = vmatprep.subr.mxu0 0.0
    %2650 = vmatpush1.msra.mxu0 0.0
    %2651 = vmatprep.subr.mxu0 0.0
    %2652 = vmatpush1.msra.mxu0 0.0
    %2653 = vmatprep.subr.mxu0 0.0
    %2654 = vmatpush1.msra.mxu0 0.0
    %2655 = vmatprep.subr.mxu0 0.0
    %2656 = vmatpush1.msra.mxu0 0.0
    %2657 = vmatprep.subr.mxu0 0.0
    %2658 = vmatpush1.msra.mxu0 0.0
    %2659 = vmatprep.subr.mxu0 0.0
    %2660 = vmatpush1.msra.mxu0 0.0
    %2661 = vmatprep.subr.mxu0 0.0
    %2662 = vmatpush1.msra.mxu0 0.0
    %2663 = vmatprep.subr.mxu0 0.0
    %2664 = vmatpush1.msra.mxu0 0.0
    %2665 = vmatprep.subr.mxu0 0.0
    %2666 = vmatpush1.msra.mxu0 0.0
    %2667 = vmatprep.subr.mxu0 0.0
    %2668 = vmatpush1.msra.mxu0 0.0
    %2669 = vmatprep.mubr.f32.mxu0 0.0
    %2670 = vmatmul.mubr.f32.gmra.mrb[0].mxu0 %v2603
    %v2671 = vpop.f32.mrb[0].mxu0
    %v2672 = vadd.f32 0.0, %v2671
    %v2673 = vpop.f32.mrb[0].mxu0
    %2674 = vdwg.mxu0
    %v2675 = vld [vmem:[#allocation2] sm:$0xff]
    %v2676 = vld [vmem:[#allocation2 + $0x8] sm:$0xff]
    %s2677 = scalar_lea.vmem %s10, 24
    %v2678 = vld [vmem:[%s2677] sm:$0xff]
    %v2680 = vsel %vm336, %v2599, 0
    %v2683 = vsel %vm336, %v2672, 0
    %2685 = vmatprep.subr.mxu0 0.0
    %2686 = vmatpush1.msra.mxu0 %v2678
    %2687 = vmatprep.subr.mxu0 0.0
    %2688 = vmatpush1.msra.mxu0 0.0
    %2689 = vmatprep.subr.mxu0 0.0
    %2690 = vmatpush1.msra.mxu0 0.0
    %2691 = vmatprep.subr.mxu0 0.0
    %2692 = vmatpush1.msra.mxu0 0.0
    %2693 = vmatprep.subr.mxu0 0.0
    %2694 = vmatpush1.msra.mxu0 0.0
    %2695 = vmatprep.subr.mxu0 0.0
    %2696 = vmatpush1.msra.mxu0 0.0
    %2697 = vmatprep.subr.mxu0 0.0
    %2698 = vmatpush1.msra.mxu0 0.0
    %2699 = vmatprep.subr.mxu0 0.0
    %2700 = vmatpush1.msra.mxu0 0.0
    %2701 = vmatprep.subr.mxu0 0.0
    %2702 = vmatpush1.msra.mxu0 0.0
    %2703 = vmatprep.subr.mxu0 0.0
    %2704 = vmatpush1.msra.mxu0 0.0
    %2705 = vmatprep.subr.mxu0 0.0
    %2706 = vmatpush1.msra.mxu0 0.0
    %2707 = vmatprep.subr.mxu0 0.0
    %2708 = vmatpush1.msra.mxu0 0.0
    %2709 = vmatprep.subr.mxu0 0.0
    %2710 = vmatpush1.msra.mxu0 0.0
    %2711 = vmatprep.subr.mxu0 0.0
    %2712 = vmatpush1.msra.mxu0 0.0
    %2713 = vmatprep.subr.mxu0 0.0
    %2714 = vmatpush1.msra.mxu0 0.0
    %2715 = vmatprep.subr.mxu0 0.0
    %2716 = vmatpush1.msra.mxu0 0.0
    %2717 = vmatprep.subr.mxu0 0.0
    %2718 = vmatpush1.msra.mxu0 0.0
    %2719 = vmatprep.subr.mxu0 0.0
    %2720 = vmatpush1.msra.mxu0 0.0
    %2721 = vmatprep.subr.mxu0 0.0
    %2722 = vmatpush1.msra.mxu0 0.0
    %2723 = vmatprep.subr.mxu0 0.0
    %2724 = vmatpush1.msra.mxu0 0.0
    %2725 = vmatprep.subr.mxu0 0.0
    %2726 = vmatpush1.msra.mxu0 0.0
    %2727 = vmatprep.subr.mxu0 0.0
    %2728 = vmatpush1.msra.mxu0 0.0
    %2729 = vmatprep.subr.mxu0 0.0
    %2730 = vmatpush1.msra.mxu0 0.0
    %2731 = vmatprep.subr.mxu0 0.0
    %2732 = vmatpush1.msra.mxu0 0.0
    %2733 = vmatprep.subr.mxu0 0.0
    %2734 = vmatpush1.msra.mxu0 0.0
    %2735 = vmatprep.subr.mxu0 0.0
    %2736 = vmatpush1.msra.mxu0 0.0
    %2737 = vmatprep.subr.mxu0 0.0
    %2738 = vmatpush1.msra.mxu0 0.0
    %2739 = vmatprep.subr.mxu0 0.0
    %2740 = vmatpush1.msra.mxu0 0.0
    %2741 = vmatprep.subr.mxu0 0.0
    %2742 = vmatpush1.msra.mxu0 0.0
    %2743 = vmatprep.subr.mxu0 0.0
    %2744 = vmatpush1.msra.mxu0 0.0
    %2745 = vmatprep.subr.mxu0 0.0
    %2746 = vmatpush1.msra.mxu0 0.0
    %2747 = vmatprep.subr.mxu0 0.0
    %2748 = vmatpush1.msra.mxu0 0.0
    %2749 = vmatprep.mubr.f32.mxu0 0.0
    %2750 = vmatmul.mubr.f32.gmra.mrb[0].mxu0 %v2680
    %v2751 = vpop.f32.mrb[0].mxu0
    %v2752 = vadd.f32 0.0, %v2751
    %v2753 = vpop.f32.mrb[0].mxu0
    %2754 = vmatprep.mubr.f32.mxu0 0.0
    %2755 = vmatmul.mubr.f32.gmra.mrb[0].mxu0 %v2683
    %v2756 = vpop.f32.mrb[0].mxu0
    %v2757 = vadd.f32 0.0, %v2756
    %v2758 = vpop.f32.mrb[0].mxu0
    %2759 = vdwg.mxu0
    %v2760 = vadd.f32 %v2675, %v2752
    %v2761 = vadd.f32 %v2676, %v2757
    %2762 = vst.msk [vmem:[#allocation2] sm:$0xff] %vm56, %v2760
    %2763 = vst.msk [vmem:[#allocation2 + $0x8] sm:$0xff] %vm56, %v2761
    %v2764 = vld [vmem:[#allocation2] sm:$0xff]
    %v2765 = vld [vmem:[#allocation2 + $0x8] sm:$0xff]
    %2766 = vst.msk [vmem:[#allocation3] sm:$0xff] %vm56, %v2764
    %2767 = vst.msk [vmem:[#allocation3 + $0x8] sm:$0xff] %vm56, %v2765
    // Predicated region
    $region50: #{tpu_custom_call.1} parent=1 // pred_check
      _
    $region51: #{tpu_custom_call.1} parent=1 // pred_check_branch
      %2769 = sbr.rel (0) target = $region53
    $region52: #{tpu_custom_call.1} parent=1 // pred_region
      %s2771 = ssub.s32 256, 256
      %2772 = vsyncadd [#allocation4], %s2771
      %s2773 = sshll.u32 [#allocation3], 4
      %s2774 = int_to_ptr.vmem [resolvable:$true] %s2773
      %2779 = dma.vmem_to_hbm [thread:$0]  %s2774, 256, %s12, [#allocation4], 128, 128, 8
    $region53: #{tpu_custom_call.1} parent=1 // pred_fallthru
      _
    // Predicated region
    $region54: #{tpu_custom_call.1} parent=1 // pred_check
      _
    $region55: #{tpu_custom_call.1} parent=1 // pred_check_branch
      %2781 = sbr.rel (0) target = $region57
    $region56: #{tpu_custom_call.1} parent=1 // pred_region
      %2782 = dma.done [#allocation4], 256
    $region57: #{tpu_custom_call.1} parent=1 // pred_fallthru
      _
    %2783 = vsyncpa [#allocation4], 1

</llo_original>
